<compile_context>
chip_gen: v5e
topology: v5e:2x2
jax: 0.10.0
libtpu: 0.0.40
codegen_flags: <defaults>
</compile_context>

<pallas_src>
import numpy as np
import jax
import jax.numpy as jnp
from jax.experimental import pallas as pl
from jax.experimental.pallas import tpu as pltpu

# ----------------------- configuration (matches Net defaults) -----------------------
ATTR_SIZE  = 8          # attr_size
KERNEL     = 3          # kernel_size
NUM_FILTER = 32         # num_filter
GEO_EMB    = 16         # GeoConv process_coords output width
HIDDEN     = 128        # LSTM hidden size / out_size()
RNN_IN     = NUM_FILTER + 1 + ATTR_SIZE
L          = 8          # padded sequence length
B          = 2          # real batch
B_PAD      = 8          # sublane-padded batch used inside the kernel


def _sigmoid_eup(x):
    # 1/(1+exp(-x)) == 0.5*(tanh(x/2)+1); tanh goes to the EUP slot (idle between matmuls).
    return 0.5 * (jnp.tanh(0.5 * x) + 1.0)


def _elu(x):
    return jnp.where(x > 0, x, jnp.exp(jnp.minimum(x, 0.0)) - 1.0)


# ------------------------------- fused forward kernel ---------------------------------
def st_fused_kernel(cdm_ref, attr_ref,
                    w1_ref, b1_ref, wc_ref, bc_ref,
                    wih0c_ref, wih0a_ref, smallb_ref,
                    wcomb_ref, wa_ref, ba_ref,
                    hid_ref, pooled_ref):
    # cdm_ref:   (L*Bp, 4)   columns = [lng, lat, dist, mask], seq-major (row = t*Bp + b)
    # attr_ref:  (Bp, A)
    # w1:(2,16) b1:(1,16)  wc:(48,NF) bc:(1,NF)
    # wih0c:(NF,4H)  wih0a:(A,4H)  smallb:(3,4H) rows = [wih0_dist, bg0, bg1]
    # wcomb:(2H,8H) = [[Whh0 | Wih1],[0 | Whh1]]   wa:(A,H) ba:(1,H)
    # hid_ref: (L*Bp, H) masked layer-2 hiddens     pooled_ref: (Bp, H)
    LB = cdm_ref.shape[0]
    Bh = attr_ref.shape[0]
    Lh = LB // Bh
    H = HIDDEN
    G4 = 4 * H
    f32 = jnp.float32

    cdm = cdm_ref[...]
    coords = cdm[:, 0:2]
    dist = cdm[:, 2:3]
    mask = cdm[:, 3:4]

    # ---- GeoConv: tanh(Linear(2->16)); 'same' conv(k=3) as three K=16 matmuls + aligned shifts ----
    locs = jnp.tanh(jnp.dot(coords, w1_ref[...],
                            preferred_element_type=f32) + b1_ref[...])           # (L*Bp, 16)
    y_prev = jnp.dot(locs, wc_ref[0 * GEO_EMB:1 * GEO_EMB, :], preferred_element_type=f32)
    y_cur  = jnp.dot(locs, wc_ref[1 * GEO_EMB:2 * GEO_EMB, :], preferred_element_type=f32)
    y_next = jnp.dot(locs, wc_ref[2 * GEO_EMB:3 * GEO_EMB, :], preferred_element_type=f32)
    znf = jnp.zeros((Bh, NUM_FILTER), f32)
    # seq-major layout: shifting by Bh rows (sublane-aligned) == shifting by one timestep
    conv = _elu(jnp.concatenate([znf, y_prev[:LB - Bh, :]], axis=0)               # tap t-1
                + y_cur                                                            # tap t
                + jnp.concatenate([y_next[Bh:, :], znf], axis=0)                   # tap t+1
                + bc_ref[...])                                                     # (L*Bp, NF)

    # ---- hoisted layer-0 input projection, split by feature group (no K=41 concat) ----
    wih0_dist = smallb_ref[0:1, :]
    bg0       = smallb_ref[1:2, :]
    bg1       = smallb_ref[2:3, :]
    gin0 = jnp.dot(conv, wih0c_ref[...],
                   preferred_element_type=f32) + dist * wih0_dist                 # (L*Bp, 4H)

    attr = attr_ref[...]                                                           # (Bp, A)
    add_bias0 = jnp.dot(attr, wih0a_ref[...],
                        preferred_element_type=f32) + bg0                          # (Bp, 4H), once
    attent = jnp.tanh(jnp.dot(attr, wa_ref[...],
                              preferred_element_type=f32) + ba_ref[...])           # (Bp, H)

    wcomb = wcomb_ref[...]                                                          # (2H, 8H)

    def gate_split(g):
        i = _sigmoid_eup(g[:, 0 * H:1 * H])
        f = _sigmoid_eup(g[:, 1 * H:2 * H])
        gg = jnp.tanh(g[:, 2 * H:3 * H])
        o = _sigmoid_eup(g[:, 3 * H:4 * H])
        return i, f, gg, o

    # ---- wavefront-interleaved 2-layer LSTM + mask + online attention pooling ----
    # Iteration t: layer-0 step t (uses h0^{t-1}) and layer-1 step t-1 (uses h0^{t-1}, h1^{t-2});
    # both chains read only iteration-start state, so their work overlaps every step.
    h0 = jnp.zeros((Bh, H), f32)
    c0 = jnp.zeros((Bh, H), f32)
    h1 = jnp.zeros((Bh, H), f32)
    c1 = jnp.zeros((Bh, H), f32)
    num = jnp.zeros((Bh, H), f32)
    den = jnp.zeros((Bh, 1), f32)

    # TODO(synk): at production L switch this fully-unrolled Python loop to lax.fori_loop and
    # stage Whh in the MXU with pltpu.matmul_push_rhs / matmul_acc_lhs.
    for t in range(Lh + 1):
        h0_in = h0
        comb = None
        if t > 0:
            # cols 0:4H = h0_in @ Whh0 ; cols 4H:8H = h0_in @ Wih1 + h1 @ Whh1
            comb = jnp.dot(jnp.concatenate([h0_in, h1], axis=1), wcomb,
                           preferred_element_type=f32)                             # (Bp, 8H)
        if t < Lh:
            gates0 = gin0[t * Bh:(t + 1) * Bh, :] + add_bias0
            if comb is not None:
                gates0 = gates0 + comb[:, 0:G4]
            i0, f0, g0, o0 = gate_split(gates0)
            c0 = f0 * c0 + i0 * g0
            h0 = o0 * jnp.tanh(c0)
        if t > 0:
            s = t - 1
            gates1 = comb[:, G4:2 * G4] + bg1
            i1, f1, g1, o1 = gate_split(gates1)
            c1 = f1 * c1 + i1 * g1
            h1 = o1 * jnp.tanh(c1)
            hm = h1 * mask[s * Bh:(s + 1) * Bh, :]      # pad_packed_sequence zeroing at t >= len
            hid_ref[s * Bh:(s + 1) * Bh, :] = hm
            # attent_pooling: alpha = exp(-<h, attent>), normalized over time; padded rows score
            # exp(0)=1 exactly as in the original module (it pools over the zeroed padded hiddens).
            a = jnp.exp(-jnp.sum(hm * attent, axis=1, keepdims=True))               # (Bp, 1)
            num = num + a * hm
            den = den + a

    pooled_ref[...] = num * pl.reciprocal(den, approx=True)                         # (Bp, H)


# ------------------------------- wrapper (O(L*B) XLA glue only) -----------------------
def _pad_rows(x, rows):
    pad = rows - x.shape[0]
    if pad <= 0:
        return x
    return jnp.concatenate([x, jnp.zeros((pad,) + x.shape[1:], x.dtype)], axis=0)


def spatio_temporal_forward(params, traj, attr_t):
    coords_bf = traj['coords']                 # (B, L, 2)
    dist_bf = traj['dist']                     # (B, L)
    lens = traj['X_sl']                        # (B,) int
    Bh, Lh, _ = coords_bf.shape

    # --- pad batch to the 8-row sublane; fake rows are zeroed and masked out ---
    coords_p = _pad_rows(coords_bf, B_PAD)                                   # (Bp, L, 2)
    dist_p = _pad_rows(dist_bf, B_PAD)                                       # (Bp, L)
    attr_p = _pad_rows(attr_t, B_PAD)                                        # (Bp, A)
    lens_p = _pad_rows(lens.astype(jnp.int32), B_PAD)                        # (Bp,)

    # --- seq-major flat rows (row = t*Bp + b), packed [lng|lat|dist|mask] slab ---
    coords_sf = jnp.transpose(coords_p, (1, 0, 2)).reshape(Lh * B_PAD, 2)
    dist_sf = jnp.transpose(dist_p).reshape(Lh * B_PAD, 1)
    mask_sf = (jnp.arange(Lh)[:, None] < lens_p[None, :]).astype(jnp.float32).reshape(Lh * B_PAD, 1)
    cdm = jnp.concatenate([coords_sf, dist_sf, mask_sf], axis=1)             # (L*Bp, 4)

    # --- weight plumbing: split wih0 by feature group, build combined recurrent weight ---
    wih0 = params['wih0']                                                    # (41, 4H) [conv|dist|attr]
    wih0c = wih0[:NUM_FILTER, :]                                             # (32, 4H)
    wih0d = wih0[NUM_FILTER:NUM_FILTER + 1, :]                               # (1, 4H)
    wih0a = wih0[NUM_FILTER + 1:, :]                                         # (8, 4H)
    smallb = jnp.concatenate([wih0d, params['bg0'], params['bg1']], axis=0)  # (3, 4H)
    wcomb = jnp.concatenate(
        [jnp.concatenate([params['whh0'], params['wih1']], axis=1),
         jnp.concatenate([jnp.zeros((HIDDEN, 4 * HIDDEN), jnp.float32), params['whh1']], axis=1)],
        axis=0)                                                              # (2H, 8H)

    hid_flat, pooled = pl.pallas_call(
        st_fused_kernel,
        out_shape=(jax.ShapeDtypeStruct((Lh * B_PAD, HIDDEN), jnp.float32),
                   jax.ShapeDtypeStruct((B_PAD, HIDDEN), jnp.float32)),
        in_specs=[pl.BlockSpec(memory_space=pltpu.MemorySpace.VMEM)] * 12,
        out_specs=(pl.BlockSpec(memory_space=pltpu.MemorySpace.VMEM),
                   pl.BlockSpec(memory_space=pltpu.MemorySpace.VMEM)),
    )(cdm, attr_p,
      params['w1'], params['b1'], params['wc'], params['bc'],
      wih0c, wih0a, smallb, wcomb,
      params['wa'], params['ba'])

    hiddens = hid_flat.reshape(Lh, B_PAD, HIDDEN)[:, :Bh, :]   # drop padded batch rows
    pooled = pooled[:Bh, :]
    return hiddens, lens, pooled


spatio_temporal_forward_jit = jax.jit(spatio_temporal_forward)


# ------------------------------- pure-JAX reference -----------------------------------
def ref_forward(params, traj, attr_t):
    coords_bf, dist_bf, lens = traj['coords'], traj['dist'], traj['X_sl']
    Bh, Lh, _ = coords_bf.shape
    locs = jnp.tanh(coords_bf @ params['w1'] + params['b1'])                # (B, L, 16)
    pad = jnp.pad(locs, ((0, 0), (1, 1), (0, 0)))
    conv = jnp.zeros((Bh, Lh, NUM_FILTER), jnp.float32) + params['bc']
    for k in range(KERNEL):
        conv = conv + pad[:, k:k + Lh, :] @ params['wc'][k * GEO_EMB:(k + 1) * GEO_EMB, :]
    conv = _elu(conv)
    conv = jnp.transpose(conv, (1, 0, 2))
    dist_sf = jnp.transpose(dist_bf)[:, :, None]
    expand_attr = jnp.broadcast_to(attr_t[None], (Lh, Bh, attr_t.shape[-1]))
    x = jnp.concatenate([conv, dist_sf, expand_attr], axis=2)

    def run_layer(x, wih, whh, bias):
        h = jnp.zeros((Bh, HIDDEN), jnp.float32)
        c = jnp.zeros((Bh, HIDDEN), jnp.float32)
        outs = []
        for t in range(Lh):
            g = x[t] @ wih + h @ whh + bias
            i = jax.nn.sigmoid(g[:, :HIDDEN])
            f = jax.nn.sigmoid(g[:, HIDDEN:2 * HIDDEN])
            gg = jnp.tanh(g[:, 2 * HIDDEN:3 * HIDDEN])
            o = jax.nn.sigmoid(g[:, 3 * HIDDEN:])
            c = f * c + i * gg
            h = o * jnp.tanh(c)
            outs.append(h)
        return jnp.stack(outs, 0)

    h1 = run_layer(x, params['wih0'], params['whh0'], params['bg0'])
    h2 = run_layer(h1, params['wih1'], params['whh1'], params['bg1'])
    mask = (jnp.arange(Lh)[:, None] < lens[None, :]).astype(jnp.float32)
    hiddens = h2 * mask[:, :, None]

    attent = jnp.tanh(attr_t @ params['wa'] + params['ba'])                 # (B, H)
    hb = jnp.transpose(hiddens, (1, 0, 2))                                  # (B, L, H)
    alpha = jnp.exp(-jnp.einsum('blh,bh->bl', hb, attent))                  # (B, L)
    alpha = alpha / jnp.sum(alpha, axis=1, keepdims=True)
    pooled = jnp.einsum('blh,bl->bh', hb, alpha)
    return hiddens, lens, pooled


# --------------------------------------- main -----------------------------------------
if __name__ == "__main__":
    key = jax.random.PRNGKey(0)
    ks = jax.random.split(key, 16)
    params = {
        'w1':   0.5 * jax.random.normal(ks[0], (2, GEO_EMB), jnp.float32),
        'b1':   0.1 * jax.random.normal(ks[1], (1, GEO_EMB), jnp.float32),
        'wc':   0.2 * jax.random.normal(ks[2], (KERNEL * GEO_EMB, NUM_FILTER), jnp.float32),
        'bc':   0.1 * jax.random.normal(ks[3], (1, NUM_FILTER), jnp.float32),
        'wih0': 0.1 * jax.random.normal(ks[4], (RNN_IN, 4 * HIDDEN), jnp.float32),
        'whh0': 0.1 * jax.random.normal(ks[5], (HIDDEN, 4 * HIDDEN), jnp.float32),
        'bg0':  0.1 * jax.random.normal(ks[6], (1, 4 * HIDDEN), jnp.float32),
        'wih1': 0.1 * jax.random.normal(ks[7], (HIDDEN, 4 * HIDDEN), jnp.float32),
        'whh1': 0.1 * jax.random.normal(ks[8], (HIDDEN, 4 * HIDDEN), jnp.float32),
        'bg1':  0.1 * jax.random.normal(ks[9], (1, 4 * HIDDEN), jnp.float32),
        'wa':   0.2 * jax.random.normal(ks[10], (ATTR_SIZE, HIDDEN), jnp.float32),
        'ba':   0.1 * jax.random.normal(ks[11], (1, HIDDEN), jnp.float32),
    }
    traj = {
        'coords': jax.random.normal(ks[12], (B, L, 2), jnp.float32),   # lng/lat per step
        'dist':   jax.random.uniform(ks[13], (B, L), jnp.float32),     # per-step distance feature
        'X_sl':   jnp.array([L, L - 3], dtype=jnp.int32),              # true sequence lengths
    }
    attr_t = jax.random.normal(ks[14], (B, ATTR_SIZE), jnp.float32)

    hiddens, lens, pooled = spatio_temporal_forward_jit(params, traj, attr_t)
    jax.block_until_ready((hiddens, pooled))

    h_ref, _, p_ref = ref_forward(params, traj, attr_t)
    np.testing.assert_allclose(np.asarray(hiddens), np.asarray(h_ref), rtol=5e-3, atol=5e-3)
    np.testing.assert_allclose(np.asarray(pooled), np.asarray(p_ref), rtol=5e-3, atol=5e-3)
    print("KERNEL_OK")
</pallas_src>

<mosaic_0001>
module attributes {stable_mosaic.version = 11 : i64} {
  func.func @st_fused_kernel(%arg0: memref<64x4xf32, #tpu.memory_space<vmem>>, %arg1: memref<8x8xf32, #tpu.memory_space<vmem>>, %arg2: memref<2x16xf32, #tpu.memory_space<vmem>>, %arg3: memref<1x16xf32, #tpu.memory_space<vmem>>, %arg4: memref<48x32xf32, #tpu.memory_space<vmem>>, %arg5: memref<1x32xf32, #tpu.memory_space<vmem>>, %arg6: memref<32x512xf32, #tpu.memory_space<vmem>>, %arg7: memref<8x512xf32, #tpu.memory_space<vmem>>, %arg8: memref<3x512xf32, #tpu.memory_space<vmem>>, %arg9: memref<256x1024xf32, #tpu.memory_space<vmem>>, %arg10: memref<8x128xf32, #tpu.memory_space<vmem>>, %arg11: memref<1x128xf32, #tpu.memory_space<vmem>>, %arg12: memref<64x128xf32, #tpu.memory_space<vmem>>, %arg13: memref<8x128xf32, #tpu.memory_space<vmem>>) attributes {dimension_semantics = [], scalar_prefetch = 0 : i64, scratch_operands = 0 : i64, tpu.core_type = #tpu.core_type<tc>} {
    %c0 = arith.constant 0 : index
    %c0_0 = arith.constant 0 : index
    %0 = vector.load %arg0[%c0, %c0_0] : memref<64x4xf32, #tpu.memory_space<vmem>>, vector<64x4xf32>
    %1 = vector.extract_strided_slice %0 {offsets = [0, 0], sizes = [64, 2], strides = [1, 1]} : vector<64x4xf32> to vector<64x2xf32>
    %2 = vector.extract_strided_slice %0 {offsets = [0, 2], sizes = [64, 1], strides = [1, 1]} : vector<64x4xf32> to vector<64x1xf32>
    %3 = vector.extract_strided_slice %0 {offsets = [0, 3], sizes = [64, 1], strides = [1, 1]} : vector<64x4xf32> to vector<64x1xf32>
    %c0_1 = arith.constant 0 : index
    %c0_2 = arith.constant 0 : index
    %4 = vector.load %arg2[%c0_1, %c0_2] : memref<2x16xf32, #tpu.memory_space<vmem>>, vector<2x16xf32>
    %cst = arith.constant dense<0.000000e+00> : vector<64x16xf32>
    %5 = tpu.matmul %1, %4, %cst {dimension_numbers = #tpu.dot_dimension_numbers<[1], [0], [0], [1], [0, 0, 1, 1], [], []>} : vector<64x2xf32>, vector<2x16xf32>, vector<64x16xf32> -> vector<64x16xf32>
    %c0_3 = arith.constant 0 : index
    %c0_4 = arith.constant 0 : index
    %6 = vector.load %arg3[%c0_3, %c0_4] : memref<1x16xf32, #tpu.memory_space<vmem>>, vector<1x16xf32>
    %7 = vector.broadcast %6 : vector<1x16xf32> to vector<64x16xf32>
    %8 = arith.addf %5, %7 : vector<64x16xf32>
    %9 = math.tanh %8 : vector<64x16xf32>
    %c0_5 = arith.constant 0 : index
    %c0_6 = arith.constant 0 : index
    %10 = vector.load %arg4[%c0_5, %c0_6] : memref<48x32xf32, #tpu.memory_space<vmem>>, vector<16x32xf32>
    %cst_7 = arith.constant dense<0.000000e+00> : vector<64x32xf32>
    %11 = tpu.matmul %9, %10, %cst_7 {dimension_numbers = #tpu.dot_dimension_numbers<[1], [0], [0], [1], [0, 0, 1, 1], [], []>} : vector<64x16xf32>, vector<16x32xf32>, vector<64x32xf32> -> vector<64x32xf32>
    %c16 = arith.constant 16 : index
    %c0_8 = arith.constant 0 : index
    %12 = vector.load %arg4[%c16, %c0_8] : memref<48x32xf32, #tpu.memory_space<vmem>>, vector<16x32xf32>
    %cst_9 = arith.constant dense<0.000000e+00> : vector<64x32xf32>
    %13 = tpu.matmul %9, %12, %cst_9 {dimension_numbers = #tpu.dot_dimension_numbers<[1], [0], [0], [1], [0, 0, 1, 1], [], []>} : vector<64x16xf32>, vector<16x32xf32>, vector<64x32xf32> -> vector<64x32xf32>
    %c32 = arith.constant 32 : index
    %c0_10 = arith.constant 0 : index
    %14 = vector.load %arg4[%c32, %c0_10] : memref<48x32xf32, #tpu.memory_space<vmem>>, vector<16x32xf32>
    %cst_11 = arith.constant dense<0.000000e+00> : vector<64x32xf32>
    %15 = tpu.matmul %9, %14, %cst_11 {dimension_numbers = #tpu.dot_dimension_numbers<[1], [0], [0], [1], [0, 0, 1, 1], [], []>} : vector<64x16xf32>, vector<16x32xf32>, vector<64x32xf32> -> vector<64x32xf32>
    %cst_12 = arith.constant 0.000000e+00 : f32
    %16 = vector.broadcast %cst_12 : f32 to vector<8x32xf32>
    %17 = vector.extract_strided_slice %11 {offsets = [0, 0], sizes = [56, 32], strides = [1, 1]} : vector<64x32xf32> to vector<56x32xf32>
    %18 = tpu.concatenate %16, %17 in 0 : vector<8x32xf32>, vector<56x32xf32> -> vector<64x32xf32>
    %19 = arith.addf %18, %13 : vector<64x32xf32>
    %20 = vector.extract_strided_slice %15 {offsets = [8, 0], sizes = [56, 32], strides = [1, 1]} : vector<64x32xf32> to vector<56x32xf32>
    %21 = tpu.concatenate %20, %16 in 0 : vector<56x32xf32>, vector<8x32xf32> -> vector<64x32xf32>
    %22 = arith.addf %19, %21 : vector<64x32xf32>
    %c0_13 = arith.constant 0 : index
    %c0_14 = arith.constant 0 : index
    %23 = vector.load %arg5[%c0_13, %c0_14] : memref<1x32xf32, #tpu.memory_space<vmem>>, vector<1x32xf32>
    %24 = vector.broadcast %23 : vector<1x32xf32> to vector<64x32xf32>
    %25 = arith.addf %22, %24 : vector<64x32xf32>
    %cst_15 = arith.constant 0.000000e+00 : f32
    %26 = vector.broadcast %cst_15 : f32 to vector<64x32xf32>
    %27 = arith.cmpf ogt, %25, %26 : vector<64x32xf32>
    %cst_16 = arith.constant 0.000000e+00 : f32
    %28 = vector.broadcast %cst_16 : f32 to vector<64x32xf32>
    %29 = arith.minimumf %25, %28 : vector<64x32xf32>
    %30 = math.exp %29 : vector<64x32xf32>
    %cst_17 = arith.constant 1.000000e+00 : f32
    %31 = vector.broadcast %cst_17 : f32 to vector<64x32xf32>
    %32 = arith.subf %30, %31 : vector<64x32xf32>
    %33 = arith.select %27, %25, %32 : vector<64x32xi1>, vector<64x32xf32>
    %c0_18 = arith.constant 0 : index
    %c0_19 = arith.constant 0 : index
    %34 = vector.load %arg8[%c0_18, %c0_19] : memref<3x512xf32, #tpu.memory_space<vmem>>, vector<1x512xf32>
    %c1 = arith.constant 1 : index
    %c0_20 = arith.constant 0 : index
    %35 = vector.load %arg8[%c1, %c0_20] : memref<3x512xf32, #tpu.memory_space<vmem>>, vector<1x512xf32>
    %c2 = arith.constant 2 : index
    %c0_21 = arith.constant 0 : index
    %36 = vector.load %arg8[%c2, %c0_21] : memref<3x512xf32, #tpu.memory_space<vmem>>, vector<1x512xf32>
    %c0_22 = arith.constant 0 : index
    %c0_23 = arith.constant 0 : index
    %37 = vector.load %arg6[%c0_22, %c0_23] : memref<32x512xf32, #tpu.memory_space<vmem>>, vector<32x512xf32>
    %cst_24 = arith.constant dense<0.000000e+00> : vector<64x512xf32>
    %38 = tpu.matmul %33, %37, %cst_24 {dimension_numbers = #tpu.dot_dimension_numbers<[1], [0], [0], [1], [0, 0, 1, 1], [], []>} : vector<64x32xf32>, vector<32x512xf32>, vector<64x512xf32> -> vector<64x512xf32>
    %39 = vector.broadcast %2 : vector<64x1xf32> to vector<64x512xf32>
    %40 = vector.broadcast %34 : vector<1x512xf32> to vector<64x512xf32>
    %41 = arith.mulf %39, %40 : vector<64x512xf32>
    %42 = arith.addf %38, %41 : vector<64x512xf32>
    %c0_25 = arith.constant 0 : index
    %c0_26 = arith.constant 0 : index
    %43 = vector.load %arg1[%c0_25, %c0_26] : memref<8x8xf32, #tpu.memory_space<vmem>>, vector<8x8xf32>
    %c0_27 = arith.constant 0 : index
    %c0_28 = arith.constant 0 : index
    %44 = vector.load %arg7[%c0_27, %c0_28] : memref<8x512xf32, #tpu.memory_space<vmem>>, vector<8x512xf32>
    %cst_29 = arith.constant dense<0.000000e+00> : vector<8x512xf32>
    %45 = tpu.matmul %43, %44, %cst_29 {dimension_numbers = #tpu.dot_dimension_numbers<[1], [0], [0], [1], [0, 0, 1, 1], [], []>} : vector<8x8xf32>, vector<8x512xf32>, vector<8x512xf32> -> vector<8x512xf32>
    %46 = vector.broadcast %35 : vector<1x512xf32> to vector<8x512xf32>
    %47 = arith.addf %45, %46 : vector<8x512xf32>
    %c0_30 = arith.constant 0 : index
    %c0_31 = arith.constant 0 : index
    %48 = vector.load %arg10[%c0_30, %c0_31] : memref<8x128xf32, #tpu.memory_space<vmem>>, vector<8x128xf32>
    %cst_32 = arith.constant dense<0.000000e+00> : vector<8x128xf32>
    %49 = tpu.matmul %43, %48, %cst_32 {dimension_numbers = #tpu.dot_dimension_numbers<[1], [0], [0], [1], [0, 0, 1, 1], [], []>} : vector<8x8xf32>, vector<8x128xf32>, vector<8x128xf32> -> vector<8x128xf32>
    %c0_33 = arith.constant 0 : index
    %c0_34 = arith.constant 0 : index
    %50 = vector.load %arg11[%c0_33, %c0_34] : memref<1x128xf32, #tpu.memory_space<vmem>>, vector<1x128xf32>
    %51 = vector.broadcast %50 : vector<1x128xf32> to vector<8x128xf32>
    %52 = arith.addf %49, %51 : vector<8x128xf32>
    %53 = math.tanh %52 : vector<8x128xf32>
    %c0_35 = arith.constant 0 : index
    %c0_36 = arith.constant 0 : index
    %54 = vector.load %arg9[%c0_35, %c0_36] : memref<256x1024xf32, #tpu.memory_space<vmem>>, vector<256x1024xf32>
    %cst_37 = arith.constant 0.000000e+00 : f32
    %55 = vector.broadcast %cst_37 : f32 to vector<8x128xf32>
    %cst_38 = arith.constant 0.000000e+00 : f32
    %56 = vector.broadcast %cst_38 : f32 to vector<8x128xf32>
    %cst_39 = arith.constant 0.000000e+00 : f32
    %57 = vector.broadcast %cst_39 : f32 to vector<8x128xf32>
    %cst_40 = arith.constant 0.000000e+00 : f32
    %58 = vector.broadcast %cst_40 : f32 to vector<8x128xf32>
    %cst_41 = arith.constant 0.000000e+00 : f32
    %59 = vector.broadcast %cst_41 : f32 to vector<8x1xf32>
    %60 = vector.extract_strided_slice %42 {offsets = [0, 0], sizes = [8, 512], strides = [1, 1]} : vector<64x512xf32> to vector<8x512xf32>
    %61 = arith.addf %60, %47 : vector<8x512xf32>
    %62 = vector.extract_strided_slice %61 {offsets = [0, 0], sizes = [8, 128], strides = [1, 1]} : vector<8x512xf32> to vector<8x128xf32>
    %cst_42 = arith.constant 5.000000e-01 : f32
    %63 = vector.broadcast %cst_42 : f32 to vector<8x128xf32>
    %64 = arith.mulf %63, %62 : vector<8x128xf32>
    %65 = math.tanh %64 : vector<8x128xf32>
    %cst_43 = arith.constant 1.000000e+00 : f32
    %66 = vector.broadcast %cst_43 : f32 to vector<8x128xf32>
    %67 = arith.addf %65, %66 : vector<8x128xf32>
    %cst_44 = arith.constant 5.000000e-01 : f32
    %68 = vector.broadcast %cst_44 : f32 to vector<8x128xf32>
    %69 = arith.mulf %68, %67 : vector<8x128xf32>
    %70 = vector.extract_strided_slice %61 {offsets = [0, 128], sizes = [8, 128], strides = [1, 1]} : vector<8x512xf32> to vector<8x128xf32>
    %cst_45 = arith.constant 5.000000e-01 : f32
    %71 = vector.broadcast %cst_45 : f32 to vector<8x128xf32>
    %72 = arith.mulf %71, %70 : vector<8x128xf32>
    %73 = math.tanh %72 : vector<8x128xf32>
    %cst_46 = arith.constant 1.000000e+00 : f32
    %74 = vector.broadcast %cst_46 : f32 to vector<8x128xf32>
    %75 = arith.addf %73, %74 : vector<8x128xf32>
    %cst_47 = arith.constant 5.000000e-01 : f32
    %76 = vector.broadcast %cst_47 : f32 to vector<8x128xf32>
    %77 = arith.mulf %76, %75 : vector<8x128xf32>
    %78 = vector.extract_strided_slice %61 {offsets = [0, 256], sizes = [8, 128], strides = [1, 1]} : vector<8x512xf32> to vector<8x128xf32>
    %79 = math.tanh %78 : vector<8x128xf32>
    %80 = vector.extract_strided_slice %61 {offsets = [0, 384], sizes = [8, 128], strides = [1, 1]} : vector<8x512xf32> to vector<8x128xf32>
    %cst_48 = arith.constant 5.000000e-01 : f32
    %81 = vector.broadcast %cst_48 : f32 to vector<8x128xf32>
    %82 = arith.mulf %81, %80 : vector<8x128xf32>
    %83 = math.tanh %82 : vector<8x128xf32>
    %cst_49 = arith.constant 1.000000e+00 : f32
    %84 = vector.broadcast %cst_49 : f32 to vector<8x128xf32>
    %85 = arith.addf %83, %84 : vector<8x128xf32>
    %cst_50 = arith.constant 5.000000e-01 : f32
    %86 = vector.broadcast %cst_50 : f32 to vector<8x128xf32>
    %87 = arith.mulf %86, %85 : vector<8x128xf32>
    %88 = arith.mulf %77, %55 : vector<8x128xf32>
    %89 = arith.mulf %69, %79 : vector<8x128xf32>
    %90 = arith.addf %88, %89 : vector<8x128xf32>
    %91 = math.tanh %90 : vector<8x128xf32>
    %92 = arith.mulf %87, %91 : vector<8x128xf32>
    %93 = tpu.concatenate %92, %56 in 1 : vector<8x128xf32>, vector<8x128xf32> -> vector<8x256xf32>
    %cst_51 = arith.constant dense<0.000000e+00> : vector<8x1024xf32>
    %94 = tpu.matmul %93, %54, %cst_51 {dimension_numbers = #tpu.dot_dimension_numbers<[1], [0], [0], [1], [0, 0, 1, 1], [], []>} : vector<8x256xf32>, vector<256x1024xf32>, vector<8x1024xf32> -> vector<8x1024xf32>
    %95 = vector.extract_strided_slice %42 {offsets = [8, 0], sizes = [8, 512], strides = [1, 1]} : vector<64x512xf32> to vector<8x512xf32>
    %96 = arith.addf %95, %47 : vector<8x512xf32>
    %97 = vector.extract_strided_slice %94 {offsets = [0, 0], sizes = [8, 512], strides = [1, 1]} : vector<8x1024xf32> to vector<8x512xf32>
    %98 = arith.addf %96, %97 : vector<8x512xf32>
    %99 = vector.extract_strided_slice %98 {offsets = [0, 0], sizes = [8, 128], strides = [1, 1]} : vector<8x512xf32> to vector<8x128xf32>
    %cst_52 = arith.constant 5.000000e-01 : f32
    %100 = vector.broadcast %cst_52 : f32 to vector<8x128xf32>
    %101 = arith.mulf %100, %99 : vector<8x128xf32>
    %102 = math.tanh %101 : vector<8x128xf32>
    %cst_53 = arith.constant 1.000000e+00 : f32
    %103 = vector.broadcast %cst_53 : f32 to vector<8x128xf32>
    %104 = arith.addf %102, %103 : vector<8x128xf32>
    %cst_54 = arith.constant 5.000000e-01 : f32
    %105 = vector.broadcast %cst_54 : f32 to vector<8x128xf32>
    %106 = arith.mulf %105, %104 : vector<8x128xf32>
    %107 = vector.extract_strided_slice %98 {offsets = [0, 128], sizes = [8, 128], strides = [1, 1]} : vector<8x512xf32> to vector<8x128xf32>
    %cst_55 = arith.constant 5.000000e-01 : f32
    %108 = vector.broadcast %cst_55 : f32 to vector<8x128xf32>
    %109 = arith.mulf %108, %107 : vector<8x128xf32>
    %110 = math.tanh %109 : vector<8x128xf32>
    %cst_56 = arith.constant 1.000000e+00 : f32
    %111 = vector.broadcast %cst_56 : f32 to vector<8x128xf32>
    %112 = arith.addf %110, %111 : vector<8x128xf32>
    %cst_57 = arith.constant 5.000000e-01 : f32
    %113 = vector.broadcast %cst_57 : f32 to vector<8x128xf32>
    %114 = arith.mulf %113, %112 : vector<8x128xf32>
    %115 = vector.extract_strided_slice %98 {offsets = [0, 256], sizes = [8, 128], strides = [1, 1]} : vector<8x512xf32> to vector<8x128xf32>
    %116 = math.tanh %115 : vector<8x128xf32>
    %117 = vector.extract_strided_slice %98 {offsets = [0, 384], sizes = [8, 128], strides = [1, 1]} : vector<8x512xf32> to vector<8x128xf32>
    %cst_58 = arith.constant 5.000000e-01 : f32
    %118 = vector.broadcast %cst_58 : f32 to vector<8x128xf32>
    %119 = arith.mulf %118, %117 : vector<8x128xf32>
    %120 = math.tanh %119 : vector<8x128xf32>
    %cst_59 = arith.constant 1.000000e+00 : f32
    %121 = vector.broadcast %cst_59 : f32 to vector<8x128xf32>
    %122 = arith.addf %120, %121 : vector<8x128xf32>
    %cst_60 = arith.constant 5.000000e-01 : f32
    %123 = vector.broadcast %cst_60 : f32 to vector<8x128xf32>
    %124 = arith.mulf %123, %122 : vector<8x128xf32>
    %125 = arith.mulf %114, %90 : vector<8x128xf32>
    %126 = arith.mulf %106, %116 : vector<8x128xf32>
    %127 = arith.addf %125, %126 : vector<8x128xf32>
    %128 = math.tanh %127 : vector<8x128xf32>
    %129 = arith.mulf %124, %128 : vector<8x128xf32>
    %130 = vector.extract_strided_slice %94 {offsets = [0, 512], sizes = [8, 512], strides = [1, 1]} : vector<8x1024xf32> to vector<8x512xf32>
    %131 = vector.broadcast %36 : vector<1x512xf32> to vector<8x512xf32>
    %132 = arith.addf %130, %131 : vector<8x512xf32>
    %133 = vector.extract_strided_slice %132 {offsets = [0, 0], sizes = [8, 128], strides = [1, 1]} : vector<8x512xf32> to vector<8x128xf32>
    %cst_61 = arith.constant 5.000000e-01 : f32
    %134 = vector.broadcast %cst_61 : f32 to vector<8x128xf32>
    %135 = arith.mulf %134, %133 : vector<8x128xf32>
    %136 = math.tanh %135 : vector<8x128xf32>
    %cst_62 = arith.constant 1.000000e+00 : f32
    %137 = vector.broadcast %cst_62 : f32 to vector<8x128xf32>
    %138 = arith.addf %136, %137 : vector<8x128xf32>
    %cst_63 = arith.constant 5.000000e-01 : f32
    %139 = vector.broadcast %cst_63 : f32 to vector<8x128xf32>
    %140 = arith.mulf %139, %138 : vector<8x128xf32>
    %141 = vector.extract_strided_slice %132 {offsets = [0, 128], sizes = [8, 128], strides = [1, 1]} : vector<8x512xf32> to vector<8x128xf32>
    %cst_64 = arith.constant 5.000000e-01 : f32
    %142 = vector.broadcast %cst_64 : f32 to vector<8x128xf32>
    %143 = arith.mulf %142, %141 : vector<8x128xf32>
    %144 = math.tanh %143 : vector<8x128xf32>
    %cst_65 = arith.constant 1.000000e+00 : f32
    %145 = vector.broadcast %cst_65 : f32 to vector<8x128xf32>
    %146 = arith.addf %144, %145 : vector<8x128xf32>
    %cst_66 = arith.constant 5.000000e-01 : f32
    %147 = vector.broadcast %cst_66 : f32 to vector<8x128xf32>
    %148 = arith.mulf %147, %146 : vector<8x128xf32>
    %149 = vector.extract_strided_slice %132 {offsets = [0, 256], sizes = [8, 128], strides = [1, 1]} : vector<8x512xf32> to vector<8x128xf32>
    %150 = math.tanh %149 : vector<8x128xf32>
    %151 = vector.extract_strided_slice %132 {offsets = [0, 384], sizes = [8, 128], strides = [1, 1]} : vector<8x512xf32> to vector<8x128xf32>
    %cst_67 = arith.constant 5.000000e-01 : f32
    %152 = vector.broadcast %cst_67 : f32 to vector<8x128xf32>
    %153 = arith.mulf %152, %151 : vector<8x128xf32>
    %154 = math.tanh %153 : vector<8x128xf32>
    %cst_68 = arith.constant 1.000000e+00 : f32
    %155 = vector.broadcast %cst_68 : f32 to vector<8x128xf32>
    %156 = arith.addf %154, %155 : vector<8x128xf32>
    %cst_69 = arith.constant 5.000000e-01 : f32
    %157 = vector.broadcast %cst_69 : f32 to vector<8x128xf32>
    %158 = arith.mulf %157, %156 : vector<8x128xf32>
    %159 = arith.mulf %148, %57 : vector<8x128xf32>
    %160 = arith.mulf %140, %150 : vector<8x128xf32>
    %161 = arith.addf %159, %160 : vector<8x128xf32>
    %162 = math.tanh %161 : vector<8x128xf32>
    %163 = arith.mulf %158, %162 : vector<8x128xf32>
    %164 = vector.extract_strided_slice %3 {offsets = [0, 0], sizes = [8, 1], strides = [1, 1]} : vector<64x1xf32> to vector<8x1xf32>
    %165 = vector.broadcast %164 : vector<8x1xf32> to vector<8x128xf32>
    %166 = arith.mulf %163, %165 : vector<8x128xf32>
    %c0_70 = arith.constant 0 : index
    %c0_71 = arith.constant 0 : index
    %167 = vector.load %arg12[%c0_70, %c0_71] : memref<64x128xf32, #tpu.memory_space<vmem>>, vector<8x128xf32>
    tpu.vector_store %arg12[%c0_70, %c0_71], %166 {strides = array<i32>} : memref<64x128xf32, #tpu.memory_space<vmem>>, vector<8x128xf32>,
    %168 = arith.mulf %166, %53 : vector<8x128xf32>
    %cst_72 = arith.constant dense<0.000000e+00> : vector<8xf32>
    %169 = vector.multi_reduction <add>, %168, %cst_72 [1] : vector<8x128xf32> to vector<8xf32>
    %170 = vector.shape_cast %169 : vector<8xf32> to vector<8x1xf32>
    %cst_73 = arith.constant 0.000000e+00 : f32
    %171 = vector.broadcast %cst_73 : f32 to vector<8x1xf32>
    %172 = arith.subf %171, %170 : vector<8x1xf32>
    %173 = math.exp %172 : vector<8x1xf32>
    %174 = vector.broadcast %173 : vector<8x1xf32> to vector<8x128xf32>
    %175 = arith.mulf %174, %166 : vector<8x128xf32>
    %176 = arith.addf %58, %175 : vector<8x128xf32>
    %177 = arith.addf %59, %173 : vector<8x1xf32>
    %178 = tpu.concatenate %129, %163 in 1 : vector<8x128xf32>, vector<8x128xf32> -> vector<8x256xf32>
    %cst_74 = arith.constant dense<0.000000e+00> : vector<8x1024xf32>
    %179 = tpu.matmul %178, %54, %cst_74 {dimension_numbers = #tpu.dot_dimension_numbers<[1], [0], [0], [1], [0, 0, 1, 1], [], []>} : vector<8x256xf32>, vector<256x1024xf32>, vector<8x1024xf32> -> vector<8x1024xf32>
    %180 = vector.extract_strided_slice %42 {offsets = [16, 0], sizes = [8, 512], strides = [1, 1]} : vector<64x512xf32> to vector<8x512xf32>
    %181 = arith.addf %180, %47 : vector<8x512xf32>
    %182 = vector.extract_strided_slice %179 {offsets = [0, 0], sizes = [8, 512], strides = [1, 1]} : vector<8x1024xf32> to vector<8x512xf32>
    %183 = arith.addf %181, %182 : vector<8x512xf32>
    %184 = vector.extract_strided_slice %183 {offsets = [0, 0], sizes = [8, 128], strides = [1, 1]} : vector<8x512xf32> to vector<8x128xf32>
    %cst_75 = arith.constant 5.000000e-01 : f32
    %185 = vector.broadcast %cst_75 : f32 to vector<8x128xf32>
    %186 = arith.mulf %185, %184 : vector<8x128xf32>
    %187 = math.tanh %186 : vector<8x128xf32>
    %cst_76 = arith.constant 1.000000e+00 : f32
    %188 = vector.broadcast %cst_76 : f32 to vector<8x128xf32>
    %189 = arith.addf %187, %188 : vector<8x128xf32>
    %cst_77 = arith.constant 5.000000e-01 : f32
    %190 = vector.broadcast %cst_77 : f32 to vector<8x128xf32>
    %191 = arith.mulf %190, %189 : vector<8x128xf32>
    %192 = vector.extract_strided_slice %183 {offsets = [0, 128], sizes = [8, 128], strides = [1, 1]} : vector<8x512xf32> to vector<8x128xf32>
    %cst_78 = arith.constant 5.000000e-01 : f32
    %193 = vector.broadcast %cst_78 : f32 to vector<8x128xf32>
    %194 = arith.mulf %193, %192 : vector<8x128xf32>
    %195 = math.tanh %194 : vector<8x128xf32>
    %cst_79 = arith.constant 1.000000e+00 : f32
    %196 = vector.broadcast %cst_79 : f32 to vector<8x128xf32>
    %197 = arith.addf %195, %196 : vector<8x128xf32>
    %cst_80 = arith.constant 5.000000e-01 : f32
    %198 = vector.broadcast %cst_80 : f32 to vector<8x128xf32>
    %199 = arith.mulf %198, %197 : vector<8x128xf32>
    %200 = vector.extract_strided_slice %183 {offsets = [0, 256], sizes = [8, 128], strides = [1, 1]} : vector<8x512xf32> to vector<8x128xf32>
    %201 = math.tanh %200 : vector<8x128xf32>
    %202 = vector.extract_strided_slice %183 {offsets = [0, 384], sizes = [8, 128], strides = [1, 1]} : vector<8x512xf32> to vector<8x128xf32>
    %cst_81 = arith.constant 5.000000e-01 : f32
    %203 = vector.broadcast %cst_81 : f32 to vector<8x128xf32>
    %204 = arith.mulf %203, %202 : vector<8x128xf32>
    %205 = math.tanh %204 : vector<8x128xf32>
    %cst_82 = arith.constant 1.000000e+00 : f32
    %206 = vector.broadcast %cst_82 : f32 to vector<8x128xf32>
    %207 = arith.addf %205, %206 : vector<8x128xf32>
    %cst_83 = arith.constant 5.000000e-01 : f32
    %208 = vector.broadcast %cst_83 : f32 to vector<8x128xf32>
    %209 = arith.mulf %208, %207 : vector<8x128xf32>
    %210 = arith.mulf %199, %127 : vector<8x128xf32>
    %211 = arith.mulf %191, %201 : vector<8x128xf32>
    %212 = arith.addf %210, %211 : vector<8x128xf32>
    %213 = math.tanh %212 : vector<8x128xf32>
    %214 = arith.mulf %209, %213 : vector<8x128xf32>
    %215 = vector.extract_strided_slice %179 {offsets = [0, 512], sizes = [8, 512], strides = [1, 1]} : vector<8x1024xf32> to vector<8x512xf32>
    %216 = vector.broadcast %36 : vector<1x512xf32> to vector<8x512xf32>
    %217 = arith.addf %215, %216 : vector<8x512xf32>
    %218 = vector.extract_strided_slice %217 {offsets = [0, 0], sizes = [8, 128], strides = [1, 1]} : vector<8x512xf32> to vector<8x128xf32>
    %cst_84 = arith.constant 5.000000e-01 : f32
    %219 = vector.broadcast %cst_84 : f32 to vector<8x128xf32>
    %220 = arith.mulf %219, %218 : vector<8x128xf32>
    %221 = math.tanh %220 : vector<8x128xf32>
    %cst_85 = arith.constant 1.000000e+00 : f32
    %222 = vector.broadcast %cst_85 : f32 to vector<8x128xf32>
    %223 = arith.addf %221, %222 : vector<8x128xf32>
    %cst_86 = arith.constant 5.000000e-01 : f32
    %224 = vector.broadcast %cst_86 : f32 to vector<8x128xf32>
    %225 = arith.mulf %224, %223 : vector<8x128xf32>
    %226 = vector.extract_strided_slice %217 {offsets = [0, 128], sizes = [8, 128], strides = [1, 1]} : vector<8x512xf32> to vector<8x128xf32>
    %cst_87 = arith.constant 5.000000e-01 : f32
    %227 = vector.broadcast %cst_87 : f32 to vector<8x128xf32>
    %228 = arith.mulf %227, %226 : vector<8x128xf32>
    %229 = math.tanh %228 : vector<8x128xf32>
    %cst_88 = arith.constant 1.000000e+00 : f32
    %230 = vector.broadcast %cst_88 : f32 to vector<8x128xf32>
    %231 = arith.addf %229, %230 : vector<8x128xf32>
    %cst_89 = arith.constant 5.000000e-01 : f32
    %232 = vector.broadcast %cst_89 : f32 to vector<8x128xf32>
    %233 = arith.mulf %232, %231 : vector<8x128xf32>
    %234 = vector.extract_strided_slice %217 {offsets = [0, 256], sizes = [8, 128], strides = [1, 1]} : vector<8x512xf32> to vector<8x128xf32>
    %235 = math.tanh %234 : vector<8x128xf32>
    %236 = vector.extract_strided_slice %217 {offsets = [0, 384], sizes = [8, 128], strides = [1, 1]} : vector<8x512xf32> to vector<8x128xf32>
    %cst_90 = arith.constant 5.000000e-01 : f32
    %237 = vector.broadcast %cst_90 : f32 to vector<8x128xf32>
    %238 = arith.mulf %237, %236 : vector<8x128xf32>
    %239 = math.tanh %238 : vector<8x128xf32>
    %cst_91 = arith.constant 1.000000e+00 : f32
    %240 = vector.broadcast %cst_91 : f32 to vector<8x128xf32>
    %241 = arith.addf %239, %240 : vector<8x128xf32>
    %cst_92 = arith.constant 5.000000e-01 : f32
    %242 = vector.broadcast %cst_92 : f32 to vector<8x128xf32>
    %243 = arith.mulf %242, %241 : vector<8x128xf32>
    %244 = arith.mulf %233, %161 : vector<8x128xf32>
    %245 = arith.mulf %225, %235 : vector<8x128xf32>
    %246 = arith.addf %244, %245 : vector<8x128xf32>
    %247 = math.tanh %246 : vector<8x128xf32>
    %248 = arith.mulf %243, %247 : vector<8x128xf32>
    %249 = vector.extract_strided_slice %3 {offsets = [8, 0], sizes = [8, 1], strides = [1, 1]} : vector<64x1xf32> to vector<8x1xf32>
    %250 = vector.broadcast %249 : vector<8x1xf32> to vector<8x128xf32>
    %251 = arith.mulf %248, %250 : vector<8x128xf32>
    %c8 = arith.constant 8 : index
    %c0_93 = arith.constant 0 : index
    %252 = vector.load %arg12[%c8, %c0_93] : memref<64x128xf32, #tpu.memory_space<vmem>>, vector<8x128xf32>
    tpu.vector_store %arg12[%c8, %c0_93], %251 {strides = array<i32>} : memref<64x128xf32, #tpu.memory_space<vmem>>, vector<8x128xf32>,
    %253 = arith.mulf %251, %53 : vector<8x128xf32>
    %cst_94 = arith.constant dense<0.000000e+00> : vector<8xf32>
    %254 = vector.multi_reduction <add>, %253, %cst_94 [1] : vector<8x128xf32> to vector<8xf32>
    %255 = vector.shape_cast %254 : vector<8xf32> to vector<8x1xf32>
    %cst_95 = arith.constant 0.000000e+00 : f32
    %256 = vector.broadcast %cst_95 : f32 to vector<8x1xf32>
    %257 = arith.subf %256, %255 : vector<8x1xf32>
    %258 = math.exp %257 : vector<8x1xf32>
    %259 = vector.broadcast %258 : vector<8x1xf32> to vector<8x128xf32>
    %260 = arith.mulf %259, %251 : vector<8x128xf32>
    %261 = arith.addf %176, %260 : vector<8x128xf32>
    %262 = arith.addf %177, %258 : vector<8x1xf32>
    %263 = tpu.concatenate %214, %248 in 1 : vector<8x128xf32>, vector<8x128xf32> -> vector<8x256xf32>
    %cst_96 = arith.constant dense<0.000000e+00> : vector<8x1024xf32>
    %264 = tpu.matmul %263, %54, %cst_96 {dimension_numbers = #tpu.dot_dimension_numbers<[1], [0], [0], [1], [0, 0, 1, 1], [], []>} : vector<8x256xf32>, vector<256x1024xf32>, vector<8x1024xf32> -> vector<8x1024xf32>
    %265 = vector.extract_strided_slice %42 {offsets = [24, 0], sizes = [8, 512], strides = [1, 1]} : vector<64x512xf32> to vector<8x512xf32>
    %266 = arith.addf %265, %47 : vector<8x512xf32>
    %267 = vector.extract_strided_slice %264 {offsets = [0, 0], sizes = [8, 512], strides = [1, 1]} : vector<8x1024xf32> to vector<8x512xf32>
    %268 = arith.addf %266, %267 : vector<8x512xf32>
    %269 = vector.extract_strided_slice %268 {offsets = [0, 0], sizes = [8, 128], strides = [1, 1]} : vector<8x512xf32> to vector<8x128xf32>
    %cst_97 = arith.constant 5.000000e-01 : f32
    %270 = vector.broadcast %cst_97 : f32 to vector<8x128xf32>
    %271 = arith.mulf %270, %269 : vector<8x128xf32>
    %272 = math.tanh %271 : vector<8x128xf32>
    %cst_98 = arith.constant 1.000000e+00 : f32
    %273 = vector.broadcast %cst_98 : f32 to vector<8x128xf32>
    %274 = arith.addf %272, %273 : vector<8x128xf32>
    %cst_99 = arith.constant 5.000000e-01 : f32
    %275 = vector.broadcast %cst_99 : f32 to vector<8x128xf32>
    %276 = arith.mulf %275, %274 : vector<8x128xf32>
    %277 = vector.extract_strided_slice %268 {offsets = [0, 128], sizes = [8, 128], strides = [1, 1]} : vector<8x512xf32> to vector<8x128xf32>
    %cst_100 = arith.constant 5.000000e-01 : f32
    %278 = vector.broadcast %cst_100 : f32 to vector<8x128xf32>
    %279 = arith.mulf %278, %277 : vector<8x128xf32>
    %280 = math.tanh %279 : vector<8x128xf32>
    %cst_101 = arith.constant 1.000000e+00 : f32
    %281 = vector.broadcast %cst_101 : f32 to vector<8x128xf32>
    %282 = arith.addf %280, %281 : vector<8x128xf32>
    %cst_102 = arith.constant 5.000000e-01 : f32
    %283 = vector.broadcast %cst_102 : f32 to vector<8x128xf32>
    %284 = arith.mulf %283, %282 : vector<8x128xf32>
    %285 = vector.extract_strided_slice %268 {offsets = [0, 256], sizes = [8, 128], strides = [1, 1]} : vector<8x512xf32> to vector<8x128xf32>
    %286 = math.tanh %285 : vector<8x128xf32>
    %287 = vector.extract_strided_slice %268 {offsets = [0, 384], sizes = [8, 128], strides = [1, 1]} : vector<8x512xf32> to vector<8x128xf32>
    %cst_103 = arith.constant 5.000000e-01 : f32
    %288 = vector.broadcast %cst_103 : f32 to vector<8x128xf32>
    %289 = arith.mulf %288, %287 : vector<8x128xf32>
    %290 = math.tanh %289 : vector<8x128xf32>
    %cst_104 = arith.constant 1.000000e+00 : f32
    %291 = vector.broadcast %cst_104 : f32 to vector<8x128xf32>
    %292 = arith.addf %290, %291 : vector<8x128xf32>
    %cst_105 = arith.constant 5.000000e-01 : f32
    %293 = vector.broadcast %cst_105 : f32 to vector<8x128xf32>
    %294 = arith.mulf %293, %292 : vector<8x128xf32>
    %295 = arith.mulf %284, %212 : vector<8x128xf32>
    %296 = arith.mulf %276, %286 : vector<8x128xf32>
    %297 = arith.addf %295, %296 : vector<8x128xf32>
    %298 = math.tanh %297 : vector<8x128xf32>
    %299 = arith.mulf %294, %298 : vector<8x128xf32>
    %300 = vector.extract_strided_slice %264 {offsets = [0, 512], sizes = [8, 512], strides = [1, 1]} : vector<8x1024xf32> to vector<8x512xf32>
    %301 = vector.broadcast %36 : vector<1x512xf32> to vector<8x512xf32>
    %302 = arith.addf %300, %301 : vector<8x512xf32>
    %303 = vector.extract_strided_slice %302 {offsets = [0, 0], sizes = [8, 128], strides = [1, 1]} : vector<8x512xf32> to vector<8x128xf32>
    %cst_106 = arith.constant 5.000000e-01 : f32
    %304 = vector.broadcast %cst_106 : f32 to vector<8x128xf32>
    %305 = arith.mulf %304, %303 : vector<8x128xf32>
    %306 = math.tanh %305 : vector<8x128xf32>
    %cst_107 = arith.constant 1.000000e+00 : f32
    %307 = vector.broadcast %cst_107 : f32 to vector<8x128xf32>
    %308 = arith.addf %306, %307 : vector<8x128xf32>
    %cst_108 = arith.constant 5.000000e-01 : f32
    %309 = vector.broadcast %cst_108 : f32 to vector<8x128xf32>
    %310 = arith.mulf %309, %308 : vector<8x128xf32>
    %311 = vector.extract_strided_slice %302 {offsets = [0, 128], sizes = [8, 128], strides = [1, 1]} : vector<8x512xf32> to vector<8x128xf32>
    %cst_109 = arith.constant 5.000000e-01 : f32
    %312 = vector.broadcast %cst_109 : f32 to vector<8x128xf32>
    %313 = arith.mulf %312, %311 : vector<8x128xf32>
    %314 = math.tanh %313 : vector<8x128xf32>
    %cst_110 = arith.constant 1.000000e+00 : f32
    %315 = vector.broadcast %cst_110 : f32 to vector<8x128xf32>
    %316 = arith.addf %314, %315 : vector<8x128xf32>
    %cst_111 = arith.constant 5.000000e-01 : f32
    %317 = vector.broadcast %cst_111 : f32 to vector<8x128xf32>
    %318 = arith.mulf %317, %316 : vector<8x128xf32>
    %319 = vector.extract_strided_slice %302 {offsets = [0, 256], sizes = [8, 128], strides = [1, 1]} : vector<8x512xf32> to vector<8x128xf32>
    %320 = math.tanh %319 : vector<8x128xf32>
    %321 = vector.extract_strided_slice %302 {offsets = [0, 384], sizes = [8, 128], strides = [1, 1]} : vector<8x512xf32> to vector<8x128xf32>
    %cst_112 = arith.constant 5.000000e-01 : f32
    %322 = vector.broadcast %cst_112 : f32 to vector<8x128xf32>
    %323 = arith.mulf %322, %321 : vector<8x128xf32>
    %324 = math.tanh %323 : vector<8x128xf32>
    %cst_113 = arith.constant 1.000000e+00 : f32
    %325 = vector.broadcast %cst_113 : f32 to vector<8x128xf32>
    %326 = arith.addf %324, %325 : vector<8x128xf32>
    %cst_114 = arith.constant 5.000000e-01 : f32
    %327 = vector.broadcast %cst_114 : f32 to vector<8x128xf32>
    %328 = arith.mulf %327, %326 : vector<8x128xf32>
    %329 = arith.mulf %318, %246 : vector<8x128xf32>
    %330 = arith.mulf %310, %320 : vector<8x128xf32>
    %331 = arith.addf %329, %330 : vector<8x128xf32>
    %332 = math.tanh %331 : vector<8x128xf32>
    %333 = arith.mulf %328, %332 : vector<8x128xf32>
    %334 = vector.extract_strided_slice %3 {offsets = [16, 0], sizes = [8, 1], strides = [1, 1]} : vector<64x1xf32> to vector<8x1xf32>
    %335 = vector.broadcast %334 : vector<8x1xf32> to vector<8x128xf32>
    %336 = arith.mulf %333, %335 : vector<8x128xf32>
    %c16_115 = arith.constant 16 : index
    %c0_116 = arith.constant 0 : index
    %337 = vector.load %arg12[%c16_115, %c0_116] : memref<64x128xf32, #tpu.memory_space<vmem>>, vector<8x128xf32>
    tpu.vector_store %arg12[%c16_115, %c0_116], %336 {strides = array<i32>} : memref<64x128xf32, #tpu.memory_space<vmem>>, vector<8x128xf32>,
    %338 = arith.mulf %336, %53 : vector<8x128xf32>
    %cst_117 = arith.constant dense<0.000000e+00> : vector<8xf32>
    %339 = vector.multi_reduction <add>, %338, %cst_117 [1] : vector<8x128xf32> to vector<8xf32>
    %340 = vector.shape_cast %339 : vector<8xf32> to vector<8x1xf32>
    %cst_118 = arith.constant 0.000000e+00 : f32
    %341 = vector.broadcast %cst_118 : f32 to vector<8x1xf32>
    %342 = arith.subf %341, %340 : vector<8x1xf32>
    %343 = math.exp %342 : vector<8x1xf32>
    %344 = vector.broadcast %343 : vector<8x1xf32> to vector<8x128xf32>
    %345 = arith.mulf %344, %336 : vector<8x128xf32>
    %346 = arith.addf %261, %345 : vector<8x128xf32>
    %347 = arith.addf %262, %343 : vector<8x1xf32>
    %348 = tpu.concatenate %299, %333 in 1 : vector<8x128xf32>, vector<8x128xf32> -> vector<8x256xf32>
    %cst_119 = arith.constant dense<0.000000e+00> : vector<8x1024xf32>
    %349 = tpu.matmul %348, %54, %cst_119 {dimension_numbers = #tpu.dot_dimension_numbers<[1], [0], [0], [1], [0, 0, 1, 1], [], []>} : vector<8x256xf32>, vector<256x1024xf32>, vector<8x1024xf32> -> vector<8x1024xf32>
    %350 = vector.extract_strided_slice %42 {offsets = [32, 0], sizes = [8, 512], strides = [1, 1]} : vector<64x512xf32> to vector<8x512xf32>
    %351 = arith.addf %350, %47 : vector<8x512xf32>
    %352 = vector.extract_strided_slice %349 {offsets = [0, 0], sizes = [8, 512], strides = [1, 1]} : vector<8x1024xf32> to vector<8x512xf32>
    %353 = arith.addf %351, %352 : vector<8x512xf32>
    %354 = vector.extract_strided_slice %353 {offsets = [0, 0], sizes = [8, 128], strides = [1, 1]} : vector<8x512xf32> to vector<8x128xf32>
    %cst_120 = arith.constant 5.000000e-01 : f32
    %355 = vector.broadcast %cst_120 : f32 to vector<8x128xf32>
    %356 = arith.mulf %355, %354 : vector<8x128xf32>
    %357 = math.tanh %356 : vector<8x128xf32>
    %cst_121 = arith.constant 1.000000e+00 : f32
    %358 = vector.broadcast %cst_121 : f32 to vector<8x128xf32>
    %359 = arith.addf %357, %358 : vector<8x128xf32>
    %cst_122 = arith.constant 5.000000e-01 : f32
    %360 = vector.broadcast %cst_122 : f32 to vector<8x128xf32>
    %361 = arith.mulf %360, %359 : vector<8x128xf32>
    %362 = vector.extract_strided_slice %353 {offsets = [0, 128], sizes = [8, 128], strides = [1, 1]} : vector<8x512xf32> to vector<8x128xf32>
    %cst_123 = arith.constant 5.000000e-01 : f32
    %363 = vector.broadcast %cst_123 : f32 to vector<8x128xf32>
    %364 = arith.mulf %363, %362 : vector<8x128xf32>
    %365 = math.tanh %364 : vector<8x128xf32>
    %cst_124 = arith.constant 1.000000e+00 : f32
    %366 = vector.broadcast %cst_124 : f32 to vector<8x128xf32>
    %367 = arith.addf %365, %366 : vector<8x128xf32>
    %cst_125 = arith.constant 5.000000e-01 : f32
    %368 = vector.broadcast %cst_125 : f32 to vector<8x128xf32>
    %369 = arith.mulf %368, %367 : vector<8x128xf32>
    %370 = vector.extract_strided_slice %353 {offsets = [0, 256], sizes = [8, 128], strides = [1, 1]} : vector<8x512xf32> to vector<8x128xf32>
    %371 = math.tanh %370 : vector<8x128xf32>
    %372 = vector.extract_strided_slice %353 {offsets = [0, 384], sizes = [8, 128], strides = [1, 1]} : vector<8x512xf32> to vector<8x128xf32>
    %cst_126 = arith.constant 5.000000e-01 : f32
    %373 = vector.broadcast %cst_126 : f32 to vector<8x128xf32>
    %374 = arith.mulf %373, %372 : vector<8x128xf32>
    %375 = math.tanh %374 : vector<8x128xf32>
    %cst_127 = arith.constant 1.000000e+00 : f32
    %376 = vector.broadcast %cst_127 : f32 to vector<8x128xf32>
    %377 = arith.addf %375, %376 : vector<8x128xf32>
    %cst_128 = arith.constant 5.000000e-01 : f32
    %378 = vector.broadcast %cst_128 : f32 to vector<8x128xf32>
    %379 = arith.mulf %378, %377 : vector<8x128xf32>
    %380 = arith.mulf %369, %297 : vector<8x128xf32>
    %381 = arith.mulf %361, %371 : vector<8x128xf32>
    %382 = arith.addf %380, %381 : vector<8x128xf32>
    %383 = math.tanh %382 : vector<8x128xf32>
    %384 = arith.mulf %379, %383 : vector<8x128xf32>
    %385 = vector.extract_strided_slice %349 {offsets = [0, 512], sizes = [8, 512], strides = [1, 1]} : vector<8x1024xf32> to vector<8x512xf32>
    %386 = vector.broadcast %36 : vector<1x512xf32> to vector<8x512xf32>
    %387 = arith.addf %385, %386 : vector<8x512xf32>
    %388 = vector.extract_strided_slice %387 {offsets = [0, 0], sizes = [8, 128], strides = [1, 1]} : vector<8x512xf32> to vector<8x128xf32>
    %cst_129 = arith.constant 5.000000e-01 : f32
    %389 = vector.broadcast %cst_129 : f32 to vector<8x128xf32>
    %390 = arith.mulf %389, %388 : vector<8x128xf32>
    %391 = math.tanh %390 : vector<8x128xf32>
    %cst_130 = arith.constant 1.000000e+00 : f32
    %392 = vector.broadcast %cst_130 : f32 to vector<8x128xf32>
    %393 = arith.addf %391, %392 : vector<8x128xf32>
    %cst_131 = arith.constant 5.000000e-01 : f32
    %394 = vector.broadcast %cst_131 : f32 to vector<8x128xf32>
    %395 = arith.mulf %394, %393 : vector<8x128xf32>
    %396 = vector.extract_strided_slice %387 {offsets = [0, 128], sizes = [8, 128], strides = [1, 1]} : vector<8x512xf32> to vector<8x128xf32>
    %cst_132 = arith.constant 5.000000e-01 : f32
    %397 = vector.broadcast %cst_132 : f32 to vector<8x128xf32>
    %398 = arith.mulf %397, %396 : vector<8x128xf32>
    %399 = math.tanh %398 : vector<8x128xf32>
    %cst_133 = arith.constant 1.000000e+00 : f32
    %400 = vector.broadcast %cst_133 : f32 to vector<8x128xf32>
    %401 = arith.addf %399, %400 : vector<8x128xf32>
    %cst_134 = arith.constant 5.000000e-01 : f32
    %402 = vector.broadcast %cst_134 : f32 to vector<8x128xf32>
    %403 = arith.mulf %402, %401 : vector<8x128xf32>
    %404 = vector.extract_strided_slice %387 {offsets = [0, 256], sizes = [8, 128], strides = [1, 1]} : vector<8x512xf32> to vector<8x128xf32>
    %405 = math.tanh %404 : vector<8x128xf32>
    %406 = vector.extract_strided_slice %387 {offsets = [0, 384], sizes = [8, 128], strides = [1, 1]} : vector<8x512xf32> to vector<8x128xf32>
    %cst_135 = arith.constant 5.000000e-01 : f32
    %407 = vector.broadcast %cst_135 : f32 to vector<8x128xf32>
    %408 = arith.mulf %407, %406 : vector<8x128xf32>
    %409 = math.tanh %408 : vector<8x128xf32>
    %cst_136 = arith.constant 1.000000e+00 : f32
    %410 = vector.broadcast %cst_136 : f32 to vector<8x128xf32>
    %411 = arith.addf %409, %410 : vector<8x128xf32>
    %cst_137 = arith.constant 5.000000e-01 : f32
    %412 = vector.broadcast %cst_137 : f32 to vector<8x128xf32>
    %413 = arith.mulf %412, %411 : vector<8x128xf32>
    %414 = arith.mulf %403, %331 : vector<8x128xf32>
    %415 = arith.mulf %395, %405 : vector<8x128xf32>
    %416 = arith.addf %414, %415 : vector<8x128xf32>
    %417 = math.tanh %416 : vector<8x128xf32>
    %418 = arith.mulf %413, %417 : vector<8x128xf32>
    %419 = vector.extract_strided_slice %3 {offsets = [24, 0], sizes = [8, 1], strides = [1, 1]} : vector<64x1xf32> to vector<8x1xf32>
    %420 = vector.broadcast %419 : vector<8x1xf32> to vector<8x128xf32>
    %421 = arith.mulf %418, %420 : vector<8x128xf32>
    %c24 = arith.constant 24 : index
    %c0_138 = arith.constant 0 : index
    %422 = vector.load %arg12[%c24, %c0_138] : memref<64x128xf32, #tpu.memory_space<vmem>>, vector<8x128xf32>
    tpu.vector_store %arg12[%c24, %c0_138], %421 {strides = array<i32>} : memref<64x128xf32, #tpu.memory_space<vmem>>, vector<8x128xf32>,
    %423 = arith.mulf %421, %53 : vector<8x128xf32>
    %cst_139 = arith.constant dense<0.000000e+00> : vector<8xf32>
    %424 = vector.multi_reduction <add>, %423, %cst_139 [1] : vector<8x128xf32> to vector<8xf32>
    %425 = vector.shape_cast %424 : vector<8xf32> to vector<8x1xf32>
    %cst_140 = arith.constant 0.000000e+00 : f32
    %426 = vector.broadcast %cst_140 : f32 to vector<8x1xf32>
    %427 = arith.subf %426, %425 : vector<8x1xf32>
    %428 = math.exp %427 : vector<8x1xf32>
    %429 = vector.broadcast %428 : vector<8x1xf32> to vector<8x128xf32>
    %430 = arith.mulf %429, %421 : vector<8x128xf32>
    %431 = arith.addf %346, %430 : vector<8x128xf32>
    %432 = arith.addf %347, %428 : vector<8x1xf32>
    %433 = tpu.concatenate %384, %418 in 1 : vector<8x128xf32>, vector<8x128xf32> -> vector<8x256xf32>
    %cst_141 = arith.constant dense<0.000000e+00> : vector<8x1024xf32>
    %434 = tpu.matmul %433, %54, %cst_141 {dimension_numbers = #tpu.dot_dimension_numbers<[1], [0], [0], [1], [0, 0, 1, 1], [], []>} : vector<8x256xf32>, vector<256x1024xf32>, vector<8x1024xf32> -> vector<8x1024xf32>
    %435 = vector.extract_strided_slice %42 {offsets = [40, 0], sizes = [8, 512], strides = [1, 1]} : vector<64x512xf32> to vector<8x512xf32>
    %436 = arith.addf %435, %47 : vector<8x512xf32>
    %437 = vector.extract_strided_slice %434 {offsets = [0, 0], sizes = [8, 512], strides = [1, 1]} : vector<8x1024xf32> to vector<8x512xf32>
    %438 = arith.addf %436, %437 : vector<8x512xf32>
    %439 = vector.extract_strided_slice %438 {offsets = [0, 0], sizes = [8, 128], strides = [1, 1]} : vector<8x512xf32> to vector<8x128xf32>
    %cst_142 = arith.constant 5.000000e-01 : f32
    %440 = vector.broadcast %cst_142 : f32 to vector<8x128xf32>
    %441 = arith.mulf %440, %439 : vector<8x128xf32>
    %442 = math.tanh %441 : vector<8x128xf32>
    %cst_143 = arith.constant 1.000000e+00 : f32
    %443 = vector.broadcast %cst_143 : f32 to vector<8x128xf32>
    %444 = arith.addf %442, %443 : vector<8x128xf32>
    %cst_144 = arith.constant 5.000000e-01 : f32
    %445 = vector.broadcast %cst_144 : f32 to vector<8x128xf32>
    %446 = arith.mulf %445, %444 : vector<8x128xf32>
    %447 = vector.extract_strided_slice %438 {offsets = [0, 128], sizes = [8, 128], strides = [1, 1]} : vector<8x512xf32> to vector<8x128xf32>
    %cst_145 = arith.constant 5.000000e-01 : f32
    %448 = vector.broadcast %cst_145 : f32 to vector<8x128xf32>
    %449 = arith.mulf %448, %447 : vector<8x128xf32>
    %450 = math.tanh %449 : vector<8x128xf32>
    %cst_146 = arith.constant 1.000000e+00 : f32
    %451 = vector.broadcast %cst_146 : f32 to vector<8x128xf32>
    %452 = arith.addf %450, %451 : vector<8x128xf32>
    %cst_147 = arith.constant 5.000000e-01 : f32
    %453 = vector.broadcast %cst_147 : f32 to vector<8x128xf32>
    %454 = arith.mulf %453, %452 : vector<8x128xf32>
    %455 = vector.extract_strided_slice %438 {offsets = [0, 256], sizes = [8, 128], strides = [1, 1]} : vector<8x512xf32> to vector<8x128xf32>
    %456 = math.tanh %455 : vector<8x128xf32>
    %457 = vector.extract_strided_slice %438 {offsets = [0, 384], sizes = [8, 128], strides = [1, 1]} : vector<8x512xf32> to vector<8x128xf32>
    %cst_148 = arith.constant 5.000000e-01 : f32
    %458 = vector.broadcast %cst_148 : f32 to vector<8x128xf32>
    %459 = arith.mulf %458, %457 : vector<8x128xf32>
    %460 = math.tanh %459 : vector<8x128xf32>
    %cst_149 = arith.constant 1.000000e+00 : f32
    %461 = vector.broadcast %cst_149 : f32 to vector<8x128xf32>
    %462 = arith.addf %460, %461 : vector<8x128xf32>
    %cst_150 = arith.constant 5.000000e-01 : f32
    %463 = vector.broadcast %cst_150 : f32 to vector<8x128xf32>
    %464 = arith.mulf %463, %462 : vector<8x128xf32>
    %465 = arith.mulf %454, %382 : vector<8x128xf32>
    %466 = arith.mulf %446, %456 : vector<8x128xf32>
    %467 = arith.addf %465, %466 : vector<8x128xf32>
    %468 = math.tanh %467 : vector<8x128xf32>
    %469 = arith.mulf %464, %468 : vector<8x128xf32>
    %470 = vector.extract_strided_slice %434 {offsets = [0, 512], sizes = [8, 512], strides = [1, 1]} : vector<8x1024xf32> to vector<8x512xf32>
    %471 = vector.broadcast %36 : vector<1x512xf32> to vector<8x512xf32>
    %472 = arith.addf %470, %471 : vector<8x512xf32>
    %473 = vector.extract_strided_slice %472 {offsets = [0, 0], sizes = [8, 128], strides = [1, 1]} : vector<8x512xf32> to vector<8x128xf32>
    %cst_151 = arith.constant 5.000000e-01 : f32
    %474 = vector.broadcast %cst_151 : f32 to vector<8x128xf32>
    %475 = arith.mulf %474, %473 : vector<8x128xf32>
    %476 = math.tanh %475 : vector<8x128xf32>
    %cst_152 = arith.constant 1.000000e+00 : f32
    %477 = vector.broadcast %cst_152 : f32 to vector<8x128xf32>
    %478 = arith.addf %476, %477 : vector<8x128xf32>
    %cst_153 = arith.constant 5.000000e-01 : f32
    %479 = vector.broadcast %cst_153 : f32 to vector<8x128xf32>
    %480 = arith.mulf %479, %478 : vector<8x128xf32>
    %481 = vector.extract_strided_slice %472 {offsets = [0, 128], sizes = [8, 128], strides = [1, 1]} : vector<8x512xf32> to vector<8x128xf32>
    %cst_154 = arith.constant 5.000000e-01 : f32
    %482 = vector.broadcast %cst_154 : f32 to vector<8x128xf32>
    %483 = arith.mulf %482, %481 : vector<8x128xf32>
    %484 = math.tanh %483 : vector<8x128xf32>
    %cst_155 = arith.constant 1.000000e+00 : f32
    %485 = vector.broadcast %cst_155 : f32 to vector<8x128xf32>
    %486 = arith.addf %484, %485 : vector<8x128xf32>
    %cst_156 = arith.constant 5.000000e-01 : f32
    %487 = vector.broadcast %cst_156 : f32 to vector<8x128xf32>
    %488 = arith.mulf %487, %486 : vector<8x128xf32>
    %489 = vector.extract_strided_slice %472 {offsets = [0, 256], sizes = [8, 128], strides = [1, 1]} : vector<8x512xf32> to vector<8x128xf32>
    %490 = math.tanh %489 : vector<8x128xf32>
    %491 = vector.extract_strided_slice %472 {offsets = [0, 384], sizes = [8, 128], strides = [1, 1]} : vector<8x512xf32> to vector<8x128xf32>
    %cst_157 = arith.constant 5.000000e-01 : f32
    %492 = vector.broadcast %cst_157 : f32 to vector<8x128xf32>
    %493 = arith.mulf %492, %491 : vector<8x128xf32>
    %494 = math.tanh %493 : vector<8x128xf32>
    %cst_158 = arith.constant 1.000000e+00 : f32
    %495 = vector.broadcast %cst_158 : f32 to vector<8x128xf32>
    %496 = arith.addf %494, %495 : vector<8x128xf32>
    %cst_159 = arith.constant 5.000000e-01 : f32
    %497 = vector.broadcast %cst_159 : f32 to vector<8x128xf32>
    %498 = arith.mulf %497, %496 : vector<8x128xf32>
    %499 = arith.mulf %488, %416 : vector<8x128xf32>
    %500 = arith.mulf %480, %490 : vector<8x128xf32>
    %501 = arith.addf %499, %500 : vector<8x128xf32>
    %502 = math.tanh %501 : vector<8x128xf32>
    %503 = arith.mulf %498, %502 : vector<8x128xf32>
    %504 = vector.extract_strided_slice %3 {offsets = [32, 0], sizes = [8, 1], strides = [1, 1]} : vector<64x1xf32> to vector<8x1xf32>
    %505 = vector.broadcast %504 : vector<8x1xf32> to vector<8x128xf32>
    %506 = arith.mulf %503, %505 : vector<8x128xf32>
    %c32_160 = arith.constant 32 : index
    %c0_161 = arith.constant 0 : index
    %507 = vector.load %arg12[%c32_160, %c0_161] : memref<64x128xf32, #tpu.memory_space<vmem>>, vector<8x128xf32>
    tpu.vector_store %arg12[%c32_160, %c0_161], %506 {strides = array<i32>} : memref<64x128xf32, #tpu.memory_space<vmem>>, vector<8x128xf32>,
    %508 = arith.mulf %506, %53 : vector<8x128xf32>
    %cst_162 = arith.constant dense<0.000000e+00> : vector<8xf32>
    %509 = vector.multi_reduction <add>, %508, %cst_162 [1] : vector<8x128xf32> to vector<8xf32>
    %510 = vector.shape_cast %509 : vector<8xf32> to vector<8x1xf32>
    %cst_163 = arith.constant 0.000000e+00 : f32
    %511 = vector.broadcast %cst_163 : f32 to vector<8x1xf32>
    %512 = arith.subf %511, %510 : vector<8x1xf32>
    %513 = math.exp %512 : vector<8x1xf32>
    %514 = vector.broadcast %513 : vector<8x1xf32> to vector<8x128xf32>
    %515 = arith.mulf %514, %506 : vector<8x128xf32>
    %516 = arith.addf %431, %515 : vector<8x128xf32>
    %517 = arith.addf %432, %513 : vector<8x1xf32>
    %518 = tpu.concatenate %469, %503 in 1 : vector<8x128xf32>, vector<8x128xf32> -> vector<8x256xf32>
    %cst_164 = arith.constant dense<0.000000e+00> : vector<8x1024xf32>
    %519 = tpu.matmul %518, %54, %cst_164 {dimension_numbers = #tpu.dot_dimension_numbers<[1], [0], [0], [1], [0, 0, 1, 1], [], []>} : vector<8x256xf32>, vector<256x1024xf32>, vector<8x1024xf32> -> vector<8x1024xf32>
    %520 = vector.extract_strided_slice %42 {offsets = [48, 0], sizes = [8, 512], strides = [1, 1]} : vector<64x512xf32> to vector<8x512xf32>
    %521 = arith.addf %520, %47 : vector<8x512xf32>
    %522 = vector.extract_strided_slice %519 {offsets = [0, 0], sizes = [8, 512], strides = [1, 1]} : vector<8x1024xf32> to vector<8x512xf32>
    %523 = arith.addf %521, %522 : vector<8x512xf32>
    %524 = vector.extract_strided_slice %523 {offsets = [0, 0], sizes = [8, 128], strides = [1, 1]} : vector<8x512xf32> to vector<8x128xf32>
    %cst_165 = arith.constant 5.000000e-01 : f32
    %525 = vector.broadcast %cst_165 : f32 to vector<8x128xf32>
    %526 = arith.mulf %525, %524 : vector<8x128xf32>
    %527 = math.tanh %526 : vector<8x128xf32>
    %cst_166 = arith.constant 1.000000e+00 : f32
    %528 = vector.broadcast %cst_166 : f32 to vector<8x128xf32>
    %529 = arith.addf %527, %528 : vector<8x128xf32>
    %cst_167 = arith.constant 5.000000e-01 : f32
    %530 = vector.broadcast %cst_167 : f32 to vector<8x128xf32>
    %531 = arith.mulf %530, %529 : vector<8x128xf32>
    %532 = vector.extract_strided_slice %523 {offsets = [0, 128], sizes = [8, 128], strides = [1, 1]} : vector<8x512xf32> to vector<8x128xf32>
    %cst_168 = arith.constant 5.000000e-01 : f32
    %533 = vector.broadcast %cst_168 : f32 to vector<8x128xf32>
    %534 = arith.mulf %533, %532 : vector<8x128xf32>
    %535 = math.tanh %534 : vector<8x128xf32>
    %cst_169 = arith.constant 1.000000e+00 : f32
    %536 = vector.broadcast %cst_169 : f32 to vector<8x128xf32>
    %537 = arith.addf %535, %536 : vector<8x128xf32>
    %cst_170 = arith.constant 5.000000e-01 : f32
    %538 = vector.broadcast %cst_170 : f32 to vector<8x128xf32>
    %539 = arith.mulf %538, %537 : vector<8x128xf32>
    %540 = vector.extract_strided_slice %523 {offsets = [0, 256], sizes = [8, 128], strides = [1, 1]} : vector<8x512xf32> to vector<8x128xf32>
    %541 = math.tanh %540 : vector<8x128xf32>
    %542 = vector.extract_strided_slice %523 {offsets = [0, 384], sizes = [8, 128], strides = [1, 1]} : vector<8x512xf32> to vector<8x128xf32>
    %cst_171 = arith.constant 5.000000e-01 : f32
    %543 = vector.broadcast %cst_171 : f32 to vector<8x128xf32>
    %544 = arith.mulf %543, %542 : vector<8x128xf32>
    %545 = math.tanh %544 : vector<8x128xf32>
    %cst_172 = arith.constant 1.000000e+00 : f32
    %546 = vector.broadcast %cst_172 : f32 to vector<8x128xf32>
    %547 = arith.addf %545, %546 : vector<8x128xf32>
    %cst_173 = arith.constant 5.000000e-01 : f32
    %548 = vector.broadcast %cst_173 : f32 to vector<8x128xf32>
    %549 = arith.mulf %548, %547 : vector<8x128xf32>
    %550 = arith.mulf %539, %467 : vector<8x128xf32>
    %551 = arith.mulf %531, %541 : vector<8x128xf32>
    %552 = arith.addf %550, %551 : vector<8x128xf32>
    %553 = math.tanh %552 : vector<8x128xf32>
    %554 = arith.mulf %549, %553 : vector<8x128xf32>
    %555 = vector.extract_strided_slice %519 {offsets = [0, 512], sizes = [8, 512], strides = [1, 1]} : vector<8x1024xf32> to vector<8x512xf32>
    %556 = vector.broadcast %36 : vector<1x512xf32> to vector<8x512xf32>
    %557 = arith.addf %555, %556 : vector<8x512xf32>
    %558 = vector.extract_strided_slice %557 {offsets = [0, 0], sizes = [8, 128], strides = [1, 1]} : vector<8x512xf32> to vector<8x128xf32>
    %cst_174 = arith.constant 5.000000e-01 : f32
    %559 = vector.broadcast %cst_174 : f32 to vector<8x128xf32>
    %560 = arith.mulf %559, %558 : vector<8x128xf32>
    %561 = math.tanh %560 : vector<8x128xf32>
    %cst_175 = arith.constant 1.000000e+00 : f32
    %562 = vector.broadcast %cst_175 : f32 to vector<8x128xf32>
    %563 = arith.addf %561, %562 : vector<8x128xf32>
    %cst_176 = arith.constant 5.000000e-01 : f32
    %564 = vector.broadcast %cst_176 : f32 to vector<8x128xf32>
    %565 = arith.mulf %564, %563 : vector<8x128xf32>
    %566 = vector.extract_strided_slice %557 {offsets = [0, 128], sizes = [8, 128], strides = [1, 1]} : vector<8x512xf32> to vector<8x128xf32>
    %cst_177 = arith.constant 5.000000e-01 : f32
    %567 = vector.broadcast %cst_177 : f32 to vector<8x128xf32>
    %568 = arith.mulf %567, %566 : vector<8x128xf32>
    %569 = math.tanh %568 : vector<8x128xf32>
    %cst_178 = arith.constant 1.000000e+00 : f32
    %570 = vector.broadcast %cst_178 : f32 to vector<8x128xf32>
    %571 = arith.addf %569, %570 : vector<8x128xf32>
    %cst_179 = arith.constant 5.000000e-01 : f32
    %572 = vector.broadcast %cst_179 : f32 to vector<8x128xf32>
    %573 = arith.mulf %572, %571 : vector<8x128xf32>
    %574 = vector.extract_strided_slice %557 {offsets = [0, 256], sizes = [8, 128], strides = [1, 1]} : vector<8x512xf32> to vector<8x128xf32>
    %575 = math.tanh %574 : vector<8x128xf32>
    %576 = vector.extract_strided_slice %557 {offsets = [0, 384], sizes = [8, 128], strides = [1, 1]} : vector<8x512xf32> to vector<8x128xf32>
    %cst_180 = arith.constant 5.000000e-01 : f32
    %577 = vector.broadcast %cst_180 : f32 to vector<8x128xf32>
    %578 = arith.mulf %577, %576 : vector<8x128xf32>
    %579 = math.tanh %578 : vector<8x128xf32>
    %cst_181 = arith.constant 1.000000e+00 : f32
    %580 = vector.broadcast %cst_181 : f32 to vector<8x128xf32>
    %581 = arith.addf %579, %580 : vector<8x128xf32>
    %cst_182 = arith.constant 5.000000e-01 : f32
    %582 = vector.broadcast %cst_182 : f32 to vector<8x128xf32>
    %583 = arith.mulf %582, %581 : vector<8x128xf32>
    %584 = arith.mulf %573, %501 : vector<8x128xf32>
    %585 = arith.mulf %565, %575 : vector<8x128xf32>
    %586 = arith.addf %584, %585 : vector<8x128xf32>
    %587 = math.tanh %586 : vector<8x128xf32>
    %588 = arith.mulf %583, %587 : vector<8x128xf32>
    %589 = vector.extract_strided_slice %3 {offsets = [40, 0], sizes = [8, 1], strides = [1, 1]} : vector<64x1xf32> to vector<8x1xf32>
    %590 = vector.broadcast %589 : vector<8x1xf32> to vector<8x128xf32>
    %591 = arith.mulf %588, %590 : vector<8x128xf32>
    %c40 = arith.constant 40 : index
    %c0_183 = arith.constant 0 : index
    %592 = vector.load %arg12[%c40, %c0_183] : memref<64x128xf32, #tpu.memory_space<vmem>>, vector<8x128xf32>
    tpu.vector_store %arg12[%c40, %c0_183], %591 {strides = array<i32>} : memref<64x128xf32, #tpu.memory_space<vmem>>, vector<8x128xf32>,
    %593 = arith.mulf %591, %53 : vector<8x128xf32>
    %cst_184 = arith.constant dense<0.000000e+00> : vector<8xf32>
    %594 = vector.multi_reduction <add>, %593, %cst_184 [1] : vector<8x128xf32> to vector<8xf32>
    %595 = vector.shape_cast %594 : vector<8xf32> to vector<8x1xf32>
    %cst_185 = arith.constant 0.000000e+00 : f32
    %596 = vector.broadcast %cst_185 : f32 to vector<8x1xf32>
    %597 = arith.subf %596, %595 : vector<8x1xf32>
    %598 = math.exp %597 : vector<8x1xf32>
    %599 = vector.broadcast %598 : vector<8x1xf32> to vector<8x128xf32>
    %600 = arith.mulf %599, %591 : vector<8x128xf32>
    %601 = arith.addf %516, %600 : vector<8x128xf32>
    %602 = arith.addf %517, %598 : vector<8x1xf32>
    %603 = tpu.concatenate %554, %588 in 1 : vector<8x128xf32>, vector<8x128xf32> -> vector<8x256xf32>
    %cst_186 = arith.constant dense<0.000000e+00> : vector<8x1024xf32>
    %604 = tpu.matmul %603, %54, %cst_186 {dimension_numbers = #tpu.dot_dimension_numbers<[1], [0], [0], [1], [0, 0, 1, 1], [], []>} : vector<8x256xf32>, vector<256x1024xf32>, vector<8x1024xf32> -> vector<8x1024xf32>
    %605 = vector.extract_strided_slice %42 {offsets = [56, 0], sizes = [8, 512], strides = [1, 1]} : vector<64x512xf32> to vector<8x512xf32>
    %606 = arith.addf %605, %47 : vector<8x512xf32>
    %607 = vector.extract_strided_slice %604 {offsets = [0, 0], sizes = [8, 512], strides = [1, 1]} : vector<8x1024xf32> to vector<8x512xf32>
    %608 = arith.addf %606, %607 : vector<8x512xf32>
    %609 = vector.extract_strided_slice %608 {offsets = [0, 0], sizes = [8, 128], strides = [1, 1]} : vector<8x512xf32> to vector<8x128xf32>
    %cst_187 = arith.constant 5.000000e-01 : f32
    %610 = vector.broadcast %cst_187 : f32 to vector<8x128xf32>
    %611 = arith.mulf %610, %609 : vector<8x128xf32>
    %612 = math.tanh %611 : vector<8x128xf32>
    %cst_188 = arith.constant 1.000000e+00 : f32
    %613 = vector.broadcast %cst_188 : f32 to vector<8x128xf32>
    %614 = arith.addf %612, %613 : vector<8x128xf32>
    %cst_189 = arith.constant 5.000000e-01 : f32
    %615 = vector.broadcast %cst_189 : f32 to vector<8x128xf32>
    %616 = arith.mulf %615, %614 : vector<8x128xf32>
    %617 = vector.extract_strided_slice %608 {offsets = [0, 128], sizes = [8, 128], strides = [1, 1]} : vector<8x512xf32> to vector<8x128xf32>
    %cst_190 = arith.constant 5.000000e-01 : f32
    %618 = vector.broadcast %cst_190 : f32 to vector<8x128xf32>
    %619 = arith.mulf %618, %617 : vector<8x128xf32>
    %620 = math.tanh %619 : vector<8x128xf32>
    %cst_191 = arith.constant 1.000000e+00 : f32
    %621 = vector.broadcast %cst_191 : f32 to vector<8x128xf32>
    %622 = arith.addf %620, %621 : vector<8x128xf32>
    %cst_192 = arith.constant 5.000000e-01 : f32
    %623 = vector.broadcast %cst_192 : f32 to vector<8x128xf32>
    %624 = arith.mulf %623, %622 : vector<8x128xf32>
    %625 = vector.extract_strided_slice %608 {offsets = [0, 256], sizes = [8, 128], strides = [1, 1]} : vector<8x512xf32> to vector<8x128xf32>
    %626 = math.tanh %625 : vector<8x128xf32>
    %627 = vector.extract_strided_slice %608 {offsets = [0, 384], sizes = [8, 128], strides = [1, 1]} : vector<8x512xf32> to vector<8x128xf32>
    %cst_193 = arith.constant 5.000000e-01 : f32
    %628 = vector.broadcast %cst_193 : f32 to vector<8x128xf32>
    %629 = arith.mulf %628, %627 : vector<8x128xf32>
    %630 = math.tanh %629 : vector<8x128xf32>
    %cst_194 = arith.constant 1.000000e+00 : f32
    %631 = vector.broadcast %cst_194 : f32 to vector<8x128xf32>
    %632 = arith.addf %630, %631 : vector<8x128xf32>
    %cst_195 = arith.constant 5.000000e-01 : f32
    %633 = vector.broadcast %cst_195 : f32 to vector<8x128xf32>
    %634 = arith.mulf %633, %632 : vector<8x128xf32>
    %635 = arith.mulf %624, %552 : vector<8x128xf32>
    %636 = arith.mulf %616, %626 : vector<8x128xf32>
    %637 = arith.addf %635, %636 : vector<8x128xf32>
    %638 = math.tanh %637 : vector<8x128xf32>
    %639 = arith.mulf %634, %638 : vector<8x128xf32>
    %640 = vector.extract_strided_slice %604 {offsets = [0, 512], sizes = [8, 512], strides = [1, 1]} : vector<8x1024xf32> to vector<8x512xf32>
    %641 = vector.broadcast %36 : vector<1x512xf32> to vector<8x512xf32>
    %642 = arith.addf %640, %641 : vector<8x512xf32>
    %643 = vector.extract_strided_slice %642 {offsets = [0, 0], sizes = [8, 128], strides = [1, 1]} : vector<8x512xf32> to vector<8x128xf32>
    %cst_196 = arith.constant 5.000000e-01 : f32
    %644 = vector.broadcast %cst_196 : f32 to vector<8x128xf32>
    %645 = arith.mulf %644, %643 : vector<8x128xf32>
    %646 = math.tanh %645 : vector<8x128xf32>
    %cst_197 = arith.constant 1.000000e+00 : f32
    %647 = vector.broadcast %cst_197 : f32 to vector<8x128xf32>
    %648 = arith.addf %646, %647 : vector<8x128xf32>
    %cst_198 = arith.constant 5.000000e-01 : f32
    %649 = vector.broadcast %cst_198 : f32 to vector<8x128xf32>
    %650 = arith.mulf %649, %648 : vector<8x128xf32>
    %651 = vector.extract_strided_slice %642 {offsets = [0, 128], sizes = [8, 128], strides = [1, 1]} : vector<8x512xf32> to vector<8x128xf32>
    %cst_199 = arith.constant 5.000000e-01 : f32
    %652 = vector.broadcast %cst_199 : f32 to vector<8x128xf32>
    %653 = arith.mulf %652, %651 : vector<8x128xf32>
    %654 = math.tanh %653 : vector<8x128xf32>
    %cst_200 = arith.constant 1.000000e+00 : f32
    %655 = vector.broadcast %cst_200 : f32 to vector<8x128xf32>
    %656 = arith.addf %654, %655 : vector<8x128xf32>
    %cst_201 = arith.constant 5.000000e-01 : f32
    %657 = vector.broadcast %cst_201 : f32 to vector<8x128xf32>
    %658 = arith.mulf %657, %656 : vector<8x128xf32>
    %659 = vector.extract_strided_slice %642 {offsets = [0, 256], sizes = [8, 128], strides = [1, 1]} : vector<8x512xf32> to vector<8x128xf32>
    %660 = math.tanh %659 : vector<8x128xf32>
    %661 = vector.extract_strided_slice %642 {offsets = [0, 384], sizes = [8, 128], strides = [1, 1]} : vector<8x512xf32> to vector<8x128xf32>
    %cst_202 = arith.constant 5.000000e-01 : f32
    %662 = vector.broadcast %cst_202 : f32 to vector<8x128xf32>
    %663 = arith.mulf %662, %661 : vector<8x128xf32>
    %664 = math.tanh %663 : vector<8x128xf32>
    %cst_203 = arith.constant 1.000000e+00 : f32
    %665 = vector.broadcast %cst_203 : f32 to vector<8x128xf32>
    %666 = arith.addf %664, %665 : vector<8x128xf32>
    %cst_204 = arith.constant 5.000000e-01 : f32
    %667 = vector.broadcast %cst_204 : f32 to vector<8x128xf32>
    %668 = arith.mulf %667, %666 : vector<8x128xf32>
    %669 = arith.mulf %658, %586 : vector<8x128xf32>
    %670 = arith.mulf %650, %660 : vector<8x128xf32>
    %671 = arith.addf %669, %670 : vector<8x128xf32>
    %672 = math.tanh %671 : vector<8x128xf32>
    %673 = arith.mulf %668, %672 : vector<8x128xf32>
    %674 = vector.extract_strided_slice %3 {offsets = [48, 0], sizes = [8, 1], strides = [1, 1]} : vector<64x1xf32> to vector<8x1xf32>
    %675 = vector.broadcast %674 : vector<8x1xf32> to vector<8x128xf32>
    %676 = arith.mulf %673, %675 : vector<8x128xf32>
    %c48 = arith.constant 48 : index
    %c0_205 = arith.constant 0 : index
    %677 = vector.load %arg12[%c48, %c0_205] : memref<64x128xf32, #tpu.memory_space<vmem>>, vector<8x128xf32>
    tpu.vector_store %arg12[%c48, %c0_205], %676 {strides = array<i32>} : memref<64x128xf32, #tpu.memory_space<vmem>>, vector<8x128xf32>,
    %678 = arith.mulf %676, %53 : vector<8x128xf32>
    %cst_206 = arith.constant dense<0.000000e+00> : vector<8xf32>
    %679 = vector.multi_reduction <add>, %678, %cst_206 [1] : vector<8x128xf32> to vector<8xf32>
    %680 = vector.shape_cast %679 : vector<8xf32> to vector<8x1xf32>
    %cst_207 = arith.constant 0.000000e+00 : f32
    %681 = vector.broadcast %cst_207 : f32 to vector<8x1xf32>
    %682 = arith.subf %681, %680 : vector<8x1xf32>
    %683 = math.exp %682 : vector<8x1xf32>
    %684 = vector.broadcast %683 : vector<8x1xf32> to vector<8x128xf32>
    %685 = arith.mulf %684, %676 : vector<8x128xf32>
    %686 = arith.addf %601, %685 : vector<8x128xf32>
    %687 = arith.addf %602, %683 : vector<8x1xf32>
    %688 = tpu.concatenate %639, %673 in 1 : vector<8x128xf32>, vector<8x128xf32> -> vector<8x256xf32>
    %cst_208 = arith.constant dense<0.000000e+00> : vector<8x1024xf32>
    %689 = tpu.matmul %688, %54, %cst_208 {dimension_numbers = #tpu.dot_dimension_numbers<[1], [0], [0], [1], [0, 0, 1, 1], [], []>} : vector<8x256xf32>, vector<256x1024xf32>, vector<8x1024xf32> -> vector<8x1024xf32>
    %690 = vector.extract_strided_slice %689 {offsets = [0, 512], sizes = [8, 512], strides = [1, 1]} : vector<8x1024xf32> to vector<8x512xf32>
    %691 = vector.broadcast %36 : vector<1x512xf32> to vector<8x512xf32>
    %692 = arith.addf %690, %691 : vector<8x512xf32>
    %693 = vector.extract_strided_slice %692 {offsets = [0, 0], sizes = [8, 128], strides = [1, 1]} : vector<8x512xf32> to vector<8x128xf32>
    %cst_209 = arith.constant 5.000000e-01 : f32
    %694 = vector.broadcast %cst_209 : f32 to vector<8x128xf32>
    %695 = arith.mulf %694, %693 : vector<8x128xf32>
    %696 = math.tanh %695 : vector<8x128xf32>
    %cst_210 = arith.constant 1.000000e+00 : f32
    %697 = vector.broadcast %cst_210 : f32 to vector<8x128xf32>
    %698 = arith.addf %696, %697 : vector<8x128xf32>
    %cst_211 = arith.constant 5.000000e-01 : f32
    %699 = vector.broadcast %cst_211 : f32 to vector<8x128xf32>
    %700 = arith.mulf %699, %698 : vector<8x128xf32>
    %701 = vector.extract_strided_slice %692 {offsets = [0, 128], sizes = [8, 128], strides = [1, 1]} : vector<8x512xf32> to vector<8x128xf32>
    %cst_212 = arith.constant 5.000000e-01 : f32
    %702 = vector.broadcast %cst_212 : f32 to vector<8x128xf32>
    %703 = arith.mulf %702, %701 : vector<8x128xf32>
    %704 = math.tanh %703 : vector<8x128xf32>
    %cst_213 = arith.constant 1.000000e+00 : f32
    %705 = vector.broadcast %cst_213 : f32 to vector<8x128xf32>
    %706 = arith.addf %704, %705 : vector<8x128xf32>
    %cst_214 = arith.constant 5.000000e-01 : f32
    %707 = vector.broadcast %cst_214 : f32 to vector<8x128xf32>
    %708 = arith.mulf %707, %706 : vector<8x128xf32>
    %709 = vector.extract_strided_slice %692 {offsets = [0, 256], sizes = [8, 128], strides = [1, 1]} : vector<8x512xf32> to vector<8x128xf32>
    %710 = math.tanh %709 : vector<8x128xf32>
    %711 = vector.extract_strided_slice %692 {offsets = [0, 384], sizes = [8, 128], strides = [1, 1]} : vector<8x512xf32> to vector<8x128xf32>
    %cst_215 = arith.constant 5.000000e-01 : f32
    %712 = vector.broadcast %cst_215 : f32 to vector<8x128xf32>
    %713 = arith.mulf %712, %711 : vector<8x128xf32>
    %714 = math.tanh %713 : vector<8x128xf32>
    %cst_216 = arith.constant 1.000000e+00 : f32
    %715 = vector.broadcast %cst_216 : f32 to vector<8x128xf32>
    %716 = arith.addf %714, %715 : vector<8x128xf32>
    %cst_217 = arith.constant 5.000000e-01 : f32
    %717 = vector.broadcast %cst_217 : f32 to vector<8x128xf32>
    %718 = arith.mulf %717, %716 : vector<8x128xf32>
    %719 = arith.mulf %708, %671 : vector<8x128xf32>
    %720 = arith.mulf %700, %710 : vector<8x128xf32>
    %721 = arith.addf %719, %720 : vector<8x128xf32>
    %722 = math.tanh %721 : vector<8x128xf32>
    %723 = arith.mulf %718, %722 : vector<8x128xf32>
    %724 = vector.extract_strided_slice %3 {offsets = [56, 0], sizes = [8, 1], strides = [1, 1]} : vector<64x1xf32> to vector<8x1xf32>
    %725 = vector.broadcast %724 : vector<8x1xf32> to vector<8x128xf32>
    %726 = arith.mulf %723, %725 : vector<8x128xf32>
    %c56 = arith.constant 56 : index
    %c0_218 = arith.constant 0 : index
    %727 = vector.load %arg12[%c56, %c0_218] : memref<64x128xf32, #tpu.memory_space<vmem>>, vector<8x128xf32>
    tpu.vector_store %arg12[%c56, %c0_218], %726 {strides = array<i32>} : memref<64x128xf32, #tpu.memory_space<vmem>>, vector<8x128xf32>,
    %728 = arith.mulf %726, %53 : vector<8x128xf32>
    %cst_219 = arith.constant dense<0.000000e+00> : vector<8xf32>
    %729 = vector.multi_reduction <add>, %728, %cst_219 [1] : vector<8x128xf32> to vector<8xf32>
    %730 = vector.shape_cast %729 : vector<8xf32> to vector<8x1xf32>
    %cst_220 = arith.constant 0.000000e+00 : f32
    %731 = vector.broadcast %cst_220 : f32 to vector<8x1xf32>
    %732 = arith.subf %731, %730 : vector<8x1xf32>
    %733 = math.exp %732 : vector<8x1xf32>
    %734 = vector.broadcast %733 : vector<8x1xf32> to vector<8x128xf32>
    %735 = arith.mulf %734, %726 : vector<8x128xf32>
    %736 = arith.addf %686, %735 : vector<8x128xf32>
    %737 = arith.addf %687, %733 : vector<8x1xf32>
    %738 = tpu.reciprocal %737 {approx = true} : vector<8x1xf32> -> vector<8x1xf32>
    %739 = vector.broadcast %738 : vector<8x1xf32> to vector<8x128xf32>
    %740 = arith.mulf %736, %739 : vector<8x128xf32>
    %c0_221 = arith.constant 0 : index
    %c0_222 = arith.constant 0 : index
    %741 = vector.load %arg13[%c0_221, %c0_222] : memref<8x128xf32, #tpu.memory_space<vmem>>, vector<8x128xf32>
    tpu.vector_store %arg13[%c0_221, %c0_222], %740 {strides = array<i32>} : memref<8x128xf32, #tpu.memory_space<vmem>>, vector<8x128xf32>,
    return
  }
}

</mosaic_0001>

<llo_original>
// kernel: spatio_temporal_forward.1
$region0: #{spatio_temporal_forward.1}
  #allocation0 [shape = 'u32[]', space=smem, size = 0x4, offset = 0x4, fixed_abs, tag = 'smem constant byte address 0x4 - core index']
  #allocation1 [shape = 'u32[72,128]{1,0:T(1,128)}', space=vmem, size = 0x9000, scoped, tag = 'internal scratch']
  %s0 = inlined_call_operand.vmem [shape: f32[64,4], index: 0, kind: input, shape index: {}]
  %s1 = inlined_call_operand.vmem [shape: f32[8,8], index: 1, kind: input, shape index: {}]
  %s2 = inlined_call_operand.vmem [shape: f32[2,16], index: 2, kind: input, shape index: {}]
  %s3 = inlined_call_operand.vmem [shape: f32[1,16], index: 3, kind: input, shape index: {}]
  %s4 = inlined_call_operand.vmem [shape: f32[48,32], index: 4, kind: input, shape index: {}]
  %s5 = inlined_call_operand.vmem [shape: f32[1,32], index: 5, kind: input, shape index: {}]
  %s6 = inlined_call_operand.vmem [shape: f32[32,512], index: 6, kind: input, shape index: {}]
  %s7 = inlined_call_operand.vmem [shape: f32[8,512], index: 7, kind: input, shape index: {}]
  %s8 = inlined_call_operand.vmem [shape: f32[3,512], index: 8, kind: input, shape index: {}]
  %s9 = inlined_call_operand.vmem [shape: f32[256,1024], index: 9, kind: input, shape index: {}]
  %s10 = inlined_call_operand.vmem [shape: f32[8,128], index: 10, kind: input, shape index: {}]
  %s11 = inlined_call_operand.vmem [shape: f32[1,128], index: 11, kind: input, shape index: {}]
  %s12 = inlined_call_operand.vmem [shape: f32[64,128], index: 12, kind: output, shape index: {0}]
  %s13 = inlined_call_operand.vmem [shape: f32[8,128], index: 13, kind: output, shape index: {1}]
  %14 = xla_tuple %s12, %s13
  %s15 = sld [smem:[#allocation0]]
  $region66: #{spatio_temporal_forward.1} parent=0
    _
  %s17 = ssub.s32 1, %s15
  %s18 = scalar_select 0, %s17, %s15
  // Predicated region
  $region2: #{spatio_temporal_forward.1} parent=0 // pred_check
    _
  $region3: #{spatio_temporal_forward.1} parent=0 // pred_check_branch
    %20 = sbr.rel (0) target = $region5
  $region4: #{spatio_temporal_forward.1} parent=0 // pred_region
    _
  $region5: #{spatio_temporal_forward.1} parent=0 // pred_fallthru
    _
  // Predicated region
  $region6: #{spatio_temporal_forward.1} parent=0 // pred_check
    _
  $region7: #{spatio_temporal_forward.1} parent=0 // pred_check_branch
    %22 = sbr.rel (0) target = $region9
  $region8: #{spatio_temporal_forward.1} parent=0 // pred_region
    _
  $region9: #{spatio_temporal_forward.1} parent=0 // pred_fallthru
    _
  // Predicated region
  $region10: #{spatio_temporal_forward.1} parent=0 // pred_check
    _
  $region11: #{spatio_temporal_forward.1} parent=0 // pred_check_branch
    %24 = sbr.rel (0) target = $region13
  $region12: #{spatio_temporal_forward.1} parent=0 // pred_region
    _
  $region13: #{spatio_temporal_forward.1} parent=0 // pred_fallthru
    _
  // Predicated region
  $region14: #{spatio_temporal_forward.1} parent=0 // pred_check
    _
  $region15: #{spatio_temporal_forward.1} parent=0 // pred_check_branch
    %26 = sbr.rel (0) target = $region17
  $region16: #{spatio_temporal_forward.1} parent=0 // pred_region
    _
  $region17: #{spatio_temporal_forward.1} parent=0 // pred_fallthru
    _
  // Predicated region
  $region18: #{spatio_temporal_forward.1} parent=0 // pred_check
    _
  $region19: #{spatio_temporal_forward.1} parent=0 // pred_check_branch
    %28 = sbr.rel (0) target = $region21
  $region20: #{spatio_temporal_forward.1} parent=0 // pred_region
    _
  $region21: #{spatio_temporal_forward.1} parent=0 // pred_fallthru
    _
  // Predicated region
  $region22: #{spatio_temporal_forward.1} parent=0 // pred_check
    _
  $region23: #{spatio_temporal_forward.1} parent=0 // pred_check_branch
    %30 = sbr.rel (0) target = $region25
  $region24: #{spatio_temporal_forward.1} parent=0 // pred_region
    _
  $region25: #{spatio_temporal_forward.1} parent=0 // pred_fallthru
    _
  // Predicated region
  $region26: #{spatio_temporal_forward.1} parent=0 // pred_check
    _
  $region27: #{spatio_temporal_forward.1} parent=0 // pred_check_branch
    %32 = sbr.rel (0) target = $region29
  $region28: #{spatio_temporal_forward.1} parent=0 // pred_region
    _
  $region29: #{spatio_temporal_forward.1} parent=0 // pred_fallthru
    _
  // Predicated region
  $region30: #{spatio_temporal_forward.1} parent=0 // pred_check
    _
  $region31: #{spatio_temporal_forward.1} parent=0 // pred_check_branch
    %34 = sbr.rel (0) target = $region33
  $region32: #{spatio_temporal_forward.1} parent=0 // pred_region
    _
  $region33: #{spatio_temporal_forward.1} parent=0 // pred_fallthru
    _
  // Predicated region
  $region34: #{spatio_temporal_forward.1} parent=0 // pred_check
    _
  $region35: #{spatio_temporal_forward.1} parent=0 // pred_check_branch
    %36 = sbr.rel (0) target = $region37
  $region36: #{spatio_temporal_forward.1} parent=0 // pred_region
    _
  $region37: #{spatio_temporal_forward.1} parent=0 // pred_fallthru
    _
  // Predicated region
  $region38: #{spatio_temporal_forward.1} parent=0 // pred_check
    _
  $region39: #{spatio_temporal_forward.1} parent=0 // pred_check_branch
    %38 = sbr.rel (0) target = $region41
  $region40: #{spatio_temporal_forward.1} parent=0 // pred_region
    _
  $region41: #{spatio_temporal_forward.1} parent=0 // pred_fallthru
    _
  // Predicated region
  $region42: #{spatio_temporal_forward.1} parent=0 // pred_check
    _
  $region43: #{spatio_temporal_forward.1} parent=0 // pred_check_branch
    %40 = sbr.rel (0) target = $region45
  $region44: #{spatio_temporal_forward.1} parent=0 // pred_region
    _
  $region45: #{spatio_temporal_forward.1} parent=0 // pred_fallthru
    _
  // Predicated region
  $region46: #{spatio_temporal_forward.1} parent=0 // pred_check
    _
  $region47: #{spatio_temporal_forward.1} parent=0 // pred_check_branch
    %42 = sbr.rel (0) target = $region49
  $region48: #{spatio_temporal_forward.1} parent=0 // pred_region
    _
  $region49: #{spatio_temporal_forward.1} parent=0 // pred_fallthru
    _
  %v43 = vld [vmem:[%s0] sm:$0xff]
  %v44 = vld [vmem:[%s0 + $0x8] sm:$0xff]
  %v45 = vld [vmem:[%s0 + $0x10] sm:$0xff]
  %v46 = vld [vmem:[%s0 + $0x18] sm:$0xff]
  %v47 = vld [vmem:[%s0 + $0x20] sm:$0xff]
  %v48 = vld [vmem:[%s0 + $0x28] sm:$0xff]
  %v49 = vld [vmem:[%s0 + $0x30] sm:$0xff]
  %v50 = vld [vmem:[%s0 + $0x38] sm:$0xff]
  %v51 = vld [vmem:[%s2] sm:$0x3]
  %v52 = vld [vmem:[%s3] sm:$0x1]
  %v54 = vperm.slane %v52, 0
  %vm56 = vcmask 15360
  %v58 = vsel %vm56, %v43, 0
  %v61 = vsel %vm56, %v44, 0
  %v64 = vsel %vm56, %v45, 0
  %v67 = vsel %vm56, %v46, 0
  %v70 = vsel %vm56, %v47, 0
  %v73 = vsel %vm56, %v48, 0
  %v76 = vsel %vm56, %v49, 0
  %v79 = vsel %vm56, %v50, 0
  %vm81 = vcmask 1041408
  %v83 = vsel %vm81, %v51, 0
  %85 = vmatpush.msra.mxu0 0.0
  %86 = vmatpush.msra.mxu0 0.0
  %87 = vmatpush.msra.mxu0 0.0
  %88 = vmatpush.msra.mxu0 0.0
  %89 = vmatpush.msra.mxu0 0.0
  %90 = vmatpush.msra.mxu0 0.0
  %91 = vmatpush.msra.mxu0 0.0
  %92 = vmatpush.msra.mxu0 0.0
  %93 = vmatpush.msra.mxu0 0.0
  %94 = vmatpush.msra.mxu0 0.0
  %95 = vmatpush.msra.mxu0 0.0
  %96 = vmatpush.msra.mxu0 0.0
  %97 = vmatpush.msra.mxu0 0.0
  %98 = vmatpush.msra.mxu0 0.0
  %99 = vmatpush.msra.mxu0 0.0
  %100 = vmatpush.msra.mxu0 %v83
  %101 = vmatmul.f32.gmra.mxu0 %v58
  %v102 = vpop.f32.mrf.mxu0
  %v103 = vadd.f32 %v54, %v102
  %104 = vmatmul.f32.gmra.mxu0 %v61
  %v105 = vpop.f32.mrf.mxu0
  %v106 = vadd.f32 %v54, %v105
  %107 = vmatmul.f32.gmra.mxu0 %v64
  %v108 = vpop.f32.mrf.mxu0
  %v109 = vadd.f32 %v54, %v108
  %110 = vmatmul.f32.gmra.mxu0 %v67
  %v111 = vpop.f32.mrf.mxu0
  %v112 = vadd.f32 %v54, %v111
  %113 = vmatmul.f32.gmra.mxu0 %v70
  %v114 = vpop.f32.mrf.mxu0
  %v115 = vadd.f32 %v54, %v114
  %116 = vmatmul.f32.gmra.mxu0 %v73
  %v117 = vpop.f32.mrf.mxu0
  %v118 = vadd.f32 %v54, %v117
  %119 = vmatmul.f32.gmra.mxu0 %v76
  %v120 = vpop.f32.mrf.mxu0
  %v121 = vadd.f32 %v54, %v120
  %122 = vmatmul.f32.gmra.mxu0 %v79
  %v123 = vpop.f32.mrf.mxu0
  %v124 = vadd.f32 %v54, %v123
  %125 = vdwg.mxu0
  %v126 = vtanh.pop %v103
  %v127 = vtanh.pop %v106
  %v128 = vtanh.pop %v109
  %v129 = vtanh.pop %v112
  %v130 = vtanh.pop %v115
  %v131 = vtanh.pop %v118
  %v132 = vtanh.pop %v121
  %v133 = vtanh.pop %v124
  %v134 = vld [vmem:[%s4] sm:$0xff]
  %v135 = vld [vmem:[%s4 + $0x8] sm:$0xff]
  %vm136 = vcmask 130048
  %v138 = vsel %vm136, %v126, 0
  %v141 = vsel %vm136, %v127, 0
  %v144 = vsel %vm136, %v128, 0
  %v147 = vsel %vm136, %v129, 0
  %v150 = vsel %vm136, %v130, 0
  %v153 = vsel %vm136, %v131, 0
  %v156 = vsel %vm136, %v132, 0
  %v159 = vsel %vm136, %v133, 0
  %161 = vmatpush.msra.mxu0 0.0
  %162 = vmatpush.msra.mxu0 0.0
  %163 = vmatpush.msra.mxu0 0.0
  %164 = vmatpush.msra.mxu0 0.0
  %165 = vmatpush.msra.mxu0 0.0
  %166 = vmatpush.msra.mxu0 0.0
  %167 = vmatpush.msra.mxu0 0.0
  %168 = vmatpush.msra.mxu0 0.0
  %169 = vmatpush.msra.mxu0 0.0
  %170 = vmatpush.msra.mxu0 0.0
  %171 = vmatpush.msra.mxu0 0.0
  %172 = vmatpush.msra.mxu0 0.0
  %173 = vmatpush.msra.mxu0 0.0
  %174 = vmatpush.msra.mxu0 0.0
  %175 = vmatpush.msra.mxu0 %v135
  %176 = vmatpush.msra.mxu0 %v134
  %177 = vmatmul.f32.gmra.mxu0 %v138
  %v178 = vpop.f32.mrf.mxu0
  %v179 = vadd.f32 0.0, %v178
  %180 = vmatmul.f32.gmra.mxu0 %v141
  %v181 = vpop.f32.mrf.mxu0
  %v182 = vadd.f32 0.0, %v181
  %183 = vmatmul.f32.gmra.mxu0 %v144
  %v184 = vpop.f32.mrf.mxu0
  %v185 = vadd.f32 0.0, %v184
  %186 = vmatmul.f32.gmra.mxu0 %v147
  %v187 = vpop.f32.mrf.mxu0
  %v188 = vadd.f32 0.0, %v187
  %189 = vmatmul.f32.gmra.mxu0 %v150
  %v190 = vpop.f32.mrf.mxu0
  %v191 = vadd.f32 0.0, %v190
  %192 = vmatmul.f32.gmra.mxu0 %v153
  %v193 = vpop.f32.mrf.mxu0
  %v194 = vadd.f32 0.0, %v193
  %195 = vmatmul.f32.gmra.mxu0 %v156
  %v196 = vpop.f32.mrf.mxu0
  %v197 = vadd.f32 0.0, %v196
  %198 = vmatmul.f32.gmra.mxu0 %v159
  %v199 = vpop.f32.mrf.mxu0
  %200 = vdwg.mxu0
  %v201 = vld [vmem:[%s4 + $0x10] sm:$0xff]
  %v202 = vld [vmem:[%s4 + $0x18] sm:$0xff]
  %203 = vmatpush.msra.mxu0 0.0
  %204 = vmatpush.msra.mxu0 0.0
  %205 = vmatpush.msra.mxu0 0.0
  %206 = vmatpush.msra.mxu0 0.0
  %207 = vmatpush.msra.mxu0 0.0
  %208 = vmatpush.msra.mxu0 0.0
  %209 = vmatpush.msra.mxu0 0.0
  %210 = vmatpush.msra.mxu0 0.0
  %211 = vmatpush.msra.mxu0 0.0
  %212 = vmatpush.msra.mxu0 0.0
  %213 = vmatpush.msra.mxu0 0.0
  %214 = vmatpush.msra.mxu0 0.0
  %215 = vmatpush.msra.mxu0 0.0
  %216 = vmatpush.msra.mxu0 0.0
  %217 = vmatpush.msra.mxu0 %v202
  %218 = vmatpush.msra.mxu0 %v201
  %219 = vmatmul.f32.gmra.mxu0 %v138
  %v220 = vpop.f32.mrf.mxu0
  %v221 = vadd.f32 0.0, %v220
  %222 = vmatmul.f32.gmra.mxu0 %v141
  %v223 = vpop.f32.mrf.mxu0
  %v224 = vadd.f32 0.0, %v223
  %225 = vmatmul.f32.gmra.mxu0 %v144
  %v226 = vpop.f32.mrf.mxu0
  %v227 = vadd.f32 0.0, %v226
  %228 = vmatmul.f32.gmra.mxu0 %v147
  %v229 = vpop.f32.mrf.mxu0
  %v230 = vadd.f32 0.0, %v229
  %231 = vmatmul.f32.gmra.mxu0 %v150
  %v232 = vpop.f32.mrf.mxu0
  %v233 = vadd.f32 0.0, %v232
  %234 = vmatmul.f32.gmra.mxu0 %v153
  %v235 = vpop.f32.mrf.mxu0
  %v236 = vadd.f32 0.0, %v235
  %237 = vmatmul.f32.gmra.mxu0 %v156
  %v238 = vpop.f32.mrf.mxu0
  %v239 = vadd.f32 0.0, %v238
  %240 = vmatmul.f32.gmra.mxu0 %v159
  %v241 = vpop.f32.mrf.mxu0
  %v242 = vadd.f32 0.0, %v241
  %243 = vdwg.mxu0
  %v244 = vld [vmem:[%s4 + $0x20] sm:$0xff]
  %v245 = vld [vmem:[%s4 + $0x28] sm:$0xff]
  %246 = vmatpush.msra.mxu0 0.0
  %247 = vmatpush.msra.mxu0 0.0
  %248 = vmatpush.msra.mxu0 0.0
  %249 = vmatpush.msra.mxu0 0.0
  %250 = vmatpush.msra.mxu0 0.0
  %251 = vmatpush.msra.mxu0 0.0
  %252 = vmatpush.msra.mxu0 0.0
  %253 = vmatpush.msra.mxu0 0.0
  %254 = vmatpush.msra.mxu0 0.0
  %255 = vmatpush.msra.mxu0 0.0
  %256 = vmatpush.msra.mxu0 0.0
  %257 = vmatpush.msra.mxu0 0.0
  %258 = vmatpush.msra.mxu0 0.0
  %259 = vmatpush.msra.mxu0 0.0
  %260 = vmatpush.msra.mxu0 %v245
  %261 = vmatpush.msra.mxu0 %v244
  %262 = vmatmul.f32.gmra.mxu0 %v138
  %v263 = vpop.f32.mrf.mxu0
  %264 = vmatmul.f32.gmra.mxu0 %v141
  %v265 = vpop.f32.mrf.mxu0
  %v266 = vadd.f32 0.0, %v265
  %267 = vmatmul.f32.gmra.mxu0 %v144
  %v268 = vpop.f32.mrf.mxu0
  %v269 = vadd.f32 0.0, %v268
  %270 = vmatmul.f32.gmra.mxu0 %v147
  %v271 = vpop.f32.mrf.mxu0
  %v272 = vadd.f32 0.0, %v271
  %273 = vmatmul.f32.gmra.mxu0 %v150
  %v274 = vpop.f32.mrf.mxu0
  %v275 = vadd.f32 0.0, %v274
  %276 = vmatmul.f32.gmra.mxu0 %v153
  %v277 = vpop.f32.mrf.mxu0
  %v278 = vadd.f32 0.0, %v277
  %279 = vmatmul.f32.gmra.mxu0 %v156
  %v280 = vpop.f32.mrf.mxu0
  %v281 = vadd.f32 0.0, %v280
  %282 = vmatmul.f32.gmra.mxu0 %v159
  %v283 = vpop.f32.mrf.mxu0
  %v284 = vadd.f32 0.0, %v283
  %285 = vdwg.mxu0
  %v286 = vadd.f32 %v221, 0.0
  %v287 = vadd.f32 %v179, %v224
  %v288 = vadd.f32 %v182, %v227
  %v289 = vadd.f32 %v185, %v230
  %v290 = vadd.f32 %v188, %v233
  %v291 = vadd.f32 %v191, %v236
  %v292 = vadd.f32 %v194, %v239
  %v293 = vadd.f32 %v197, %v242
  %v294 = vadd.f32 %v286, %v266
  %v295 = vadd.f32 %v287, %v269
  %v296 = vadd.f32 %v288, %v272
  %v297 = vadd.f32 %v289, %v275
  %v298 = vadd.f32 %v290, %v278
  %v299 = vadd.f32 %v291, %v281
  %v300 = vadd.f32 %v292, %v284
  %v301 = vadd.f32 %v293, 0.0
  %v302 = vld [vmem:[%s5] sm:$0x1]
  %v304 = vperm.slane %v302, 0
  %v306 = vadd.f32 %v294, %v304
  %v307 = vadd.f32 %v295, %v304
  %v308 = vadd.f32 %v296, %v304
  %v309 = vadd.f32 %v297, %v304
  %v310 = vadd.f32 %v298, %v304
  %v311 = vadd.f32 %v299, %v304
  %v312 = vadd.f32 %v300, %v304
  %v313 = vadd.f32 %v301, %v304
  %vm314 = vcmp.gt.f32.partialorder %v306, 0.0
  %vm315 = vcmp.gt.f32.partialorder %v307, 0.0
  %vm316 = vcmp.gt.f32.partialorder %v308, 0.0
  %vm317 = vcmp.gt.f32.partialorder %v309, 0.0
  %vm318 = vcmp.gt.f32.partialorder %v310, 0.0
  %vm319 = vcmp.gt.f32.partialorder %v311, 0.0
  %vm320 = vcmp.gt.f32.partialorder %v312, 0.0
  %vm321 = vcmp.gt.f32.partialorder %v313, 0.0
  %v322 = vmin.f32 %v306, 0.0
  %v323 = vmin.f32 %v307, 0.0
  %v324 = vmin.f32 %v308, 0.0
  %v325 = vmin.f32 %v309, 0.0
  %v326 = vmin.f32 %v310, 0.0
  %v327 = vmin.f32 %v311, 0.0
  %v328 = vmin.f32 %v312, 0.0
  %v329 = vmin.f32 %v313, 0.0
  %v330 = vmul.f32 %v322, 1.442695
  %v331 = vpow.pop %v330
  %v332 = vmul.f32 %v323, 1.442695
  %v333 = vpow.pop %v332
  %v334 = vmul.f32 %v324, 1.442695
  %v335 = vpow.pop %v334
  %v336 = vmul.f32 %v325, 1.442695
  %v337 = vpow.pop %v336
  %v338 = vmul.f32 %v326, 1.442695
  %v339 = vpow.pop %v338
  %v340 = vmul.f32 %v327, 1.442695
  %v341 = vpow.pop %v340
  %v342 = vmul.f32 %v328, 1.442695
  %v343 = vpow.pop %v342
  %v344 = vmul.f32 %v329, 1.442695
  %v345 = vpow.pop %v344
  %v346 = vsub.f32 %v331, 1.0
  %v347 = vsub.f32 %v333, 1.0
  %v348 = vsub.f32 %v335, 1.0
  %v349 = vsub.f32 %v337, 1.0
  %v350 = vsub.f32 %v339, 1.0
  %v351 = vsub.f32 %v341, 1.0
  %v352 = vsub.f32 %v343, 1.0
  %v353 = vsub.f32 %v345, 1.0
  %v354 = vsel %vm314, %v306, %v346
  %v355 = vsel %vm315, %v307, %v347
  %v356 = vsel %vm316, %v308, %v348
  %v357 = vsel %vm317, %v309, %v349
  %v358 = vsel %vm318, %v310, %v350
  %v359 = vsel %vm319, %v311, %v351
  %v360 = vsel %vm320, %v312, %v352
  %v361 = vsel %vm321, %v313, %v353
  %v362 = vld [vmem:[%s8] ss:$4 sm:$0xf]
  %s363 = scalar_lea.vmem %s8, 1
  %v364 = vld [vmem:[%s363] ss:$4 sm:$0xf]
  %s365 = scalar_lea.vmem %s8, 2
  %v366 = vld [vmem:[%s365] ss:$4 sm:$0xf]
  %v367 = vld [vmem:[%s6] sm:$0xff]
  %v368 = vld [vmem:[%s6 + $0x8] sm:$0xff]
  %v369 = vld [vmem:[%s6 + $0x10] sm:$0xff]
  %v370 = vld [vmem:[%s6 + $0x18] sm:$0xff]
  %v371 = vld [vmem:[%s6 + $0x20] sm:$0xff]
  %v372 = vld [vmem:[%s6 + $0x28] sm:$0xff]
  %v373 = vld [vmem:[%s6 + $0x30] sm:$0xff]
  %v374 = vld [vmem:[%s6 + $0x38] sm:$0xff]
  %v375 = vld [vmem:[%s6 + $0x40] sm:$0xff]
  %v376 = vld [vmem:[%s6 + $0x48] sm:$0xff]
  %v377 = vld [vmem:[%s6 + $0x50] sm:$0xff]
  %v378 = vld [vmem:[%s6 + $0x58] sm:$0xff]
  %v379 = vld [vmem:[%s6 + $0x60] sm:$0xff]
  %v380 = vld [vmem:[%s6 + $0x68] sm:$0xff]
  %v381 = vld [vmem:[%s6 + $0x70] sm:$0xff]
  %v382 = vld [vmem:[%s6 + $0x78] sm:$0xff]
  %383 = vset.pattern.permute.xlu0 2
  %384 = vperm.xlu0 %383, %v43
  %v385 = vpop.permute.xlu0 %384
  %387 = vset.pattern.permute.xlu0 2
  %388 = vperm.xlu0 %387, %v44
  %v389 = vpop.permute.xlu0 %388
  %391 = vset.pattern.permute.xlu0 2
  %392 = vperm.xlu0 %391, %v45
  %v393 = vpop.permute.xlu0 %392
  %395 = vset.pattern.permute.xlu0 2
  %396 = vperm.xlu0 %395, %v46
  %v397 = vpop.permute.xlu0 %396
  %399 = vset.pattern.permute.xlu0 2
  %400 = vperm.xlu0 %399, %v47
  %v401 = vpop.permute.xlu0 %400
  %403 = vset.pattern.permute.xlu0 2
  %404 = vperm.xlu0 %403, %v48
  %v405 = vpop.permute.xlu0 %404
  %407 = vset.pattern.permute.xlu0 2
  %408 = vperm.xlu0 %407, %v49
  %v409 = vpop.permute.xlu0 %408
  %411 = vset.pattern.permute.xlu0 2
  %412 = vperm.xlu0 %411, %v50
  %v413 = vpop.permute.xlu0 %412
  %v416 = vperm.slane %v362, 0
  %v417 = vperm.slane %v362, 1
  %v418 = vperm.slane %v362, 2
  %v419 = vperm.slane %v362, 3
  %v424 = vmul.f32 %v385, %v416
  %v425 = vmul.f32 %v385, %v417
  %v426 = vmul.f32 %v385, %v418
  %v427 = vmul.f32 %v385, %v419
  %v428 = vmul.f32 %v389, %v416
  %v429 = vmul.f32 %v389, %v417
  %v430 = vmul.f32 %v389, %v418
  %v431 = vmul.f32 %v389, %v419
  %v432 = vmul.f32 %v393, %v416
  %v433 = vmul.f32 %v393, %v417
  %v434 = vmul.f32 %v393, %v418
  %v435 = vmul.f32 %v393, %v419
  %v436 = vmul.f32 %v397, %v416
  %v437 = vmul.f32 %v397, %v417
  %v438 = vmul.f32 %v397, %v418
  %v439 = vmul.f32 %v397, %v419
  %v440 = vmul.f32 %v401, %v416
  %v441 = vmul.f32 %v401, %v417
  %v442 = vmul.f32 %v401, %v418
  %v443 = vmul.f32 %v401, %v419
  %v444 = vmul.f32 %v405, %v416
  %v445 = vmul.f32 %v405, %v417
  %v446 = vmul.f32 %v405, %v418
  %v447 = vmul.f32 %v405, %v419
  %v448 = vmul.f32 %v409, %v416
  %v449 = vmul.f32 %v409, %v417
  %v450 = vmul.f32 %v409, %v418
  %v451 = vmul.f32 %v409, %v419
  %v452 = vmul.f32 %v413, %v416
  %v453 = vmul.f32 %v413, %v417
  %v454 = vmul.f32 %v413, %v418
  %v455 = vmul.f32 %v413, %v419
  %vm456 = vcmask 261120
  %v458 = vsel %vm456, %v354, 0
  %v461 = vsel %vm456, %v355, 0
  %v464 = vsel %vm456, %v356, 0
  %v467 = vsel %vm456, %v357, 0
  %v470 = vsel %vm456, %v358, 0
  %v473 = vsel %vm456, %v359, 0
  %v476 = vsel %vm456, %v360, 0
  %v479 = vsel %vm456, %v361, 0
  %481 = vmatpush.msra.mxu0 0.0
  %482 = vmatpush.msra.mxu0 0.0
  %483 = vmatpush.msra.mxu0 0.0
  %484 = vmatpush.msra.mxu0 0.0
  %485 = vmatpush.msra.mxu0 0.0
  %486 = vmatpush.msra.mxu0 0.0
  %487 = vmatpush.msra.mxu0 0.0
  %488 = vmatpush.msra.mxu0 0.0
  %489 = vmatpush.msra.mxu0 0.0
  %490 = vmatpush.msra.mxu0 0.0
  %491 = vmatpush.msra.mxu0 0.0
  %492 = vmatpush.msra.mxu0 0.0
  %493 = vmatpush.msra.mxu0 %v379
  %494 = vmatpush.msra.mxu0 %v375
  %495 = vmatpush.msra.mxu0 %v371
  %496 = vmatpush.msra.mxu0 %v367
  %497 = vmatmul.f32.gmra.mxu0 %v458
  %v498 = vpop.f32.mrf.mxu0
  %v499 = vadd.f32 %v424, %v498
  %500 = vmatmul.f32.gmra.mxu0 %v461
  %v501 = vpop.f32.mrf.mxu0
  %v502 = vadd.f32 %v428, %v501
  %503 = vmatmul.f32.gmra.mxu0 %v464
  %v504 = vpop.f32.mrf.mxu0
  %v505 = vadd.f32 %v432, %v504
  %506 = vmatmul.f32.gmra.mxu0 %v467
  %v507 = vpop.f32.mrf.mxu0
  %v508 = vadd.f32 %v436, %v507
  %509 = vmatmul.f32.gmra.mxu0 %v470
  %v510 = vpop.f32.mrf.mxu0
  %v511 = vadd.f32 %v440, %v510
  %512 = vmatmul.f32.gmra.mxu0 %v473
  %v513 = vpop.f32.mrf.mxu0
  %v514 = vadd.f32 %v444, %v513
  %515 = vmatmul.f32.gmra.mxu0 %v476
  %v516 = vpop.f32.mrf.mxu0
  %v517 = vadd.f32 %v448, %v516
  %518 = vmatmul.f32.gmra.mxu0 %v479
  %v519 = vpop.f32.mrf.mxu0
  %v520 = vadd.f32 %v452, %v519
  %521 = vdwg.mxu0
  %522 = vmatpush.msra.mxu0 0.0
  %523 = vmatpush.msra.mxu0 0.0
  %524 = vmatpush.msra.mxu0 0.0
  %525 = vmatpush.msra.mxu0 0.0
  %526 = vmatpush.msra.mxu0 0.0
  %527 = vmatpush.msra.mxu0 0.0
  %528 = vmatpush.msra.mxu0 0.0
  %529 = vmatpush.msra.mxu0 0.0
  %530 = vmatpush.msra.mxu0 0.0
  %531 = vmatpush.msra.mxu0 0.0
  %532 = vmatpush.msra.mxu0 0.0
  %533 = vmatpush.msra.mxu0 0.0
  %534 = vmatpush.msra.mxu0 %v380
  %535 = vmatpush.msra.mxu0 %v376
  %536 = vmatpush.msra.mxu0 %v372
  %537 = vmatpush.msra.mxu0 %v368
  %538 = vmatmul.f32.gmra.mxu0 %v458
  %v539 = vpop.f32.mrf.mxu0
  %v540 = vadd.f32 %v425, %v539
  %541 = vmatmul.f32.gmra.mxu0 %v461
  %v542 = vpop.f32.mrf.mxu0
  %v543 = vadd.f32 %v429, %v542
  %544 = vmatmul.f32.gmra.mxu0 %v464
  %v545 = vpop.f32.mrf.mxu0
  %v546 = vadd.f32 %v433, %v545
  %547 = vmatmul.f32.gmra.mxu0 %v467
  %v548 = vpop.f32.mrf.mxu0
  %v549 = vadd.f32 %v437, %v548
  %550 = vmatmul.f32.gmra.mxu0 %v470
  %v551 = vpop.f32.mrf.mxu0
  %v552 = vadd.f32 %v441, %v551
  %553 = vmatmul.f32.gmra.mxu0 %v473
  %v554 = vpop.f32.mrf.mxu0
  %v555 = vadd.f32 %v445, %v554
  %556 = vmatmul.f32.gmra.mxu0 %v476
  %v557 = vpop.f32.mrf.mxu0
  %v558 = vadd.f32 %v449, %v557
  %559 = vmatmul.f32.gmra.mxu0 %v479
  %v560 = vpop.f32.mrf.mxu0
  %v561 = vadd.f32 %v453, %v560
  %562 = vdwg.mxu0
  %563 = vmatpush.msra.mxu0 0.0
  %564 = vmatpush.msra.mxu0 0.0
  %565 = vmatpush.msra.mxu0 0.0
  %566 = vmatpush.msra.mxu0 0.0
  %567 = vmatpush.msra.mxu0 0.0
  %568 = vmatpush.msra.mxu0 0.0
  %569 = vmatpush.msra.mxu0 0.0
  %570 = vmatpush.msra.mxu0 0.0
  %571 = vmatpush.msra.mxu0 0.0
  %572 = vmatpush.msra.mxu0 0.0
  %573 = vmatpush.msra.mxu0 0.0
  %574 = vmatpush.msra.mxu0 0.0
  %575 = vmatpush.msra.mxu0 %v381
  %576 = vmatpush.msra.mxu0 %v377
  %577 = vmatpush.msra.mxu0 %v373
  %578 = vmatpush.msra.mxu0 %v369
  %579 = vmatmul.f32.gmra.mxu0 %v458
  %v580 = vpop.f32.mrf.mxu0
  %v581 = vadd.f32 %v426, %v580
  %582 = vmatmul.f32.gmra.mxu0 %v461
  %v583 = vpop.f32.mrf.mxu0
  %v584 = vadd.f32 %v430, %v583
  %585 = vmatmul.f32.gmra.mxu0 %v464
  %v586 = vpop.f32.mrf.mxu0
  %v587 = vadd.f32 %v434, %v586
  %588 = vmatmul.f32.gmra.mxu0 %v467
  %v589 = vpop.f32.mrf.mxu0
  %v590 = vadd.f32 %v438, %v589
  %591 = vmatmul.f32.gmra.mxu0 %v470
  %v592 = vpop.f32.mrf.mxu0
  %v593 = vadd.f32 %v442, %v592
  %594 = vmatmul.f32.gmra.mxu0 %v473
  %v595 = vpop.f32.mrf.mxu0
  %v596 = vadd.f32 %v446, %v595
  %597 = vmatmul.f32.gmra.mxu0 %v476
  %v598 = vpop.f32.mrf.mxu0
  %v599 = vadd.f32 %v450, %v598
  %600 = vmatmul.f32.gmra.mxu0 %v479
  %v601 = vpop.f32.mrf.mxu0
  %v602 = vadd.f32 %v454, %v601
  %603 = vdwg.mxu0
  %604 = vmatpush.msra.mxu0 0.0
  %605 = vmatpush.msra.mxu0 0.0
  %606 = vmatpush.msra.mxu0 0.0
  %607 = vmatpush.msra.mxu0 0.0
  %608 = vmatpush.msra.mxu0 0.0
  %609 = vmatpush.msra.mxu0 0.0
  %610 = vmatpush.msra.mxu0 0.0
  %611 = vmatpush.msra.mxu0 0.0
  %612 = vmatpush.msra.mxu0 0.0
  %613 = vmatpush.msra.mxu0 0.0
  %614 = vmatpush.msra.mxu0 0.0
  %615 = vmatpush.msra.mxu0 0.0
  %616 = vmatpush.msra.mxu0 %v382
  %617 = vmatpush.msra.mxu0 %v378
  %618 = vmatpush.msra.mxu0 %v374
  %619 = vmatpush.msra.mxu0 %v370
  %620 = vmatmul.f32.gmra.mxu0 %v458
  %v621 = vpop.f32.mrf.mxu0
  %v622 = vadd.f32 %v427, %v621
  %623 = vmatmul.f32.gmra.mxu0 %v461
  %v624 = vpop.f32.mrf.mxu0
  %v625 = vadd.f32 %v431, %v624
  %626 = vmatmul.f32.gmra.mxu0 %v464
  %v627 = vpop.f32.mrf.mxu0
  %v628 = vadd.f32 %v435, %v627
  %629 = vmatmul.f32.gmra.mxu0 %v467
  %v630 = vpop.f32.mrf.mxu0
  %v631 = vadd.f32 %v439, %v630
  %632 = vmatmul.f32.gmra.mxu0 %v470
  %v633 = vpop.f32.mrf.mxu0
  %v634 = vadd.f32 %v443, %v633
  %635 = vmatmul.f32.gmra.mxu0 %v473
  %v636 = vpop.f32.mrf.mxu0
  %v637 = vadd.f32 %v447, %v636
  %638 = vmatmul.f32.gmra.mxu0 %v476
  %v639 = vpop.f32.mrf.mxu0
  %v640 = vadd.f32 %v451, %v639
  %641 = vmatmul.f32.gmra.mxu0 %v479
  %v642 = vpop.f32.mrf.mxu0
  %v643 = vadd.f32 %v455, %v642
  %644 = vdwg.mxu0
  %v645 = vld [vmem:[%s1] sm:$0xff]
  %v646 = vld [vmem:[%s7] sm:$0xff]
  %v647 = vld [vmem:[%s7 + $0x8] sm:$0xff]
  %v648 = vld [vmem:[%s7 + $0x10] sm:$0xff]
  %v649 = vld [vmem:[%s7 + $0x18] sm:$0xff]
  %v651 = vperm.slane %v364, 0
  %v652 = vperm.slane %v364, 1
  %v653 = vperm.slane %v364, 2
  %v654 = vperm.slane %v364, 3
  %vm659 = vcmask 64512
  %v661 = vsel %vm659, %v645, 0
  %663 = vmatpush.msra.mxu0 0.0
  %664 = vmatpush.msra.mxu0 0.0
  %665 = vmatpush.msra.mxu0 0.0
  %666 = vmatpush.msra.mxu0 0.0
  %667 = vmatpush.msra.mxu0 0.0
  %668 = vmatpush.msra.mxu0 0.0
  %669 = vmatpush.msra.mxu0 0.0
  %670 = vmatpush.msra.mxu0 0.0
  %671 = vmatpush.msra.mxu0 0.0
  %672 = vmatpush.msra.mxu0 0.0
  %673 = vmatpush.msra.mxu0 0.0
  %674 = vmatpush.msra.mxu0 0.0
  %675 = vmatpush.msra.mxu0 0.0
  %676 = vmatpush.msra.mxu0 0.0
  %677 = vmatpush.msra.mxu0 0.0
  %678 = vmatpush.msra.mxu0 %v646
  %679 = vmatmul.f32.gmra.mxu0 %v661
  %v680 = vpop.f32.mrf.mxu0
  %v681 = vadd.f32 %v651, %v680
  %682 = vdwg.mxu0
  %683 = vmatpush.msra.mxu0 0.0
  %684 = vmatpush.msra.mxu0 0.0
  %685 = vmatpush.msra.mxu0 0.0
  %686 = vmatpush.msra.mxu0 0.0
  %687 = vmatpush.msra.mxu0 0.0
  %688 = vmatpush.msra.mxu0 0.0
  %689 = vmatpush.msra.mxu0 0.0
  %690 = vmatpush.msra.mxu0 0.0
  %691 = vmatpush.msra.mxu0 0.0
  %692 = vmatpush.msra.mxu0 0.0
  %693 = vmatpush.msra.mxu0 0.0
  %694 = vmatpush.msra.mxu0 0.0
  %695 = vmatpush.msra.mxu0 0.0
  %696 = vmatpush.msra.mxu0 0.0
  %697 = vmatpush.msra.mxu0 0.0
  %698 = vmatpush.msra.mxu0 %v647
  %699 = vmatmul.f32.gmra.mxu0 %v661
  %v700 = vpop.f32.mrf.mxu0
  %v701 = vadd.f32 %v652, %v700
  %702 = vdwg.mxu0
  %703 = vmatpush.msra.mxu0 0.0
  %704 = vmatpush.msra.mxu0 0.0
  %705 = vmatpush.msra.mxu0 0.0
  %706 = vmatpush.msra.mxu0 0.0
  %707 = vmatpush.msra.mxu0 0.0
  %708 = vmatpush.msra.mxu0 0.0
  %709 = vmatpush.msra.mxu0 0.0
  %710 = vmatpush.msra.mxu0 0.0
  %711 = vmatpush.msra.mxu0 0.0
  %712 = vmatpush.msra.mxu0 0.0
  %713 = vmatpush.msra.mxu0 0.0
  %714 = vmatpush.msra.mxu0 0.0
  %715 = vmatpush.msra.mxu0 0.0
  %716 = vmatpush.msra.mxu0 0.0
  %717 = vmatpush.msra.mxu0 0.0
  %718 = vmatpush.msra.mxu0 %v648
  %719 = vmatmul.f32.gmra.mxu0 %v661
  %v720 = vpop.f32.mrf.mxu0
  %v721 = vadd.f32 %v653, %v720
  %722 = vdwg.mxu0
  %723 = vmatpush.msra.mxu0 0.0
  %724 = vmatpush.msra.mxu0 0.0
  %725 = vmatpush.msra.mxu0 0.0
  %726 = vmatpush.msra.mxu0 0.0
  %727 = vmatpush.msra.mxu0 0.0
  %728 = vmatpush.msra.mxu0 0.0
  %729 = vmatpush.msra.mxu0 0.0
  %730 = vmatpush.msra.mxu0 0.0
  %731 = vmatpush.msra.mxu0 0.0
  %732 = vmatpush.msra.mxu0 0.0
  %733 = vmatpush.msra.mxu0 0.0
  %734 = vmatpush.msra.mxu0 0.0
  %735 = vmatpush.msra.mxu0 0.0
  %736 = vmatpush.msra.mxu0 0.0
  %737 = vmatpush.msra.mxu0 0.0
  %738 = vmatpush.msra.mxu0 %v649
  %739 = vmatmul.f32.gmra.mxu0 %v661
  %v740 = vpop.f32.mrf.mxu0
  %v741 = vadd.f32 %v654, %v740
  %742 = vdwg.mxu0
  %v743 = vld [vmem:[%s10] sm:$0xff]
  %v744 = vld [vmem:[%s11] sm:$0x1]
  %v746 = vperm.slane %v744, 0
  %748 = vmatpush.msra.mxu0 0.0
  %749 = vmatpush.msra.mxu0 0.0
  %750 = vmatpush.msra.mxu0 0.0
  %751 = vmatpush.msra.mxu0 0.0
  %752 = vmatpush.msra.mxu0 0.0
  %753 = vmatpush.msra.mxu0 0.0
  %754 = vmatpush.msra.mxu0 0.0
  %755 = vmatpush.msra.mxu0 0.0
  %756 = vmatpush.msra.mxu0 0.0
  %757 = vmatpush.msra.mxu0 0.0
  %758 = vmatpush.msra.mxu0 0.0
  %759 = vmatpush.msra.mxu0 0.0
  %760 = vmatpush.msra.mxu0 0.0
  %761 = vmatpush.msra.mxu0 0.0
  %762 = vmatpush.msra.mxu0 0.0
  %763 = vmatpush.msra.mxu0 %v743
  %764 = vmatmul.f32.gmra.mxu0 %v661
  %v765 = vpop.f32.mrf.mxu0
  %v766 = vadd.f32 %v746, %v765
  %767 = vdwg.mxu0
  %v768 = vtanh.pop %v766
  %v769 = vld [vmem:[%s9] sm:$0xff]
  %v770 = vld [vmem:[%s9 + $0x8] sm:$0xff]
  %v771 = vld [vmem:[%s9 + $0x10] sm:$0xff]
  %v772 = vld [vmem:[%s9 + $0x18] sm:$0xff]
  %v773 = vld [vmem:[%s9 + $0x20] sm:$0xff]
  %v774 = vld [vmem:[%s9 + $0x28] sm:$0xff]
  %v775 = vld [vmem:[%s9 + $0x30] sm:$0xff]
  %v776 = vld [vmem:[%s9 + $0x38] sm:$0xff]
  %v777 = vld [vmem:[%s9 + $0x40] sm:$0xff]
  %v778 = vld [vmem:[%s9 + $0x48] sm:$0xff]
  %v779 = vld [vmem:[%s9 + $0x50] sm:$0xff]
  %v780 = vld [vmem:[%s9 + $0x58] sm:$0xff]
  %v781 = vld [vmem:[%s9 + $0x60] sm:$0xff]
  %v782 = vld [vmem:[%s9 + $0x68] sm:$0xff]
  %v783 = vld [vmem:[%s9 + $0x70] sm:$0xff]
  %v784 = vld [vmem:[%s9 + $0x78] sm:$0xff]
  %v785 = vld [vmem:[%s9 + $0x80] sm:$0xff]
  %v786 = vld [vmem:[%s9 + $0x88] sm:$0xff]
  %v787 = vld [vmem:[%s9 + $0x90] sm:$0xff]
  %v788 = vld [vmem:[%s9 + $0x98] sm:$0xff]
  %v789 = vld [vmem:[%s9 + $0xa0] sm:$0xff]
  %v790 = vld [vmem:[%s9 + $0xa8] sm:$0xff]
  %v791 = vld [vmem:[%s9 + $0xb0] sm:$0xff]
  %v792 = vld [vmem:[%s9 + $0xb8] sm:$0xff]
  %v793 = vld [vmem:[%s9 + $0xc0] sm:$0xff]
  %v794 = vld [vmem:[%s9 + $0xc8] sm:$0xff]
  %v795 = vld [vmem:[%s9 + $0xd0] sm:$0xff]
  %v796 = vld [vmem:[%s9 + $0xd8] sm:$0xff]
  %v797 = vld [vmem:[%s9 + $0xe0] sm:$0xff]
  %v798 = vld [vmem:[%s9 + $0xe8] sm:$0xff]
  %v799 = vld [vmem:[%s9 + $0xf0] sm:$0xff]
  %v800 = vld [vmem:[%s9 + $0xf8] sm:$0xff]
  %v801 = vld [vmem:[%s9 + $0x100] sm:$0xff]
  %v802 = vld [vmem:[%s9 + $0x108] sm:$0xff]
  %v803 = vld [vmem:[%s9 + $0x110] sm:$0xff]
  %v804 = vld [vmem:[%s9 + $0x118] sm:$0xff]
  %v805 = vld [vmem:[%s9 + $0x120] sm:$0xff]
  %v806 = vld [vmem:[%s9 + $0x128] sm:$0xff]
  %v807 = vld [vmem:[%s9 + $0x130] sm:$0xff]
  %v808 = vld [vmem:[%s9 + $0x138] sm:$0xff]
  %v809 = vld [vmem:[%s9 + $0x140] sm:$0xff]
  %v810 = vld [vmem:[%s9 + $0x148] sm:$0xff]
  %v811 = vld [vmem:[%s9 + $0x150] sm:$0xff]
  %v812 = vld [vmem:[%s9 + $0x158] sm:$0xff]
  %v813 = vld [vmem:[%s9 + $0x160] sm:$0xff]
  %v814 = vld [vmem:[%s9 + $0x168] sm:$0xff]
  %v815 = vld [vmem:[%s9 + $0x170] sm:$0xff]
  %v816 = vld [vmem:[%s9 + $0x178] sm:$0xff]
  %v817 = vld [vmem:[%s9 + $0x180] sm:$0xff]
  %v818 = vld [vmem:[%s9 + $0x188] sm:$0xff]
  %v819 = vld [vmem:[%s9 + $0x190] sm:$0xff]
  %v820 = vld [vmem:[%s9 + $0x198] sm:$0xff]
  %v821 = vld [vmem:[%s9 + $0x1a0] sm:$0xff]
  %v822 = vld [vmem:[%s9 + $0x1a8] sm:$0xff]
  %v823 = vld [vmem:[%s9 + $0x1b0] sm:$0xff]
  %v824 = vld [vmem:[%s9 + $0x1b8] sm:$0xff]
  %v825 = vld [vmem:[%s9 + $0x1c0] sm:$0xff]
  %v826 = vld [vmem:[%s9 + $0x1c8] sm:$0xff]
  %v827 = vld [vmem:[%s9 + $0x1d0] sm:$0xff]
  %v828 = vld [vmem:[%s9 + $0x1d8] sm:$0xff]
  %v829 = vld [vmem:[%s9 + $0x1e0] sm:$0xff]
  %v830 = vld [vmem:[%s9 + $0x1e8] sm:$0xff]
  %v831 = vld [vmem:[%s9 + $0x1f0] sm:$0xff]
  %v832 = vld [vmem:[%s9 + $0x1f8] sm:$0xff]
  %v833 = vld [vmem:[%s9 + $0x200] sm:$0xff]
  %v834 = vld [vmem:[%s9 + $0x208] sm:$0xff]
  %v835 = vld [vmem:[%s9 + $0x210] sm:$0xff]
  %v836 = vld [vmem:[%s9 + $0x218] sm:$0xff]
  %v837 = vld [vmem:[%s9 + $0x220] sm:$0xff]
  %v838 = vld [vmem:[%s9 + $0x228] sm:$0xff]
  %v839 = vld [vmem:[%s9 + $0x230] sm:$0xff]
  %v840 = vld [vmem:[%s9 + $0x238] sm:$0xff]
  %v841 = vld [vmem:[%s9 + $0x240] sm:$0xff]
  %v842 = vld [vmem:[%s9 + $0x248] sm:$0xff]
  %v843 = vld [vmem:[%s9 + $0x250] sm:$0xff]
  %v844 = vld [vmem:[%s9 + $0x258] sm:$0xff]
  %v845 = vld [vmem:[%s9 + $0x260] sm:$0xff]
  %v846 = vld [vmem:[%s9 + $0x268] sm:$0xff]
  %v847 = vld [vmem:[%s9 + $0x270] sm:$0xff]
  %v848 = vld [vmem:[%s9 + $0x278] sm:$0xff]
  %v849 = vld [vmem:[%s9 + $0x280] sm:$0xff]
  %v850 = vld [vmem:[%s9 + $0x288] sm:$0xff]
  %v851 = vld [vmem:[%s9 + $0x290] sm:$0xff]
  %v852 = vld [vmem:[%s9 + $0x298] sm:$0xff]
  %v853 = vld [vmem:[%s9 + $0x2a0] sm:$0xff]
  %v854 = vld [vmem:[%s9 + $0x2a8] sm:$0xff]
  %v855 = vld [vmem:[%s9 + $0x2b0] sm:$0xff]
  %v856 = vld [vmem:[%s9 + $0x2b8] sm:$0xff]
  %v857 = vld [vmem:[%s9 + $0x2c0] sm:$0xff]
  %v858 = vld [vmem:[%s9 + $0x2c8] sm:$0xff]
  %v859 = vld [vmem:[%s9 + $0x2d0] sm:$0xff]
  %v860 = vld [vmem:[%s9 + $0x2d8] sm:$0xff]
  %v861 = vld [vmem:[%s9 + $0x2e0] sm:$0xff]
  %v862 = vld [vmem:[%s9 + $0x2e8] sm:$0xff]
  %v863 = vld [vmem:[%s9 + $0x2f0] sm:$0xff]
  %v864 = vld [vmem:[%s9 + $0x2f8] sm:$0xff]
  %v865 = vld [vmem:[%s9 + $0x300] sm:$0xff]
  %v866 = vld [vmem:[%s9 + $0x308] sm:$0xff]
  %v867 = vld [vmem:[%s9 + $0x310] sm:$0xff]
  %v868 = vld [vmem:[%s9 + $0x318] sm:$0xff]
  %v869 = vld [vmem:[%s9 + $0x320] sm:$0xff]
  %v870 = vld [vmem:[%s9 + $0x328] sm:$0xff]
  %v871 = vld [vmem:[%s9 + $0x330] sm:$0xff]
  %v872 = vld [vmem:[%s9 + $0x338] sm:$0xff]
  %v873 = vld [vmem:[%s9 + $0x340] sm:$0xff]
  %v874 = vld [vmem:[%s9 + $0x348] sm:$0xff]
  %v875 = vld [vmem:[%s9 + $0x350] sm:$0xff]
  %v876 = vld [vmem:[%s9 + $0x358] sm:$0xff]
  %v877 = vld [vmem:[%s9 + $0x360] sm:$0xff]
  %v878 = vld [vmem:[%s9 + $0x368] sm:$0xff]
  %v879 = vld [vmem:[%s9 + $0x370] sm:$0xff]
  %v880 = vld [vmem:[%s9 + $0x378] sm:$0xff]
  %v881 = vld [vmem:[%s9 + $0x380] sm:$0xff]
  %v882 = vld [vmem:[%s9 + $0x388] sm:$0xff]
  %v883 = vld [vmem:[%s9 + $0x390] sm:$0xff]
  %v884 = vld [vmem:[%s9 + $0x398] sm:$0xff]
  %v885 = vld [vmem:[%s9 + $0x3a0] sm:$0xff]
  %v886 = vld [vmem:[%s9 + $0x3a8] sm:$0xff]
  %v887 = vld [vmem:[%s9 + $0x3b0] sm:$0xff]
  %v888 = vld [vmem:[%s9 + $0x3b8] sm:$0xff]
  %v889 = vld [vmem:[%s9 + $0x3c0] sm:$0xff]
  %v890 = vld [vmem:[%s9 + $0x3c8] sm:$0xff]
  %v891 = vld [vmem:[%s9 + $0x3d0] sm:$0xff]
  %v892 = vld [vmem:[%s9 + $0x3d8] sm:$0xff]
  %v893 = vld [vmem:[%s9 + $0x3e0] sm:$0xff]
  %v894 = vld [vmem:[%s9 + $0x3e8] sm:$0xff]
  %v895 = vld [vmem:[%s9 + $0x3f0] sm:$0xff]
  %v896 = vld [vmem:[%s9 + $0x3f8] sm:$0xff]
  %v897 = vld [vmem:[%s9 + $0x400] sm:$0xff]
  %v898 = vld [vmem:[%s9 + $0x408] sm:$0xff]
  %v899 = vld [vmem:[%s9 + $0x410] sm:$0xff]
  %v900 = vld [vmem:[%s9 + $0x418] sm:$0xff]
  %v901 = vld [vmem:[%s9 + $0x420] sm:$0xff]
  %v902 = vld [vmem:[%s9 + $0x428] sm:$0xff]
  %v903 = vld [vmem:[%s9 + $0x430] sm:$0xff]
  %v904 = vld [vmem:[%s9 + $0x438] sm:$0xff]
  %v905 = vld [vmem:[%s9 + $0x440] sm:$0xff]
  %v906 = vld [vmem:[%s9 + $0x448] sm:$0xff]
  %v907 = vld [vmem:[%s9 + $0x450] sm:$0xff]
  %v908 = vld [vmem:[%s9 + $0x458] sm:$0xff]
  %v909 = vld [vmem:[%s9 + $0x460] sm:$0xff]
  %v910 = vld [vmem:[%s9 + $0x468] sm:$0xff]
  %v911 = vld [vmem:[%s9 + $0x470] sm:$0xff]
  %v912 = vld [vmem:[%s9 + $0x478] sm:$0xff]
  %v913 = vld [vmem:[%s9 + $0x480] sm:$0xff]
  %v914 = vld [vmem:[%s9 + $0x488] sm:$0xff]
  %v915 = vld [vmem:[%s9 + $0x490] sm:$0xff]
  %v916 = vld [vmem:[%s9 + $0x498] sm:$0xff]
  %v917 = vld [vmem:[%s9 + $0x4a0] sm:$0xff]
  %v918 = vld [vmem:[%s9 + $0x4a8] sm:$0xff]
  %v919 = vld [vmem:[%s9 + $0x4b0] sm:$0xff]
  %v920 = vld [vmem:[%s9 + $0x4b8] sm:$0xff]
  %v921 = vld [vmem:[%s9 + $0x4c0] sm:$0xff]
  %v922 = vld [vmem:[%s9 + $0x4c8] sm:$0xff]
  %v923 = vld [vmem:[%s9 + $0x4d0] sm:$0xff]
  %v924 = vld [vmem:[%s9 + $0x4d8] sm:$0xff]
  %v925 = vld [vmem:[%s9 + $0x4e0] sm:$0xff]
  %v926 = vld [vmem:[%s9 + $0x4e8] sm:$0xff]
  %v927 = vld [vmem:[%s9 + $0x4f0] sm:$0xff]
  %v928 = vld [vmem:[%s9 + $0x4f8] sm:$0xff]
  %v929 = vld [vmem:[%s9 + $0x500] sm:$0xff]
  %v930 = vld [vmem:[%s9 + $0x508] sm:$0xff]
  %v931 = vld [vmem:[%s9 + $0x510] sm:$0xff]
  %v932 = vld [vmem:[%s9 + $0x518] sm:$0xff]
  %v933 = vld [vmem:[%s9 + $0x520] sm:$0xff]
  %v934 = vld [vmem:[%s9 + $0x528] sm:$0xff]
  %v935 = vld [vmem:[%s9 + $0x530] sm:$0xff]
  %v936 = vld [vmem:[%s9 + $0x538] sm:$0xff]
  %v937 = vld [vmem:[%s9 + $0x540] sm:$0xff]
  %v938 = vld [vmem:[%s9 + $0x548] sm:$0xff]
  %v939 = vld [vmem:[%s9 + $0x550] sm:$0xff]
  %v940 = vld [vmem:[%s9 + $0x558] sm:$0xff]
  %v941 = vld [vmem:[%s9 + $0x560] sm:$0xff]
  %v942 = vld [vmem:[%s9 + $0x568] sm:$0xff]
  %v943 = vld [vmem:[%s9 + $0x570] sm:$0xff]
  %v944 = vld [vmem:[%s9 + $0x578] sm:$0xff]
  %v945 = vld [vmem:[%s9 + $0x580] sm:$0xff]
  %v946 = vld [vmem:[%s9 + $0x588] sm:$0xff]
  %v947 = vld [vmem:[%s9 + $0x590] sm:$0xff]
  %v948 = vld [vmem:[%s9 + $0x598] sm:$0xff]
  %v949 = vld [vmem:[%s9 + $0x5a0] sm:$0xff]
  %v950 = vld [vmem:[%s9 + $0x5a8] sm:$0xff]
  %v951 = vld [vmem:[%s9 + $0x5b0] sm:$0xff]
  %v952 = vld [vmem:[%s9 + $0x5b8] sm:$0xff]
  %v953 = vld [vmem:[%s9 + $0x5c0] sm:$0xff]
  %v954 = vld [vmem:[%s9 + $0x5c8] sm:$0xff]
  %v955 = vld [vmem:[%s9 + $0x5d0] sm:$0xff]
  %v956 = vld [vmem:[%s9 + $0x5d8] sm:$0xff]
  %v957 = vld [vmem:[%s9 + $0x5e0] sm:$0xff]
  %v958 = vld [vmem:[%s9 + $0x5e8] sm:$0xff]
  %v959 = vld [vmem:[%s9 + $0x5f0] sm:$0xff]
  %v960 = vld [vmem:[%s9 + $0x5f8] sm:$0xff]
  %v961 = vld [vmem:[%s9 + $0x600] sm:$0xff]
  %v962 = vld [vmem:[%s9 + $0x608] sm:$0xff]
  %v963 = vld [vmem:[%s9 + $0x610] sm:$0xff]
  %v964 = vld [vmem:[%s9 + $0x618] sm:$0xff]
  %v965 = vld [vmem:[%s9 + $0x620] sm:$0xff]
  %v966 = vld [vmem:[%s9 + $0x628] sm:$0xff]
  %v967 = vld [vmem:[%s9 + $0x630] sm:$0xff]
  %v968 = vld [vmem:[%s9 + $0x638] sm:$0xff]
  %v969 = vld [vmem:[%s9 + $0x640] sm:$0xff]
  %v970 = vld [vmem:[%s9 + $0x648] sm:$0xff]
  %v971 = vld [vmem:[%s9 + $0x650] sm:$0xff]
  %v972 = vld [vmem:[%s9 + $0x658] sm:$0xff]
  %v973 = vld [vmem:[%s9 + $0x660] sm:$0xff]
  %v974 = vld [vmem:[%s9 + $0x668] sm:$0xff]
  %v975 = vld [vmem:[%s9 + $0x670] sm:$0xff]
  %v976 = vld [vmem:[%s9 + $0x678] sm:$0xff]
  %v977 = vld [vmem:[%s9 + $0x680] sm:$0xff]
  %v978 = vld [vmem:[%s9 + $0x688] sm:$0xff]
  %v979 = vld [vmem:[%s9 + $0x690] sm:$0xff]
  %v980 = vld [vmem:[%s9 + $0x698] sm:$0xff]
  %v981 = vld [vmem:[%s9 + $0x6a0] sm:$0xff]
  %v982 = vld [vmem:[%s9 + $0x6a8] sm:$0xff]
  %v983 = vld [vmem:[%s9 + $0x6b0] sm:$0xff]
  %v984 = vld [vmem:[%s9 + $0x6b8] sm:$0xff]
  %v985 = vld [vmem:[%s9 + $0x6c0] sm:$0xff]
  %v986 = vld [vmem:[%s9 + $0x6c8] sm:$0xff]
  %v987 = vld [vmem:[%s9 + $0x6d0] sm:$0xff]
  %v988 = vld [vmem:[%s9 + $0x6d8] sm:$0xff]
  %v989 = vld [vmem:[%s9 + $0x6e0] sm:$0xff]
  %v990 = vld [vmem:[%s9 + $0x6e8] sm:$0xff]
  %v991 = vld [vmem:[%s9 + $0x6f0] sm:$0xff]
  %v992 = vld [vmem:[%s9 + $0x6f8] sm:$0xff]
  %v993 = vld [vmem:[%s9 + $0x700] sm:$0xff]
  %v994 = vld [vmem:[%s9 + $0x708] sm:$0xff]
  %v995 = vld [vmem:[%s9 + $0x710] sm:$0xff]
  %v996 = vld [vmem:[%s9 + $0x718] sm:$0xff]
  %v997 = vld [vmem:[%s9 + $0x720] sm:$0xff]
  %v998 = vld [vmem:[%s9 + $0x728] sm:$0xff]
  %v999 = vld [vmem:[%s9 + $0x730] sm:$0xff]
  %v1000 = vld [vmem:[%s9 + $0x738] sm:$0xff]
  %v1001 = vld [vmem:[%s9 + $0x740] sm:$0xff]
  %v1002 = vld [vmem:[%s9 + $0x748] sm:$0xff]
  %v1003 = vld [vmem:[%s9 + $0x750] sm:$0xff]
  %v1004 = vld [vmem:[%s9 + $0x758] sm:$0xff]
  %v1005 = vld [vmem:[%s9 + $0x760] sm:$0xff]
  %v1006 = vld [vmem:[%s9 + $0x768] sm:$0xff]
  %v1007 = vld [vmem:[%s9 + $0x770] sm:$0xff]
  %v1008 = vld [vmem:[%s9 + $0x778] sm:$0xff]
  %v1009 = vld [vmem:[%s9 + $0x780] sm:$0xff]
  %v1010 = vld [vmem:[%s9 + $0x788] sm:$0xff]
  %v1011 = vld [vmem:[%s9 + $0x790] sm:$0xff]
  %v1012 = vld [vmem:[%s9 + $0x798] sm:$0xff]
  %v1013 = vld [vmem:[%s9 + $0x7a0] sm:$0xff]
  %v1014 = vld [vmem:[%s9 + $0x7a8] sm:$0xff]
  %v1015 = vld [vmem:[%s9 + $0x7b0] sm:$0xff]
  %v1016 = vld [vmem:[%s9 + $0x7b8] sm:$0xff]
  %v1017 = vld [vmem:[%s9 + $0x7c0] sm:$0xff]
  %v1018 = vld [vmem:[%s9 + $0x7c8] sm:$0xff]
  %v1019 = vld [vmem:[%s9 + $0x7d0] sm:$0xff]
  %v1020 = vld [vmem:[%s9 + $0x7d8] sm:$0xff]
  %v1021 = vld [vmem:[%s9 + $0x7e0] sm:$0xff]
  %v1022 = vld [vmem:[%s9 + $0x7e8] sm:$0xff]
  %v1023 = vld [vmem:[%s9 + $0x7f0] sm:$0xff]
  %v1024 = vld [vmem:[%s9 + $0x7f8] sm:$0xff]
  %v1025 = vadd.f32 %v499, %v681
  %v1026 = vadd.f32 %v540, %v701
  %v1027 = vadd.f32 %v581, %v721
  %v1028 = vadd.f32 %v622, %v741
  %v1029 = vmul.f32 %v1025, 0.5
  %v1030 = vtanh.pop %v1029
  %v1031 = vadd.f32 %v1030, 1.0
  %v1032 = vmul.f32 %v1031, 0.5
  %v1033 = vmul.f32 %v1026, 0.5
  %v1034 = vtanh.pop %v1033
  %v1035 = vadd.f32 %v1034, 1.0
  %v1036 = vmul.f32 %v1035, 0.5
  %v1037 = vtanh.pop %v1027
  %v1038 = vmul.f32 %v1028, 0.5
  %v1039 = vtanh.pop %v1038
  %v1040 = vadd.f32 %v1039, 1.0
  %v1041 = vmul.f32 %v1040, 0.5
  %v1042 = vmul.f32 %v1036, 0.0
  %v1043 = vmul.f32 %v1032, %v1037
  %v1044 = vadd.f32 %v1042, %v1043
  %v1045 = vtanh.pop %v1044
  %v1046 = vmul.f32 %v1041, %v1045
  %1047 = vmatpush.msra.mxu0 %v889
  %1048 = vmatpush.msra.mxu0 %v881
  %1049 = vmatpush.msra.mxu0 %v873
  %1050 = vmatpush.msra.mxu0 %v865
  %1051 = vmatpush.msra.mxu0 %v857
  %1052 = vmatpush.msra.mxu0 %v849
  %1053 = vmatpush.msra.mxu0 %v841
  %1054 = vmatpush.msra.mxu0 %v833
  %1055 = vmatpush.msra.mxu0 %v825
  %1056 = vmatpush.msra.mxu0 %v817
  %1057 = vmatpush.msra.mxu0 %v809
  %1058 = vmatpush.msra.mxu0 %v801
  %1059 = vmatpush.msra.mxu0 %v793
  %1060 = vmatpush.msra.mxu0 %v785
  %1061 = vmatpush.msra.mxu0 %v777
  %1062 = vmatpush.msra.mxu0 %v769
  %1063 = vmatmul.f32.gmra.mxu0 %v1046
  %v1064 = vpop.f32.mrf.mxu0
  %v1065 = vadd.f32 0.0, %v1064
  %1066 = vdwg.mxu0
  %1067 = vmatpush.msra.mxu0 %v1017
  %1068 = vmatpush.msra.mxu0 %v1009
  %1069 = vmatpush.msra.mxu0 %v1001
  %1070 = vmatpush.msra.mxu0 %v993
  %1071 = vmatpush.msra.mxu0 %v985
  %1072 = vmatpush.msra.mxu0 %v977
  %1073 = vmatpush.msra.mxu0 %v969
  %1074 = vmatpush.msra.mxu0 %v961
  %1075 = vmatpush.msra.mxu0 %v953
  %1076 = vmatpush.msra.mxu0 %v945
  %1077 = vmatpush.msra.mxu0 %v937
  %1078 = vmatpush.msra.mxu0 %v929
  %1079 = vmatpush.msra.mxu0 %v921
  %1080 = vmatpush.msra.mxu0 %v913
  %1081 = vmatpush.msra.mxu0 %v905
  %1082 = vmatpush.msra.mxu0 %v897
  %1083 = vmatmul.f32.gmra.mxu0 0.0
  %v1084 = vpop.f32.mrf.mxu0
  %v1085 = vadd.f32 %v1065, %v1084
  %1086 = vdwg.mxu0
  %1087 = vmatpush.msra.mxu0 %v890
  %1088 = vmatpush.msra.mxu0 %v882
  %1089 = vmatpush.msra.mxu0 %v874
  %1090 = vmatpush.msra.mxu0 %v866
  %1091 = vmatpush.msra.mxu0 %v858
  %1092 = vmatpush.msra.mxu0 %v850
  %1093 = vmatpush.msra.mxu0 %v842
  %1094 = vmatpush.msra.mxu0 %v834
  %1095 = vmatpush.msra.mxu0 %v826
  %1096 = vmatpush.msra.mxu0 %v818
  %1097 = vmatpush.msra.mxu0 %v810
  %1098 = vmatpush.msra.mxu0 %v802
  %1099 = vmatpush.msra.mxu0 %v794
  %1100 = vmatpush.msra.mxu0 %v786
  %1101 = vmatpush.msra.mxu0 %v778
  %1102 = vmatpush.msra.mxu0 %v770
  %1103 = vmatmul.f32.gmra.mxu0 %v1046
  %v1104 = vpop.f32.mrf.mxu0
  %v1105 = vadd.f32 0.0, %v1104
  %1106 = vdwg.mxu0
  %1107 = vmatpush.msra.mxu0 %v1018
  %1108 = vmatpush.msra.mxu0 %v1010
  %1109 = vmatpush.msra.mxu0 %v1002
  %1110 = vmatpush.msra.mxu0 %v994
  %1111 = vmatpush.msra.mxu0 %v986
  %1112 = vmatpush.msra.mxu0 %v978
  %1113 = vmatpush.msra.mxu0 %v970
  %1114 = vmatpush.msra.mxu0 %v962
  %1115 = vmatpush.msra.mxu0 %v954
  %1116 = vmatpush.msra.mxu0 %v946
  %1117 = vmatpush.msra.mxu0 %v938
  %1118 = vmatpush.msra.mxu0 %v930
  %1119 = vmatpush.msra.mxu0 %v922
  %1120 = vmatpush.msra.mxu0 %v914
  %1121 = vmatpush.msra.mxu0 %v906
  %1122 = vmatpush.msra.mxu0 %v898
  %1123 = vmatmul.f32.gmra.mxu0 0.0
  %v1124 = vpop.f32.mrf.mxu0
  %v1125 = vadd.f32 %v1105, %v1124
  %1126 = vdwg.mxu0
  %1127 = vmatpush.msra.mxu0 %v891
  %1128 = vmatpush.msra.mxu0 %v883
  %1129 = vmatpush.msra.mxu0 %v875
  %1130 = vmatpush.msra.mxu0 %v867
  %1131 = vmatpush.msra.mxu0 %v859
  %1132 = vmatpush.msra.mxu0 %v851
  %1133 = vmatpush.msra.mxu0 %v843
  %1134 = vmatpush.msra.mxu0 %v835
  %1135 = vmatpush.msra.mxu0 %v827
  %1136 = vmatpush.msra.mxu0 %v819
  %1137 = vmatpush.msra.mxu0 %v811
  %1138 = vmatpush.msra.mxu0 %v803
  %1139 = vmatpush.msra.mxu0 %v795
  %1140 = vmatpush.msra.mxu0 %v787
  %1141 = vmatpush.msra.mxu0 %v779
  %1142 = vmatpush.msra.mxu0 %v771
  %1143 = vmatmul.f32.gmra.mxu0 %v1046
  %v1144 = vpop.f32.mrf.mxu0
  %v1145 = vadd.f32 0.0, %v1144
  %1146 = vdwg.mxu0
  %1147 = vmatpush.msra.mxu0 %v1019
  %1148 = vmatpush.msra.mxu0 %v1011
  %1149 = vmatpush.msra.mxu0 %v1003
  %1150 = vmatpush.msra.mxu0 %v995
  %1151 = vmatpush.msra.mxu0 %v987
  %1152 = vmatpush.msra.mxu0 %v979
  %1153 = vmatpush.msra.mxu0 %v971
  %1154 = vmatpush.msra.mxu0 %v963
  %1155 = vmatpush.msra.mxu0 %v955
  %1156 = vmatpush.msra.mxu0 %v947
  %1157 = vmatpush.msra.mxu0 %v939
  %1158 = vmatpush.msra.mxu0 %v931
  %1159 = vmatpush.msra.mxu0 %v923
  %1160 = vmatpush.msra.mxu0 %v915
  %1161 = vmatpush.msra.mxu0 %v907
  %1162 = vmatpush.msra.mxu0 %v899
  %1163 = vmatmul.f32.gmra.mxu0 0.0
  %v1164 = vpop.f32.mrf.mxu0
  %v1165 = vadd.f32 %v1145, %v1164
  %1166 = vdwg.mxu0
  %1167 = vmatpush.msra.mxu0 %v892
  %1168 = vmatpush.msra.mxu0 %v884
  %1169 = vmatpush.msra.mxu0 %v876
  %1170 = vmatpush.msra.mxu0 %v868
  %1171 = vmatpush.msra.mxu0 %v860
  %1172 = vmatpush.msra.mxu0 %v852
  %1173 = vmatpush.msra.mxu0 %v844
  %1174 = vmatpush.msra.mxu0 %v836
  %1175 = vmatpush.msra.mxu0 %v828
  %1176 = vmatpush.msra.mxu0 %v820
  %1177 = vmatpush.msra.mxu0 %v812
  %1178 = vmatpush.msra.mxu0 %v804
  %1179 = vmatpush.msra.mxu0 %v796
  %1180 = vmatpush.msra.mxu0 %v788
  %1181 = vmatpush.msra.mxu0 %v780
  %1182 = vmatpush.msra.mxu0 %v772
  %1183 = vmatmul.f32.gmra.mxu0 %v1046
  %v1184 = vpop.f32.mrf.mxu0
  %v1185 = vadd.f32 0.0, %v1184
  %1186 = vdwg.mxu0
  %1187 = vmatpush.msra.mxu0 %v1020
  %1188 = vmatpush.msra.mxu0 %v1012
  %1189 = vmatpush.msra.mxu0 %v1004
  %1190 = vmatpush.msra.mxu0 %v996
  %1191 = vmatpush.msra.mxu0 %v988
  %1192 = vmatpush.msra.mxu0 %v980
  %1193 = vmatpush.msra.mxu0 %v972
  %1194 = vmatpush.msra.mxu0 %v964
  %1195 = vmatpush.msra.mxu0 %v956
  %1196 = vmatpush.msra.mxu0 %v948
  %1197 = vmatpush.msra.mxu0 %v940
  %1198 = vmatpush.msra.mxu0 %v932
  %1199 = vmatpush.msra.mxu0 %v924
  %1200 = vmatpush.msra.mxu0 %v916
  %1201 = vmatpush.msra.mxu0 %v908
  %1202 = vmatpush.msra.mxu0 %v900
  %1203 = vmatmul.f32.gmra.mxu0 0.0
  %v1204 = vpop.f32.mrf.mxu0
  %v1205 = vadd.f32 %v1185, %v1204
  %1206 = vdwg.mxu0
  %1207 = vmatpush.msra.mxu0 %v893
  %1208 = vmatpush.msra.mxu0 %v885
  %1209 = vmatpush.msra.mxu0 %v877
  %1210 = vmatpush.msra.mxu0 %v869
  %1211 = vmatpush.msra.mxu0 %v861
  %1212 = vmatpush.msra.mxu0 %v853
  %1213 = vmatpush.msra.mxu0 %v845
  %1214 = vmatpush.msra.mxu0 %v837
  %1215 = vmatpush.msra.mxu0 %v829
  %1216 = vmatpush.msra.mxu0 %v821
  %1217 = vmatpush.msra.mxu0 %v813
  %1218 = vmatpush.msra.mxu0 %v805
  %1219 = vmatpush.msra.mxu0 %v797
  %1220 = vmatpush.msra.mxu0 %v789
  %1221 = vmatpush.msra.mxu0 %v781
  %1222 = vmatpush.msra.mxu0 %v773
  %1223 = vmatmul.f32.gmra.mxu0 %v1046
  %v1224 = vpop.f32.mrf.mxu0
  %v1225 = vadd.f32 0.0, %v1224
  %1226 = vdwg.mxu0
  %1227 = vmatpush.msra.mxu0 %v1021
  %1228 = vmatpush.msra.mxu0 %v1013
  %1229 = vmatpush.msra.mxu0 %v1005
  %1230 = vmatpush.msra.mxu0 %v997
  %1231 = vmatpush.msra.mxu0 %v989
  %1232 = vmatpush.msra.mxu0 %v981
  %1233 = vmatpush.msra.mxu0 %v973
  %1234 = vmatpush.msra.mxu0 %v965
  %1235 = vmatpush.msra.mxu0 %v957
  %1236 = vmatpush.msra.mxu0 %v949
  %1237 = vmatpush.msra.mxu0 %v941
  %1238 = vmatpush.msra.mxu0 %v933
  %1239 = vmatpush.msra.mxu0 %v925
  %1240 = vmatpush.msra.mxu0 %v917
  %1241 = vmatpush.msra.mxu0 %v909
  %1242 = vmatpush.msra.mxu0 %v901
  %1243 = vmatmul.f32.gmra.mxu0 0.0
  %v1244 = vpop.f32.mrf.mxu0
  %v1245 = vadd.f32 %v1225, %v1244
  %1246 = vdwg.mxu0
  %1247 = vmatpush.msra.mxu0 %v894
  %1248 = vmatpush.msra.mxu0 %v886
  %1249 = vmatpush.msra.mxu0 %v878
  %1250 = vmatpush.msra.mxu0 %v870
  %1251 = vmatpush.msra.mxu0 %v862
  %1252 = vmatpush.msra.mxu0 %v854
  %1253 = vmatpush.msra.mxu0 %v846
  %1254 = vmatpush.msra.mxu0 %v838
  %1255 = vmatpush.msra.mxu0 %v830
  %1256 = vmatpush.msra.mxu0 %v822
  %1257 = vmatpush.msra.mxu0 %v814
  %1258 = vmatpush.msra.mxu0 %v806
  %1259 = vmatpush.msra.mxu0 %v798
  %1260 = vmatpush.msra.mxu0 %v790
  %1261 = vmatpush.msra.mxu0 %v782
  %1262 = vmatpush.msra.mxu0 %v774
  %1263 = vmatmul.f32.gmra.mxu0 %v1046
  %v1264 = vpop.f32.mrf.mxu0
  %v1265 = vadd.f32 0.0, %v1264
  %1266 = vdwg.mxu0
  %1267 = vmatpush.msra.mxu0 %v1022
  %1268 = vmatpush.msra.mxu0 %v1014
  %1269 = vmatpush.msra.mxu0 %v1006
  %1270 = vmatpush.msra.mxu0 %v998
  %1271 = vmatpush.msra.mxu0 %v990
  %1272 = vmatpush.msra.mxu0 %v982
  %1273 = vmatpush.msra.mxu0 %v974
  %1274 = vmatpush.msra.mxu0 %v966
  %1275 = vmatpush.msra.mxu0 %v958
  %1276 = vmatpush.msra.mxu0 %v950
  %1277 = vmatpush.msra.mxu0 %v942
  %1278 = vmatpush.msra.mxu0 %v934
  %1279 = vmatpush.msra.mxu0 %v926
  %1280 = vmatpush.msra.mxu0 %v918
  %1281 = vmatpush.msra.mxu0 %v910
  %1282 = vmatpush.msra.mxu0 %v902
  %1283 = vmatmul.f32.gmra.mxu0 0.0
  %v1284 = vpop.f32.mrf.mxu0
  %v1285 = vadd.f32 %v1265, %v1284
  %1286 = vdwg.mxu0
  %1287 = vmatpush.msra.mxu0 %v895
  %1288 = vmatpush.msra.mxu0 %v887
  %1289 = vmatpush.msra.mxu0 %v879
  %1290 = vmatpush.msra.mxu0 %v871
  %1291 = vmatpush.msra.mxu0 %v863
  %1292 = vmatpush.msra.mxu0 %v855
  %1293 = vmatpush.msra.mxu0 %v847
  %1294 = vmatpush.msra.mxu0 %v839
  %1295 = vmatpush.msra.mxu0 %v831
  %1296 = vmatpush.msra.mxu0 %v823
  %1297 = vmatpush.msra.mxu0 %v815
  %1298 = vmatpush.msra.mxu0 %v807
  %1299 = vmatpush.msra.mxu0 %v799
  %1300 = vmatpush.msra.mxu0 %v791
  %1301 = vmatpush.msra.mxu0 %v783
  %1302 = vmatpush.msra.mxu0 %v775
  %1303 = vmatmul.f32.gmra.mxu0 %v1046
  %v1304 = vpop.f32.mrf.mxu0
  %v1305 = vadd.f32 0.0, %v1304
  %1306 = vdwg.mxu0
  %1307 = vmatpush.msra.mxu0 %v1023
  %1308 = vmatpush.msra.mxu0 %v1015
  %1309 = vmatpush.msra.mxu0 %v1007
  %1310 = vmatpush.msra.mxu0 %v999
  %1311 = vmatpush.msra.mxu0 %v991
  %1312 = vmatpush.msra.mxu0 %v983
  %1313 = vmatpush.msra.mxu0 %v975
  %1314 = vmatpush.msra.mxu0 %v967
  %1315 = vmatpush.msra.mxu0 %v959
  %1316 = vmatpush.msra.mxu0 %v951
  %1317 = vmatpush.msra.mxu0 %v943
  %1318 = vmatpush.msra.mxu0 %v935
  %1319 = vmatpush.msra.mxu0 %v927
  %1320 = vmatpush.msra.mxu0 %v919
  %1321 = vmatpush.msra.mxu0 %v911
  %1322 = vmatpush.msra.mxu0 %v903
  %1323 = vmatmul.f32.gmra.mxu0 0.0
  %v1324 = vpop.f32.mrf.mxu0
  %v1325 = vadd.f32 %v1305, %v1324
  %1326 = vdwg.mxu0
  %1327 = vmatpush.msra.mxu0 %v896
  %1328 = vmatpush.msra.mxu0 %v888
  %1329 = vmatpush.msra.mxu0 %v880
  %1330 = vmatpush.msra.mxu0 %v872
  %1331 = vmatpush.msra.mxu0 %v864
  %1332 = vmatpush.msra.mxu0 %v856
  %1333 = vmatpush.msra.mxu0 %v848
  %1334 = vmatpush.msra.mxu0 %v840
  %1335 = vmatpush.msra.mxu0 %v832
  %1336 = vmatpush.msra.mxu0 %v824
  %1337 = vmatpush.msra.mxu0 %v816
  %1338 = vmatpush.msra.mxu0 %v808
  %1339 = vmatpush.msra.mxu0 %v800
  %1340 = vmatpush.msra.mxu0 %v792
  %1341 = vmatpush.msra.mxu0 %v784
  %1342 = vmatpush.msra.mxu0 %v776
  %1343 = vmatmul.f32.gmra.mxu0 %v1046
  %v1344 = vpop.f32.mrf.mxu0
  %v1345 = vadd.f32 0.0, %v1344
  %1346 = vdwg.mxu0
  %1347 = vmatpush.msra.mxu0 %v1024
  %1348 = vmatpush.msra.mxu0 %v1016
  %1349 = vmatpush.msra.mxu0 %v1008
  %1350 = vmatpush.msra.mxu0 %v1000
  %1351 = vmatpush.msra.mxu0 %v992
  %1352 = vmatpush.msra.mxu0 %v984
  %1353 = vmatpush.msra.mxu0 %v976
  %1354 = vmatpush.msra.mxu0 %v968
  %1355 = vmatpush.msra.mxu0 %v960
  %1356 = vmatpush.msra.mxu0 %v952
  %1357 = vmatpush.msra.mxu0 %v944
  %1358 = vmatpush.msra.mxu0 %v936
  %1359 = vmatpush.msra.mxu0 %v928
  %1360 = vmatpush.msra.mxu0 %v920
  %1361 = vmatpush.msra.mxu0 %v912
  %1362 = vmatpush.msra.mxu0 %v904
  %1363 = vmatmul.f32.gmra.mxu0 0.0
  %v1364 = vpop.f32.mrf.mxu0
  %v1365 = vadd.f32 %v1345, %v1364
  %1366 = vdwg.mxu0
  %v1367 = vadd.f32 %v502, %v681
  %v1368 = vadd.f32 %v543, %v701
  %v1369 = vadd.f32 %v584, %v721
  %v1370 = vadd.f32 %v625, %v741
  %v1371 = vadd.f32 %v1367, %v1085
  %v1372 = vadd.f32 %v1368, %v1125
  %v1373 = vadd.f32 %v1369, %v1165
  %v1374 = vadd.f32 %v1370, %v1205
  %v1375 = vmul.f32 %v1371, 0.5
  %v1376 = vtanh.pop %v1375
  %v1377 = vadd.f32 %v1376, 1.0
  %v1378 = vmul.f32 %v1377, 0.5
  %v1379 = vmul.f32 %v1372, 0.5
  %v1380 = vtanh.pop %v1379
  %v1381 = vadd.f32 %v1380, 1.0
  %v1382 = vmul.f32 %v1381, 0.5
  %v1383 = vtanh.pop %v1373
  %v1384 = vmul.f32 %v1374, 0.5
  %v1385 = vtanh.pop %v1384
  %v1386 = vadd.f32 %v1385, 1.0
  %v1387 = vmul.f32 %v1386, 0.5
  %v1388 = vmul.f32 %v1382, %v1044
  %v1389 = vmul.f32 %v1378, %v1383
  %v1390 = vadd.f32 %v1388, %v1389
  %v1391 = vtanh.pop %v1390
  %v1392 = vmul.f32 %v1387, %v1391
  %v1394 = vperm.slane %v366, 0
  %v1395 = vperm.slane %v366, 1
  %v1396 = vperm.slane %v366, 2
  %v1397 = vperm.slane %v366, 3
  %v1402 = vadd.f32 %v1245, %v1394
  %v1403 = vadd.f32 %v1285, %v1395
  %v1404 = vadd.f32 %v1325, %v1396
  %v1405 = vadd.f32 %v1365, %v1397
  %v1406 = vmul.f32 %v1402, 0.5
  %v1407 = vtanh.pop %v1406
  %v1408 = vadd.f32 %v1407, 1.0
  %v1409 = vmul.f32 %v1408, 0.5
  %v1410 = vmul.f32 %v1403, 0.5
  %v1411 = vtanh.pop %v1410
  %v1412 = vadd.f32 %v1411, 1.0
  %v1413 = vmul.f32 %v1412, 0.5
  %v1414 = vtanh.pop %v1404
  %v1415 = vmul.f32 %v1405, 0.5
  %v1416 = vtanh.pop %v1415
  %v1417 = vadd.f32 %v1416, 1.0
  %v1418 = vmul.f32 %v1417, 0.5
  %v1419 = vmul.f32 %v1413, 0.0
  %v1420 = vmul.f32 %v1409, %v1414
  %v1421 = vadd.f32 %v1419, %v1420
  %v1422 = vtanh.pop %v1421
  %v1423 = vmul.f32 %v1418, %v1422
  %1424 = vset.pattern.permute.xlu0 3
  %1425 = vperm.xlu0 %1424, %v43
  %v1426 = vpop.permute.xlu0 %1425
  %v1428 = vmul.f32 %v1423, %v1426
  %1429 = vst [vmem:[%s12] sm:$0xff] %v1428
  %v1430 = vmul.f32 %v1428, %v768
  %1431 = vadd.xlane.f32.xlu0 %v1430
  %v1432 = vpop.xlane.xlu0 %1431
  %v1433 = vsub.f32 0.0, %v1432
  %v1434 = vmul.f32 %v1433, 1.442695
  %v1435 = vpow.pop %v1434
  %v1436 = vmul.f32 %v1435, %v1428
  %v1437 = vadd.f32 %v1436, 0.0
  %v1438 = vadd.f32 %v1435, 0.0
  %1439 = vmatpush.msra.mxu0 %v889
  %1440 = vmatpush.msra.mxu0 %v881
  %1441 = vmatpush.msra.mxu0 %v873
  %1442 = vmatpush.msra.mxu0 %v865
  %1443 = vmatpush.msra.mxu0 %v857
  %1444 = vmatpush.msra.mxu0 %v849
  %1445 = vmatpush.msra.mxu0 %v841
  %1446 = vmatpush.msra.mxu0 %v833
  %1447 = vmatpush.msra.mxu0 %v825
  %1448 = vmatpush.msra.mxu0 %v817
  %1449 = vmatpush.msra.mxu0 %v809
  %1450 = vmatpush.msra.mxu0 %v801
  %1451 = vmatpush.msra.mxu0 %v793
  %1452 = vmatpush.msra.mxu0 %v785
  %1453 = vmatpush.msra.mxu0 %v777
  %1454 = vmatpush.msra.mxu0 %v769
  %1455 = vmatmul.f32.gmra.mxu0 %v1392
  %v1456 = vpop.f32.mrf.mxu0
  %v1457 = vadd.f32 0.0, %v1456
  %1458 = vdwg.mxu0
  %1459 = vmatpush.msra.mxu0 %v1017
  %1460 = vmatpush.msra.mxu0 %v1009
  %1461 = vmatpush.msra.mxu0 %v1001
  %1462 = vmatpush.msra.mxu0 %v993
  %1463 = vmatpush.msra.mxu0 %v985
  %1464 = vmatpush.msra.mxu0 %v977
  %1465 = vmatpush.msra.mxu0 %v969
  %1466 = vmatpush.msra.mxu0 %v961
  %1467 = vmatpush.msra.mxu0 %v953
  %1468 = vmatpush.msra.mxu0 %v945
  %1469 = vmatpush.msra.mxu0 %v937
  %1470 = vmatpush.msra.mxu0 %v929
  %1471 = vmatpush.msra.mxu0 %v921
  %1472 = vmatpush.msra.mxu0 %v913
  %1473 = vmatpush.msra.mxu0 %v905
  %1474 = vmatpush.msra.mxu0 %v897
  %1475 = vmatmul.f32.gmra.mxu0 %v1423
  %v1476 = vpop.f32.mrf.mxu0
  %v1477 = vadd.f32 %v1457, %v1476
  %1478 = vdwg.mxu0
  %1479 = vmatpush.msra.mxu0 %v890
  %1480 = vmatpush.msra.mxu0 %v882
  %1481 = vmatpush.msra.mxu0 %v874
  %1482 = vmatpush.msra.mxu0 %v866
  %1483 = vmatpush.msra.mxu0 %v858
  %1484 = vmatpush.msra.mxu0 %v850
  %1485 = vmatpush.msra.mxu0 %v842
  %1486 = vmatpush.msra.mxu0 %v834
  %1487 = vmatpush.msra.mxu0 %v826
  %1488 = vmatpush.msra.mxu0 %v818
  %1489 = vmatpush.msra.mxu0 %v810
  %1490 = vmatpush.msra.mxu0 %v802
  %1491 = vmatpush.msra.mxu0 %v794
  %1492 = vmatpush.msra.mxu0 %v786
  %1493 = vmatpush.msra.mxu0 %v778
  %1494 = vmatpush.msra.mxu0 %v770
  %1495 = vmatmul.f32.gmra.mxu0 %v1392
  %v1496 = vpop.f32.mrf.mxu0
  %v1497 = vadd.f32 0.0, %v1496
  %1498 = vdwg.mxu0
  %1499 = vmatpush.msra.mxu0 %v1018
  %1500 = vmatpush.msra.mxu0 %v1010
  %1501 = vmatpush.msra.mxu0 %v1002
  %1502 = vmatpush.msra.mxu0 %v994
  %1503 = vmatpush.msra.mxu0 %v986
  %1504 = vmatpush.msra.mxu0 %v978
  %1505 = vmatpush.msra.mxu0 %v970
  %1506 = vmatpush.msra.mxu0 %v962
  %1507 = vmatpush.msra.mxu0 %v954
  %1508 = vmatpush.msra.mxu0 %v946
  %1509 = vmatpush.msra.mxu0 %v938
  %1510 = vmatpush.msra.mxu0 %v930
  %1511 = vmatpush.msra.mxu0 %v922
  %1512 = vmatpush.msra.mxu0 %v914
  %1513 = vmatpush.msra.mxu0 %v906
  %1514 = vmatpush.msra.mxu0 %v898
  %1515 = vmatmul.f32.gmra.mxu0 %v1423
  %v1516 = vpop.f32.mrf.mxu0
  %v1517 = vadd.f32 %v1497, %v1516
  %1518 = vdwg.mxu0
  %1519 = vmatpush.msra.mxu0 %v891
  %1520 = vmatpush.msra.mxu0 %v883
  %1521 = vmatpush.msra.mxu0 %v875
  %1522 = vmatpush.msra.mxu0 %v867
  %1523 = vmatpush.msra.mxu0 %v859
  %1524 = vmatpush.msra.mxu0 %v851
  %1525 = vmatpush.msra.mxu0 %v843
  %1526 = vmatpush.msra.mxu0 %v835
  %1527 = vmatpush.msra.mxu0 %v827
  %1528 = vmatpush.msra.mxu0 %v819
  %1529 = vmatpush.msra.mxu0 %v811
  %1530 = vmatpush.msra.mxu0 %v803
  %1531 = vmatpush.msra.mxu0 %v795
  %1532 = vmatpush.msra.mxu0 %v787
  %1533 = vmatpush.msra.mxu0 %v779
  %1534 = vmatpush.msra.mxu0 %v771
  %1535 = vmatmul.f32.gmra.mxu0 %v1392
  %v1536 = vpop.f32.mrf.mxu0
  %v1537 = vadd.f32 0.0, %v1536
  %1538 = vdwg.mxu0
  %1539 = vmatpush.msra.mxu0 %v1019
  %1540 = vmatpush.msra.mxu0 %v1011
  %1541 = vmatpush.msra.mxu0 %v1003
  %1542 = vmatpush.msra.mxu0 %v995
  %1543 = vmatpush.msra.mxu0 %v987
  %1544 = vmatpush.msra.mxu0 %v979
  %1545 = vmatpush.msra.mxu0 %v971
  %1546 = vmatpush.msra.mxu0 %v963
  %1547 = vmatpush.msra.mxu0 %v955
  %1548 = vmatpush.msra.mxu0 %v947
  %1549 = vmatpush.msra.mxu0 %v939
  %1550 = vmatpush.msra.mxu0 %v931
  %1551 = vmatpush.msra.mxu0 %v923
  %1552 = vmatpush.msra.mxu0 %v915
  %1553 = vmatpush.msra.mxu0 %v907
  %1554 = vmatpush.msra.mxu0 %v899
  %1555 = vmatmul.f32.gmra.mxu0 %v1423
  %v1556 = vpop.f32.mrf.mxu0
  %v1557 = vadd.f32 %v1537, %v1556
  %1558 = vdwg.mxu0
  %1559 = vmatpush.msra.mxu0 %v892
  %1560 = vmatpush.msra.mxu0 %v884
  %1561 = vmatpush.msra.mxu0 %v876
  %1562 = vmatpush.msra.mxu0 %v868
  %1563 = vmatpush.msra.mxu0 %v860
  %1564 = vmatpush.msra.mxu0 %v852
  %1565 = vmatpush.msra.mxu0 %v844
  %1566 = vmatpush.msra.mxu0 %v836
  %1567 = vmatpush.msra.mxu0 %v828
  %1568 = vmatpush.msra.mxu0 %v820
  %1569 = vmatpush.msra.mxu0 %v812
  %1570 = vmatpush.msra.mxu0 %v804
  %1571 = vmatpush.msra.mxu0 %v796
  %1572 = vmatpush.msra.mxu0 %v788
  %1573 = vmatpush.msra.mxu0 %v780
  %1574 = vmatpush.msra.mxu0 %v772
  %1575 = vmatmul.f32.gmra.mxu0 %v1392
  %v1576 = vpop.f32.mrf.mxu0
  %v1577 = vadd.f32 0.0, %v1576
  %1578 = vdwg.mxu0
  %1579 = vmatpush.msra.mxu0 %v1020
  %1580 = vmatpush.msra.mxu0 %v1012
  %1581 = vmatpush.msra.mxu0 %v1004
  %1582 = vmatpush.msra.mxu0 %v996
  %1583 = vmatpush.msra.mxu0 %v988
  %1584 = vmatpush.msra.mxu0 %v980
  %1585 = vmatpush.msra.mxu0 %v972
  %1586 = vmatpush.msra.mxu0 %v964
  %1587 = vmatpush.msra.mxu0 %v956
  %1588 = vmatpush.msra.mxu0 %v948
  %1589 = vmatpush.msra.mxu0 %v940
  %1590 = vmatpush.msra.mxu0 %v932
  %1591 = vmatpush.msra.mxu0 %v924
  %1592 = vmatpush.msra.mxu0 %v916
  %1593 = vmatpush.msra.mxu0 %v908
  %1594 = vmatpush.msra.mxu0 %v900
  %1595 = vmatmul.f32.gmra.mxu0 %v1423
  %v1596 = vpop.f32.mrf.mxu0
  %v1597 = vadd.f32 %v1577, %v1596
  %1598 = vdwg.mxu0
  %1599 = vmatpush.msra.mxu0 %v893
  %1600 = vmatpush.msra.mxu0 %v885
  %1601 = vmatpush.msra.mxu0 %v877
  %1602 = vmatpush.msra.mxu0 %v869
  %1603 = vmatpush.msra.mxu0 %v861
  %1604 = vmatpush.msra.mxu0 %v853
  %1605 = vmatpush.msra.mxu0 %v845
  %1606 = vmatpush.msra.mxu0 %v837
  %1607 = vmatpush.msra.mxu0 %v829
  %1608 = vmatpush.msra.mxu0 %v821
  %1609 = vmatpush.msra.mxu0 %v813
  %1610 = vmatpush.msra.mxu0 %v805
  %1611 = vmatpush.msra.mxu0 %v797
  %1612 = vmatpush.msra.mxu0 %v789
  %1613 = vmatpush.msra.mxu0 %v781
  %1614 = vmatpush.msra.mxu0 %v773
  %1615 = vmatmul.f32.gmra.mxu0 %v1392
  %v1616 = vpop.f32.mrf.mxu0
  %v1617 = vadd.f32 0.0, %v1616
  %1618 = vdwg.mxu0
  %1619 = vmatpush.msra.mxu0 %v1021
  %1620 = vmatpush.msra.mxu0 %v1013
  %1621 = vmatpush.msra.mxu0 %v1005
  %1622 = vmatpush.msra.mxu0 %v997
  %1623 = vmatpush.msra.mxu0 %v989
  %1624 = vmatpush.msra.mxu0 %v981
  %1625 = vmatpush.msra.mxu0 %v973
  %1626 = vmatpush.msra.mxu0 %v965
  %1627 = vmatpush.msra.mxu0 %v957
  %1628 = vmatpush.msra.mxu0 %v949
  %1629 = vmatpush.msra.mxu0 %v941
  %1630 = vmatpush.msra.mxu0 %v933
  %1631 = vmatpush.msra.mxu0 %v925
  %1632 = vmatpush.msra.mxu0 %v917
  %1633 = vmatpush.msra.mxu0 %v909
  %1634 = vmatpush.msra.mxu0 %v901
  %1635 = vmatmul.f32.gmra.mxu0 %v1423
  %v1636 = vpop.f32.mrf.mxu0
  %v1637 = vadd.f32 %v1617, %v1636
  %1638 = vdwg.mxu0
  %1639 = vmatpush.msra.mxu0 %v894
  %1640 = vmatpush.msra.mxu0 %v886
  %1641 = vmatpush.msra.mxu0 %v878
  %1642 = vmatpush.msra.mxu0 %v870
  %1643 = vmatpush.msra.mxu0 %v862
  %1644 = vmatpush.msra.mxu0 %v854
  %1645 = vmatpush.msra.mxu0 %v846
  %1646 = vmatpush.msra.mxu0 %v838
  %1647 = vmatpush.msra.mxu0 %v830
  %1648 = vmatpush.msra.mxu0 %v822
  %1649 = vmatpush.msra.mxu0 %v814
  %1650 = vmatpush.msra.mxu0 %v806
  %1651 = vmatpush.msra.mxu0 %v798
  %1652 = vmatpush.msra.mxu0 %v790
  %1653 = vmatpush.msra.mxu0 %v782
  %1654 = vmatpush.msra.mxu0 %v774
  %1655 = vmatmul.f32.gmra.mxu0 %v1392
  %v1656 = vpop.f32.mrf.mxu0
  %v1657 = vadd.f32 0.0, %v1656
  %1658 = vdwg.mxu0
  %1659 = vmatpush.msra.mxu0 %v1022
  %1660 = vmatpush.msra.mxu0 %v1014
  %1661 = vmatpush.msra.mxu0 %v1006
  %1662 = vmatpush.msra.mxu0 %v998
  %1663 = vmatpush.msra.mxu0 %v990
  %1664 = vmatpush.msra.mxu0 %v982
  %1665 = vmatpush.msra.mxu0 %v974
  %1666 = vmatpush.msra.mxu0 %v966
  %1667 = vmatpush.msra.mxu0 %v958
  %1668 = vmatpush.msra.mxu0 %v950
  %1669 = vmatpush.msra.mxu0 %v942
  %1670 = vmatpush.msra.mxu0 %v934
  %1671 = vmatpush.msra.mxu0 %v926
  %1672 = vmatpush.msra.mxu0 %v918
  %1673 = vmatpush.msra.mxu0 %v910
  %1674 = vmatpush.msra.mxu0 %v902
  %1675 = vmatmul.f32.gmra.mxu0 %v1423
  %v1676 = vpop.f32.mrf.mxu0
  %v1677 = vadd.f32 %v1657, %v1676
  %1678 = vdwg.mxu0
  %1679 = vmatpush.msra.mxu0 %v895
  %1680 = vmatpush.msra.mxu0 %v887
  %1681 = vmatpush.msra.mxu0 %v879
  %1682 = vmatpush.msra.mxu0 %v871
  %1683 = vmatpush.msra.mxu0 %v863
  %1684 = vmatpush.msra.mxu0 %v855
  %1685 = vmatpush.msra.mxu0 %v847
  %1686 = vmatpush.msra.mxu0 %v839
  %1687 = vmatpush.msra.mxu0 %v831
  %1688 = vmatpush.msra.mxu0 %v823
  %1689 = vmatpush.msra.mxu0 %v815
  %1690 = vmatpush.msra.mxu0 %v807
  %1691 = vmatpush.msra.mxu0 %v799
  %1692 = vmatpush.msra.mxu0 %v791
  %1693 = vmatpush.msra.mxu0 %v783
  %1694 = vmatpush.msra.mxu0 %v775
  %1695 = vmatmul.f32.gmra.mxu0 %v1392
  %v1696 = vpop.f32.mrf.mxu0
  %v1697 = vadd.f32 0.0, %v1696
  %1698 = vdwg.mxu0
  %1699 = vmatpush.msra.mxu0 %v1023
  %1700 = vmatpush.msra.mxu0 %v1015
  %1701 = vmatpush.msra.mxu0 %v1007
  %1702 = vmatpush.msra.mxu0 %v999
  %1703 = vmatpush.msra.mxu0 %v991
  %1704 = vmatpush.msra.mxu0 %v983
  %1705 = vmatpush.msra.mxu0 %v975
  %1706 = vmatpush.msra.mxu0 %v967
  %1707 = vmatpush.msra.mxu0 %v959
  %1708 = vmatpush.msra.mxu0 %v951
  %1709 = vmatpush.msra.mxu0 %v943
  %1710 = vmatpush.msra.mxu0 %v935
  %1711 = vmatpush.msra.mxu0 %v927
  %1712 = vmatpush.msra.mxu0 %v919
  %1713 = vmatpush.msra.mxu0 %v911
  %1714 = vmatpush.msra.mxu0 %v903
  %1715 = vmatmul.f32.gmra.mxu0 %v1423
  %v1716 = vpop.f32.mrf.mxu0
  %v1717 = vadd.f32 %v1697, %v1716
  %1718 = vdwg.mxu0
  %1719 = vmatpush.msra.mxu0 %v896
  %1720 = vmatpush.msra.mxu0 %v888
  %1721 = vmatpush.msra.mxu0 %v880
  %1722 = vmatpush.msra.mxu0 %v872
  %1723 = vmatpush.msra.mxu0 %v864
  %1724 = vmatpush.msra.mxu0 %v856
  %1725 = vmatpush.msra.mxu0 %v848
  %1726 = vmatpush.msra.mxu0 %v840
  %1727 = vmatpush.msra.mxu0 %v832
  %1728 = vmatpush.msra.mxu0 %v824
  %1729 = vmatpush.msra.mxu0 %v816
  %1730 = vmatpush.msra.mxu0 %v808
  %1731 = vmatpush.msra.mxu0 %v800
  %1732 = vmatpush.msra.mxu0 %v792
  %1733 = vmatpush.msra.mxu0 %v784
  %1734 = vmatpush.msra.mxu0 %v776
  %1735 = vmatmul.f32.gmra.mxu0 %v1392
  %v1736 = vpop.f32.mrf.mxu0
  %v1737 = vadd.f32 0.0, %v1736
  %1738 = vdwg.mxu0
  %1739 = vmatpush.msra.mxu0 %v1024
  %1740 = vmatpush.msra.mxu0 %v1016
  %1741 = vmatpush.msra.mxu0 %v1008
  %1742 = vmatpush.msra.mxu0 %v1000
  %1743 = vmatpush.msra.mxu0 %v992
  %1744 = vmatpush.msra.mxu0 %v984
  %1745 = vmatpush.msra.mxu0 %v976
  %1746 = vmatpush.msra.mxu0 %v968
  %1747 = vmatpush.msra.mxu0 %v960
  %1748 = vmatpush.msra.mxu0 %v952
  %1749 = vmatpush.msra.mxu0 %v944
  %1750 = vmatpush.msra.mxu0 %v936
  %1751 = vmatpush.msra.mxu0 %v928
  %1752 = vmatpush.msra.mxu0 %v920
  %1753 = vmatpush.msra.mxu0 %v912
  %1754 = vmatpush.msra.mxu0 %v904
  %1755 = vmatmul.f32.gmra.mxu0 %v1423
  %v1756 = vpop.f32.mrf.mxu0
  %v1757 = vadd.f32 %v1737, %v1756
  %1758 = vdwg.mxu0
  %v1759 = vadd.f32 %v505, %v681
  %v1760 = vadd.f32 %v546, %v701
  %v1761 = vadd.f32 %v587, %v721
  %v1762 = vadd.f32 %v628, %v741
  %v1763 = vadd.f32 %v1759, %v1477
  %v1764 = vadd.f32 %v1760, %v1517
  %v1765 = vadd.f32 %v1761, %v1557
  %v1766 = vadd.f32 %v1762, %v1597
  %v1767 = vmul.f32 %v1763, 0.5
  %v1768 = vtanh.pop %v1767
  %v1769 = vadd.f32 %v1768, 1.0
  %v1770 = vmul.f32 %v1769, 0.5
  %v1771 = vmul.f32 %v1764, 0.5
  %v1772 = vtanh.pop %v1771
  %v1773 = vadd.f32 %v1772, 1.0
  %v1774 = vmul.f32 %v1773, 0.5
  %v1775 = vtanh.pop %v1765
  %v1776 = vmul.f32 %v1766, 0.5
  %v1777 = vtanh.pop %v1776
  %v1778 = vadd.f32 %v1777, 1.0
  %v1779 = vmul.f32 %v1778, 0.5
  %v1780 = vmul.f32 %v1774, %v1390
  %v1781 = vmul.f32 %v1770, %v1775
  %v1782 = vadd.f32 %v1780, %v1781
  %v1783 = vtanh.pop %v1782
  %v1784 = vmul.f32 %v1779, %v1783
  %v1785 = vadd.f32 %v1637, %v1394
  %v1786 = vadd.f32 %v1677, %v1395
  %v1787 = vadd.f32 %v1717, %v1396
  %v1788 = vadd.f32 %v1757, %v1397
  %v1789 = vmul.f32 %v1785, 0.5
  %v1790 = vtanh.pop %v1789
  %v1791 = vadd.f32 %v1790, 1.0
  %v1792 = vmul.f32 %v1791, 0.5
  %v1793 = vmul.f32 %v1786, 0.5
  %v1794 = vtanh.pop %v1793
  %v1795 = vadd.f32 %v1794, 1.0
  %v1796 = vmul.f32 %v1795, 0.5
  %v1797 = vtanh.pop %v1787
  %v1798 = vmul.f32 %v1788, 0.5
  %v1799 = vtanh.pop %v1798
  %v1800 = vadd.f32 %v1799, 1.0
  %v1801 = vmul.f32 %v1800, 0.5
  %v1802 = vmul.f32 %v1796, %v1421
  %v1803 = vmul.f32 %v1792, %v1797
  %v1804 = vadd.f32 %v1802, %v1803
  %v1805 = vtanh.pop %v1804
  %v1806 = vmul.f32 %v1801, %v1805
  %1807 = vset.pattern.permute.xlu0 3
  %1808 = vperm.xlu0 %1807, %v44
  %v1809 = vpop.permute.xlu0 %1808
  %v1811 = vmul.f32 %v1806, %v1809
  %1812 = vst [vmem:[%s12 + $0x8] sm:$0xff] %v1811
  %v1813 = vmul.f32 %v1811, %v768
  %1814 = vadd.xlane.f32.xlu0 %v1813
  %v1815 = vpop.xlane.xlu0 %1814
  %v1816 = vsub.f32 0.0, %v1815
  %v1817 = vmul.f32 %v1816, 1.442695
  %v1818 = vpow.pop %v1817
  %v1819 = vmul.f32 %v1818, %v1811
  %v1820 = vadd.f32 %v1437, %v1819
  %v1821 = vadd.f32 %v1438, %v1818
  %1822 = vmatpush.msra.mxu0 %v889
  %1823 = vmatpush.msra.mxu0 %v881
  %1824 = vmatpush.msra.mxu0 %v873
  %1825 = vmatpush.msra.mxu0 %v865
  %1826 = vmatpush.msra.mxu0 %v857
  %1827 = vmatpush.msra.mxu0 %v849
  %1828 = vmatpush.msra.mxu0 %v841
  %1829 = vmatpush.msra.mxu0 %v833
  %1830 = vmatpush.msra.mxu0 %v825
  %1831 = vmatpush.msra.mxu0 %v817
  %1832 = vmatpush.msra.mxu0 %v809
  %1833 = vmatpush.msra.mxu0 %v801
  %1834 = vmatpush.msra.mxu0 %v793
  %1835 = vmatpush.msra.mxu0 %v785
  %1836 = vmatpush.msra.mxu0 %v777
  %1837 = vmatpush.msra.mxu0 %v769
  %1838 = vmatmul.f32.gmra.mxu0 %v1784
  %v1839 = vpop.f32.mrf.mxu0
  %v1840 = vadd.f32 0.0, %v1839
  %1841 = vdwg.mxu0
  %1842 = vmatpush.msra.mxu0 %v1017
  %1843 = vmatpush.msra.mxu0 %v1009
  %1844 = vmatpush.msra.mxu0 %v1001
  %1845 = vmatpush.msra.mxu0 %v993
  %1846 = vmatpush.msra.mxu0 %v985
  %1847 = vmatpush.msra.mxu0 %v977
  %1848 = vmatpush.msra.mxu0 %v969
  %1849 = vmatpush.msra.mxu0 %v961
  %1850 = vmatpush.msra.mxu0 %v953
  %1851 = vmatpush.msra.mxu0 %v945
  %1852 = vmatpush.msra.mxu0 %v937
  %1853 = vmatpush.msra.mxu0 %v929
  %1854 = vmatpush.msra.mxu0 %v921
  %1855 = vmatpush.msra.mxu0 %v913
  %1856 = vmatpush.msra.mxu0 %v905
  %1857 = vmatpush.msra.mxu0 %v897
  %1858 = vmatmul.f32.gmra.mxu0 %v1806
  %v1859 = vpop.f32.mrf.mxu0
  %v1860 = vadd.f32 %v1840, %v1859
  %1861 = vdwg.mxu0
  %1862 = vmatpush.msra.mxu0 %v890
  %1863 = vmatpush.msra.mxu0 %v882
  %1864 = vmatpush.msra.mxu0 %v874
  %1865 = vmatpush.msra.mxu0 %v866
  %1866 = vmatpush.msra.mxu0 %v858
  %1867 = vmatpush.msra.mxu0 %v850
  %1868 = vmatpush.msra.mxu0 %v842
  %1869 = vmatpush.msra.mxu0 %v834
  %1870 = vmatpush.msra.mxu0 %v826
  %1871 = vmatpush.msra.mxu0 %v818
  %1872 = vmatpush.msra.mxu0 %v810
  %1873 = vmatpush.msra.mxu0 %v802
  %1874 = vmatpush.msra.mxu0 %v794
  %1875 = vmatpush.msra.mxu0 %v786
  %1876 = vmatpush.msra.mxu0 %v778
  %1877 = vmatpush.msra.mxu0 %v770
  %1878 = vmatmul.f32.gmra.mxu0 %v1784
  %v1879 = vpop.f32.mrf.mxu0
  %v1880 = vadd.f32 0.0, %v1879
  %1881 = vdwg.mxu0
  %1882 = vmatpush.msra.mxu0 %v1018
  %1883 = vmatpush.msra.mxu0 %v1010
  %1884 = vmatpush.msra.mxu0 %v1002
  %1885 = vmatpush.msra.mxu0 %v994
  %1886 = vmatpush.msra.mxu0 %v986
  %1887 = vmatpush.msra.mxu0 %v978
  %1888 = vmatpush.msra.mxu0 %v970
  %1889 = vmatpush.msra.mxu0 %v962
  %1890 = vmatpush.msra.mxu0 %v954
  %1891 = vmatpush.msra.mxu0 %v946
  %1892 = vmatpush.msra.mxu0 %v938
  %1893 = vmatpush.msra.mxu0 %v930
  %1894 = vmatpush.msra.mxu0 %v922
  %1895 = vmatpush.msra.mxu0 %v914
  %1896 = vmatpush.msra.mxu0 %v906
  %1897 = vmatpush.msra.mxu0 %v898
  %1898 = vmatmul.f32.gmra.mxu0 %v1806
  %v1899 = vpop.f32.mrf.mxu0
  %v1900 = vadd.f32 %v1880, %v1899
  %1901 = vdwg.mxu0
  %1902 = vmatpush.msra.mxu0 %v891
  %1903 = vmatpush.msra.mxu0 %v883
  %1904 = vmatpush.msra.mxu0 %v875
  %1905 = vmatpush.msra.mxu0 %v867
  %1906 = vmatpush.msra.mxu0 %v859
  %1907 = vmatpush.msra.mxu0 %v851
  %1908 = vmatpush.msra.mxu0 %v843
  %1909 = vmatpush.msra.mxu0 %v835
  %1910 = vmatpush.msra.mxu0 %v827
  %1911 = vmatpush.msra.mxu0 %v819
  %1912 = vmatpush.msra.mxu0 %v811
  %1913 = vmatpush.msra.mxu0 %v803
  %1914 = vmatpush.msra.mxu0 %v795
  %1915 = vmatpush.msra.mxu0 %v787
  %1916 = vmatpush.msra.mxu0 %v779
  %1917 = vmatpush.msra.mxu0 %v771
  %1918 = vmatmul.f32.gmra.mxu0 %v1784
  %v1919 = vpop.f32.mrf.mxu0
  %v1920 = vadd.f32 0.0, %v1919
  %1921 = vdwg.mxu0
  %1922 = vmatpush.msra.mxu0 %v1019
  %1923 = vmatpush.msra.mxu0 %v1011
  %1924 = vmatpush.msra.mxu0 %v1003
  %1925 = vmatpush.msra.mxu0 %v995
  %1926 = vmatpush.msra.mxu0 %v987
  %1927 = vmatpush.msra.mxu0 %v979
  %1928 = vmatpush.msra.mxu0 %v971
  %1929 = vmatpush.msra.mxu0 %v963
  %1930 = vmatpush.msra.mxu0 %v955
  %1931 = vmatpush.msra.mxu0 %v947
  %1932 = vmatpush.msra.mxu0 %v939
  %1933 = vmatpush.msra.mxu0 %v931
  %1934 = vmatpush.msra.mxu0 %v923
  %1935 = vmatpush.msra.mxu0 %v915
  %1936 = vmatpush.msra.mxu0 %v907
  %1937 = vmatpush.msra.mxu0 %v899
  %1938 = vmatmul.f32.gmra.mxu0 %v1806
  %v1939 = vpop.f32.mrf.mxu0
  %v1940 = vadd.f32 %v1920, %v1939
  %1941 = vdwg.mxu0
  %1942 = vmatpush.msra.mxu0 %v892
  %1943 = vmatpush.msra.mxu0 %v884
  %1944 = vmatpush.msra.mxu0 %v876
  %1945 = vmatpush.msra.mxu0 %v868
  %1946 = vmatpush.msra.mxu0 %v860
  %1947 = vmatpush.msra.mxu0 %v852
  %1948 = vmatpush.msra.mxu0 %v844
  %1949 = vmatpush.msra.mxu0 %v836
  %1950 = vmatpush.msra.mxu0 %v828
  %1951 = vmatpush.msra.mxu0 %v820
  %1952 = vmatpush.msra.mxu0 %v812
  %1953 = vmatpush.msra.mxu0 %v804
  %1954 = vmatpush.msra.mxu0 %v796
  %1955 = vmatpush.msra.mxu0 %v788
  %1956 = vmatpush.msra.mxu0 %v780
  %1957 = vmatpush.msra.mxu0 %v772
  %1958 = vmatmul.f32.gmra.mxu0 %v1784
  %v1959 = vpop.f32.mrf.mxu0
  %v1960 = vadd.f32 0.0, %v1959
  %1961 = vdwg.mxu0
  %1962 = vmatpush.msra.mxu0 %v1020
  %1963 = vmatpush.msra.mxu0 %v1012
  %1964 = vmatpush.msra.mxu0 %v1004
  %1965 = vmatpush.msra.mxu0 %v996
  %1966 = vmatpush.msra.mxu0 %v988
  %1967 = vmatpush.msra.mxu0 %v980
  %1968 = vmatpush.msra.mxu0 %v972
  %1969 = vmatpush.msra.mxu0 %v964
  %1970 = vmatpush.msra.mxu0 %v956
  %1971 = vmatpush.msra.mxu0 %v948
  %1972 = vmatpush.msra.mxu0 %v940
  %1973 = vmatpush.msra.mxu0 %v932
  %1974 = vmatpush.msra.mxu0 %v924
  %1975 = vmatpush.msra.mxu0 %v916
  %1976 = vmatpush.msra.mxu0 %v908
  %1977 = vmatpush.msra.mxu0 %v900
  %1978 = vmatmul.f32.gmra.mxu0 %v1806
  %v1979 = vpop.f32.mrf.mxu0
  %v1980 = vadd.f32 %v1960, %v1979
  %1981 = vdwg.mxu0
  %1982 = vmatpush.msra.mxu0 %v893
  %1983 = vmatpush.msra.mxu0 %v885
  %1984 = vmatpush.msra.mxu0 %v877
  %1985 = vmatpush.msra.mxu0 %v869
  %1986 = vmatpush.msra.mxu0 %v861
  %1987 = vmatpush.msra.mxu0 %v853
  %1988 = vmatpush.msra.mxu0 %v845
  %1989 = vmatpush.msra.mxu0 %v837
  %1990 = vmatpush.msra.mxu0 %v829
  %1991 = vmatpush.msra.mxu0 %v821
  %1992 = vmatpush.msra.mxu0 %v813
  %1993 = vmatpush.msra.mxu0 %v805
  %1994 = vmatpush.msra.mxu0 %v797
  %1995 = vmatpush.msra.mxu0 %v789
  %1996 = vmatpush.msra.mxu0 %v781
  %1997 = vmatpush.msra.mxu0 %v773
  %1998 = vmatmul.f32.gmra.mxu0 %v1784
  %v1999 = vpop.f32.mrf.mxu0
  %v2000 = vadd.f32 0.0, %v1999
  %2001 = vdwg.mxu0
  %2002 = vmatpush.msra.mxu0 %v1021
  %2003 = vmatpush.msra.mxu0 %v1013
  %2004 = vmatpush.msra.mxu0 %v1005
  %2005 = vmatpush.msra.mxu0 %v997
  %2006 = vmatpush.msra.mxu0 %v989
  %2007 = vmatpush.msra.mxu0 %v981
  %2008 = vmatpush.msra.mxu0 %v973
  %2009 = vmatpush.msra.mxu0 %v965
  %2010 = vmatpush.msra.mxu0 %v957
  %2011 = vmatpush.msra.mxu0 %v949
  %2012 = vmatpush.msra.mxu0 %v941
  %2013 = vmatpush.msra.mxu0 %v933
  %2014 = vmatpush.msra.mxu0 %v925
  %2015 = vmatpush.msra.mxu0 %v917
  %2016 = vmatpush.msra.mxu0 %v909
  %2017 = vmatpush.msra.mxu0 %v901
  %2018 = vmatmul.f32.gmra.mxu0 %v1806
  %v2019 = vpop.f32.mrf.mxu0
  %v2020 = vadd.f32 %v2000, %v2019
  %2021 = vdwg.mxu0
  %2022 = vmatpush.msra.mxu0 %v894
  %2023 = vmatpush.msra.mxu0 %v886
  %2024 = vmatpush.msra.mxu0 %v878
  %2025 = vmatpush.msra.mxu0 %v870
  %2026 = vmatpush.msra.mxu0 %v862
  %2027 = vmatpush.msra.mxu0 %v854
  %2028 = vmatpush.msra.mxu0 %v846
  %2029 = vmatpush.msra.mxu0 %v838
  %2030 = vmatpush.msra.mxu0 %v830
  %2031 = vmatpush.msra.mxu0 %v822
  %2032 = vmatpush.msra.mxu0 %v814
  %2033 = vmatpush.msra.mxu0 %v806
  %2034 = vmatpush.msra.mxu0 %v798
  %2035 = vmatpush.msra.mxu0 %v790
  %2036 = vmatpush.msra.mxu0 %v782
  %2037 = vmatpush.msra.mxu0 %v774
  %2038 = vmatmul.f32.gmra.mxu0 %v1784
  %v2039 = vpop.f32.mrf.mxu0
  %v2040 = vadd.f32 0.0, %v2039
  %2041 = vdwg.mxu0
  %2042 = vmatpush.msra.mxu0 %v1022
  %2043 = vmatpush.msra.mxu0 %v1014
  %2044 = vmatpush.msra.mxu0 %v1006
  %2045 = vmatpush.msra.mxu0 %v998
  %2046 = vmatpush.msra.mxu0 %v990
  %2047 = vmatpush.msra.mxu0 %v982
  %2048 = vmatpush.msra.mxu0 %v974
  %2049 = vmatpush.msra.mxu0 %v966
  %2050 = vmatpush.msra.mxu0 %v958
  %2051 = vmatpush.msra.mxu0 %v950
  %2052 = vmatpush.msra.mxu0 %v942
  %2053 = vmatpush.msra.mxu0 %v934
  %2054 = vmatpush.msra.mxu0 %v926
  %2055 = vmatpush.msra.mxu0 %v918
  %2056 = vmatpush.msra.mxu0 %v910
  %2057 = vmatpush.msra.mxu0 %v902
  %2058 = vmatmul.f32.gmra.mxu0 %v1806
  %v2059 = vpop.f32.mrf.mxu0
  %v2060 = vadd.f32 %v2040, %v2059
  %2061 = vdwg.mxu0
  %2062 = vmatpush.msra.mxu0 %v895
  %2063 = vmatpush.msra.mxu0 %v887
  %2064 = vmatpush.msra.mxu0 %v879
  %2065 = vmatpush.msra.mxu0 %v871
  %2066 = vmatpush.msra.mxu0 %v863
  %2067 = vmatpush.msra.mxu0 %v855
  %2068 = vmatpush.msra.mxu0 %v847
  %2069 = vmatpush.msra.mxu0 %v839
  %2070 = vmatpush.msra.mxu0 %v831
  %2071 = vmatpush.msra.mxu0 %v823
  %2072 = vmatpush.msra.mxu0 %v815
  %2073 = vmatpush.msra.mxu0 %v807
  %2074 = vmatpush.msra.mxu0 %v799
  %2075 = vmatpush.msra.mxu0 %v791
  %2076 = vmatpush.msra.mxu0 %v783
  %2077 = vmatpush.msra.mxu0 %v775
  %2078 = vmatmul.f32.gmra.mxu0 %v1784
  %v2079 = vpop.f32.mrf.mxu0
  %v2080 = vadd.f32 0.0, %v2079
  %2081 = vdwg.mxu0
  %2082 = vmatpush.msra.mxu0 %v1023
  %2083 = vmatpush.msra.mxu0 %v1015
  %2084 = vmatpush.msra.mxu0 %v1007
  %2085 = vmatpush.msra.mxu0 %v999
  %2086 = vmatpush.msra.mxu0 %v991
  %2087 = vmatpush.msra.mxu0 %v983
  %2088 = vmatpush.msra.mxu0 %v975
  %2089 = vmatpush.msra.mxu0 %v967
  %2090 = vmatpush.msra.mxu0 %v959
  %2091 = vmatpush.msra.mxu0 %v951
  %2092 = vmatpush.msra.mxu0 %v943
  %2093 = vmatpush.msra.mxu0 %v935
  %2094 = vmatpush.msra.mxu0 %v927
  %2095 = vmatpush.msra.mxu0 %v919
  %2096 = vmatpush.msra.mxu0 %v911
  %2097 = vmatpush.msra.mxu0 %v903
  %2098 = vmatmul.f32.gmra.mxu0 %v1806
  %v2099 = vpop.f32.mrf.mxu0
  %v2100 = vadd.f32 %v2080, %v2099
  %2101 = vdwg.mxu0
  %2102 = vmatpush.msra.mxu0 %v896
  %2103 = vmatpush.msra.mxu0 %v888
  %2104 = vmatpush.msra.mxu0 %v880
  %2105 = vmatpush.msra.mxu0 %v872
  %2106 = vmatpush.msra.mxu0 %v864
  %2107 = vmatpush.msra.mxu0 %v856
  %2108 = vmatpush.msra.mxu0 %v848
  %2109 = vmatpush.msra.mxu0 %v840
  %2110 = vmatpush.msra.mxu0 %v832
  %2111 = vmatpush.msra.mxu0 %v824
  %2112 = vmatpush.msra.mxu0 %v816
  %2113 = vmatpush.msra.mxu0 %v808
  %2114 = vmatpush.msra.mxu0 %v800
  %2115 = vmatpush.msra.mxu0 %v792
  %2116 = vmatpush.msra.mxu0 %v784
  %2117 = vmatpush.msra.mxu0 %v776
  %2118 = vmatmul.f32.gmra.mxu0 %v1784
  %v2119 = vpop.f32.mrf.mxu0
  %v2120 = vadd.f32 0.0, %v2119
  %2121 = vdwg.mxu0
  %2122 = vmatpush.msra.mxu0 %v1024
  %2123 = vmatpush.msra.mxu0 %v1016
  %2124 = vmatpush.msra.mxu0 %v1008
  %2125 = vmatpush.msra.mxu0 %v1000
  %2126 = vmatpush.msra.mxu0 %v992
  %2127 = vmatpush.msra.mxu0 %v984
  %2128 = vmatpush.msra.mxu0 %v976
  %2129 = vmatpush.msra.mxu0 %v968
  %2130 = vmatpush.msra.mxu0 %v960
  %2131 = vmatpush.msra.mxu0 %v952
  %2132 = vmatpush.msra.mxu0 %v944
  %2133 = vmatpush.msra.mxu0 %v936
  %2134 = vmatpush.msra.mxu0 %v928
  %2135 = vmatpush.msra.mxu0 %v920
  %2136 = vmatpush.msra.mxu0 %v912
  %2137 = vmatpush.msra.mxu0 %v904
  %2138 = vmatmul.f32.gmra.mxu0 %v1806
  %v2139 = vpop.f32.mrf.mxu0
  %v2140 = vadd.f32 %v2120, %v2139
  %2141 = vdwg.mxu0
  %v2142 = vadd.f32 %v508, %v681
  %v2143 = vadd.f32 %v549, %v701
  %v2144 = vadd.f32 %v590, %v721
  %v2145 = vadd.f32 %v631, %v741
  %v2146 = vadd.f32 %v2142, %v1860
  %v2147 = vadd.f32 %v2143, %v1900
  %v2148 = vadd.f32 %v2144, %v1940
  %v2149 = vadd.f32 %v2145, %v1980
  %v2150 = vmul.f32 %v2146, 0.5
  %v2151 = vtanh.pop %v2150
  %v2152 = vadd.f32 %v2151, 1.0
  %v2153 = vmul.f32 %v2152, 0.5
  %v2154 = vmul.f32 %v2147, 0.5
  %v2155 = vtanh.pop %v2154
  %v2156 = vadd.f32 %v2155, 1.0
  %v2157 = vmul.f32 %v2156, 0.5
  %v2158 = vtanh.pop %v2148
  %v2159 = vmul.f32 %v2149, 0.5
  %v2160 = vtanh.pop %v2159
  %v2161 = vadd.f32 %v2160, 1.0
  %v2162 = vmul.f32 %v2161, 0.5
  %v2163 = vmul.f32 %v2157, %v1782
  %v2164 = vmul.f32 %v2153, %v2158
  %v2165 = vadd.f32 %v2163, %v2164
  %v2166 = vtanh.pop %v2165
  %v2167 = vmul.f32 %v2162, %v2166
  %v2168 = vadd.f32 %v2020, %v1394
  %v2169 = vadd.f32 %v2060, %v1395
  %v2170 = vadd.f32 %v2100, %v1396
  %v2171 = vadd.f32 %v2140, %v1397
  %v2172 = vmul.f32 %v2168, 0.5
  %v2173 = vtanh.pop %v2172
  %v2174 = vadd.f32 %v2173, 1.0
  %v2175 = vmul.f32 %v2174, 0.5
  %v2176 = vmul.f32 %v2169, 0.5
  %v2177 = vtanh.pop %v2176
  %v2178 = vadd.f32 %v2177, 1.0
  %v2179 = vmul.f32 %v2178, 0.5
  %v2180 = vtanh.pop %v2170
  %v2181 = vmul.f32 %v2171, 0.5
  %v2182 = vtanh.pop %v2181
  %v2183 = vadd.f32 %v2182, 1.0
  %v2184 = vmul.f32 %v2183, 0.5
  %v2185 = vmul.f32 %v2179, %v1804
  %v2186 = vmul.f32 %v2175, %v2180
  %v2187 = vadd.f32 %v2185, %v2186
  %v2188 = vtanh.pop %v2187
  %v2189 = vmul.f32 %v2184, %v2188
  %2190 = vset.pattern.permute.xlu0 3
  %2191 = vperm.xlu0 %2190, %v45
  %v2192 = vpop.permute.xlu0 %2191
  %v2194 = vmul.f32 %v2189, %v2192
  %2195 = vst [vmem:[%s12 + $0x10] sm:$0xff] %v2194
  %v2196 = vmul.f32 %v2194, %v768
  %2197 = vadd.xlane.f32.xlu0 %v2196
  %v2198 = vpop.xlane.xlu0 %2197
  %v2199 = vsub.f32 0.0, %v2198
  %v2200 = vmul.f32 %v2199, 1.442695
  %v2201 = vpow.pop %v2200
  %v2202 = vmul.f32 %v2201, %v2194
  %v2203 = vadd.f32 %v1820, %v2202
  %v2204 = vadd.f32 %v1821, %v2201
  %2205 = vmatpush.msra.mxu0 %v889
  %2206 = vmatpush.msra.mxu0 %v881
  %2207 = vmatpush.msra.mxu0 %v873
  %2208 = vmatpush.msra.mxu0 %v865
  %2209 = vmatpush.msra.mxu0 %v857
  %2210 = vmatpush.msra.mxu0 %v849
  %2211 = vmatpush.msra.mxu0 %v841
  %2212 = vmatpush.msra.mxu0 %v833
  %2213 = vmatpush.msra.mxu0 %v825
  %2214 = vmatpush.msra.mxu0 %v817
  %2215 = vmatpush.msra.mxu0 %v809
  %2216 = vmatpush.msra.mxu0 %v801
  %2217 = vmatpush.msra.mxu0 %v793
  %2218 = vmatpush.msra.mxu0 %v785
  %2219 = vmatpush.msra.mxu0 %v777
  %2220 = vmatpush.msra.mxu0 %v769
  %2221 = vmatmul.f32.gmra.mxu0 %v2167
  %v2222 = vpop.f32.mrf.mxu0
  %v2223 = vadd.f32 0.0, %v2222
  %2224 = vdwg.mxu0
  %2225 = vmatpush.msra.mxu0 %v1017
  %2226 = vmatpush.msra.mxu0 %v1009
  %2227 = vmatpush.msra.mxu0 %v1001
  %2228 = vmatpush.msra.mxu0 %v993
  %2229 = vmatpush.msra.mxu0 %v985
  %2230 = vmatpush.msra.mxu0 %v977
  %2231 = vmatpush.msra.mxu0 %v969
  %2232 = vmatpush.msra.mxu0 %v961
  %2233 = vmatpush.msra.mxu0 %v953
  %2234 = vmatpush.msra.mxu0 %v945
  %2235 = vmatpush.msra.mxu0 %v937
  %2236 = vmatpush.msra.mxu0 %v929
  %2237 = vmatpush.msra.mxu0 %v921
  %2238 = vmatpush.msra.mxu0 %v913
  %2239 = vmatpush.msra.mxu0 %v905
  %2240 = vmatpush.msra.mxu0 %v897
  %2241 = vmatmul.f32.gmra.mxu0 %v2189
  %v2242 = vpop.f32.mrf.mxu0
  %v2243 = vadd.f32 %v2223, %v2242
  %2244 = vdwg.mxu0
  %2245 = vmatpush.msra.mxu0 %v890
  %2246 = vmatpush.msra.mxu0 %v882
  %2247 = vmatpush.msra.mxu0 %v874
  %2248 = vmatpush.msra.mxu0 %v866
  %2249 = vmatpush.msra.mxu0 %v858
  %2250 = vmatpush.msra.mxu0 %v850
  %2251 = vmatpush.msra.mxu0 %v842
  %2252 = vmatpush.msra.mxu0 %v834
  %2253 = vmatpush.msra.mxu0 %v826
  %2254 = vmatpush.msra.mxu0 %v818
  %2255 = vmatpush.msra.mxu0 %v810
  %2256 = vmatpush.msra.mxu0 %v802
  %2257 = vmatpush.msra.mxu0 %v794
  %2258 = vmatpush.msra.mxu0 %v786
  %2259 = vmatpush.msra.mxu0 %v778
  %2260 = vmatpush.msra.mxu0 %v770
  %2261 = vmatmul.f32.gmra.mxu0 %v2167
  %v2262 = vpop.f32.mrf.mxu0
  %v2263 = vadd.f32 0.0, %v2262
  %2264 = vdwg.mxu0
  %2265 = vmatpush.msra.mxu0 %v1018
  %2266 = vmatpush.msra.mxu0 %v1010
  %2267 = vmatpush.msra.mxu0 %v1002
  %2268 = vmatpush.msra.mxu0 %v994
  %2269 = vmatpush.msra.mxu0 %v986
  %2270 = vmatpush.msra.mxu0 %v978
  %2271 = vmatpush.msra.mxu0 %v970
  %2272 = vmatpush.msra.mxu0 %v962
  %2273 = vmatpush.msra.mxu0 %v954
  %2274 = vmatpush.msra.mxu0 %v946
  %2275 = vmatpush.msra.mxu0 %v938
  %2276 = vmatpush.msra.mxu0 %v930
  %2277 = vmatpush.msra.mxu0 %v922
  %2278 = vmatpush.msra.mxu0 %v914
  %2279 = vmatpush.msra.mxu0 %v906
  %2280 = vmatpush.msra.mxu0 %v898
  %2281 = vmatmul.f32.gmra.mxu0 %v2189
  %v2282 = vpop.f32.mrf.mxu0
  %v2283 = vadd.f32 %v2263, %v2282
  %2284 = vdwg.mxu0
  %2285 = vmatpush.msra.mxu0 %v891
  %2286 = vmatpush.msra.mxu0 %v883
  %2287 = vmatpush.msra.mxu0 %v875
  %2288 = vmatpush.msra.mxu0 %v867
  %2289 = vmatpush.msra.mxu0 %v859
  %2290 = vmatpush.msra.mxu0 %v851
  %2291 = vmatpush.msra.mxu0 %v843
  %2292 = vmatpush.msra.mxu0 %v835
  %2293 = vmatpush.msra.mxu0 %v827
  %2294 = vmatpush.msra.mxu0 %v819
  %2295 = vmatpush.msra.mxu0 %v811
  %2296 = vmatpush.msra.mxu0 %v803
  %2297 = vmatpush.msra.mxu0 %v795
  %2298 = vmatpush.msra.mxu0 %v787
  %2299 = vmatpush.msra.mxu0 %v779
  %2300 = vmatpush.msra.mxu0 %v771
  %2301 = vmatmul.f32.gmra.mxu0 %v2167
  %v2302 = vpop.f32.mrf.mxu0
  %v2303 = vadd.f32 0.0, %v2302
  %2304 = vdwg.mxu0
  %2305 = vmatpush.msra.mxu0 %v1019
  %2306 = vmatpush.msra.mxu0 %v1011
  %2307 = vmatpush.msra.mxu0 %v1003
  %2308 = vmatpush.msra.mxu0 %v995
  %2309 = vmatpush.msra.mxu0 %v987
  %2310 = vmatpush.msra.mxu0 %v979
  %2311 = vmatpush.msra.mxu0 %v971
  %2312 = vmatpush.msra.mxu0 %v963
  %2313 = vmatpush.msra.mxu0 %v955
  %2314 = vmatpush.msra.mxu0 %v947
  %2315 = vmatpush.msra.mxu0 %v939
  %2316 = vmatpush.msra.mxu0 %v931
  %2317 = vmatpush.msra.mxu0 %v923
  %2318 = vmatpush.msra.mxu0 %v915
  %2319 = vmatpush.msra.mxu0 %v907
  %2320 = vmatpush.msra.mxu0 %v899
  %2321 = vmatmul.f32.gmra.mxu0 %v2189
  %v2322 = vpop.f32.mrf.mxu0
  %v2323 = vadd.f32 %v2303, %v2322
  %2324 = vdwg.mxu0
  %2325 = vmatpush.msra.mxu0 %v892
  %2326 = vmatpush.msra.mxu0 %v884
  %2327 = vmatpush.msra.mxu0 %v876
  %2328 = vmatpush.msra.mxu0 %v868
  %2329 = vmatpush.msra.mxu0 %v860
  %2330 = vmatpush.msra.mxu0 %v852
  %2331 = vmatpush.msra.mxu0 %v844
  %2332 = vmatpush.msra.mxu0 %v836
  %2333 = vmatpush.msra.mxu0 %v828
  %2334 = vmatpush.msra.mxu0 %v820
  %2335 = vmatpush.msra.mxu0 %v812
  %2336 = vmatpush.msra.mxu0 %v804
  %2337 = vmatpush.msra.mxu0 %v796
  %2338 = vmatpush.msra.mxu0 %v788
  %2339 = vmatpush.msra.mxu0 %v780
  %2340 = vmatpush.msra.mxu0 %v772
  %2341 = vmatmul.f32.gmra.mxu0 %v2167
  %v2342 = vpop.f32.mrf.mxu0
  %v2343 = vadd.f32 0.0, %v2342
  %2344 = vdwg.mxu0
  %2345 = vmatpush.msra.mxu0 %v1020
  %2346 = vmatpush.msra.mxu0 %v1012
  %2347 = vmatpush.msra.mxu0 %v1004
  %2348 = vmatpush.msra.mxu0 %v996
  %2349 = vmatpush.msra.mxu0 %v988
  %2350 = vmatpush.msra.mxu0 %v980
  %2351 = vmatpush.msra.mxu0 %v972
  %2352 = vmatpush.msra.mxu0 %v964
  %2353 = vmatpush.msra.mxu0 %v956
  %2354 = vmatpush.msra.mxu0 %v948
  %2355 = vmatpush.msra.mxu0 %v940
  %2356 = vmatpush.msra.mxu0 %v932
  %2357 = vmatpush.msra.mxu0 %v924
  %2358 = vmatpush.msra.mxu0 %v916
  %2359 = vmatpush.msra.mxu0 %v908
  %2360 = vmatpush.msra.mxu0 %v900
  %2361 = vmatmul.f32.gmra.mxu0 %v2189
  %v2362 = vpop.f32.mrf.mxu0
  %v2363 = vadd.f32 %v2343, %v2362
  %2364 = vdwg.mxu0
  %2365 = vmatpush.msra.mxu0 %v893
  %2366 = vmatpush.msra.mxu0 %v885
  %2367 = vmatpush.msra.mxu0 %v877
  %2368 = vmatpush.msra.mxu0 %v869
  %2369 = vmatpush.msra.mxu0 %v861
  %2370 = vmatpush.msra.mxu0 %v853
  %2371 = vmatpush.msra.mxu0 %v845
  %2372 = vmatpush.msra.mxu0 %v837
  %2373 = vmatpush.msra.mxu0 %v829
  %2374 = vmatpush.msra.mxu0 %v821
  %2375 = vmatpush.msra.mxu0 %v813
  %2376 = vmatpush.msra.mxu0 %v805
  %2377 = vmatpush.msra.mxu0 %v797
  %2378 = vmatpush.msra.mxu0 %v789
  %2379 = vmatpush.msra.mxu0 %v781
  %2380 = vmatpush.msra.mxu0 %v773
  %2381 = vmatmul.f32.gmra.mxu0 %v2167
  %v2382 = vpop.f32.mrf.mxu0
  %v2383 = vadd.f32 0.0, %v2382
  %2384 = vdwg.mxu0
  %2385 = vmatpush.msra.mxu0 %v1021
  %2386 = vmatpush.msra.mxu0 %v1013
  %2387 = vmatpush.msra.mxu0 %v1005
  %2388 = vmatpush.msra.mxu0 %v997
  %2389 = vmatpush.msra.mxu0 %v989
  %2390 = vmatpush.msra.mxu0 %v981
  %2391 = vmatpush.msra.mxu0 %v973
  %2392 = vmatpush.msra.mxu0 %v965
  %2393 = vmatpush.msra.mxu0 %v957
  %2394 = vmatpush.msra.mxu0 %v949
  %2395 = vmatpush.msra.mxu0 %v941
  %2396 = vmatpush.msra.mxu0 %v933
  %2397 = vmatpush.msra.mxu0 %v925
  %2398 = vmatpush.msra.mxu0 %v917
  %2399 = vmatpush.msra.mxu0 %v909
  %2400 = vmatpush.msra.mxu0 %v901
  %2401 = vmatmul.f32.gmra.mxu0 %v2189
  %v2402 = vpop.f32.mrf.mxu0
  %v2403 = vadd.f32 %v2383, %v2402
  %2404 = vdwg.mxu0
  %2405 = vmatpush.msra.mxu0 %v894
  %2406 = vmatpush.msra.mxu0 %v886
  %2407 = vmatpush.msra.mxu0 %v878
  %2408 = vmatpush.msra.mxu0 %v870
  %2409 = vmatpush.msra.mxu0 %v862
  %2410 = vmatpush.msra.mxu0 %v854
  %2411 = vmatpush.msra.mxu0 %v846
  %2412 = vmatpush.msra.mxu0 %v838
  %2413 = vmatpush.msra.mxu0 %v830
  %2414 = vmatpush.msra.mxu0 %v822
  %2415 = vmatpush.msra.mxu0 %v814
  %2416 = vmatpush.msra.mxu0 %v806
  %2417 = vmatpush.msra.mxu0 %v798
  %2418 = vmatpush.msra.mxu0 %v790
  %2419 = vmatpush.msra.mxu0 %v782
  %2420 = vmatpush.msra.mxu0 %v774
  %2421 = vmatmul.f32.gmra.mxu0 %v2167
  %v2422 = vpop.f32.mrf.mxu0
  %v2423 = vadd.f32 0.0, %v2422
  %2424 = vdwg.mxu0
  %2425 = vmatpush.msra.mxu0 %v1022
  %2426 = vmatpush.msra.mxu0 %v1014
  %2427 = vmatpush.msra.mxu0 %v1006
  %2428 = vmatpush.msra.mxu0 %v998
  %2429 = vmatpush.msra.mxu0 %v990
  %2430 = vmatpush.msra.mxu0 %v982
  %2431 = vmatpush.msra.mxu0 %v974
  %2432 = vmatpush.msra.mxu0 %v966
  %2433 = vmatpush.msra.mxu0 %v958
  %2434 = vmatpush.msra.mxu0 %v950
  %2435 = vmatpush.msra.mxu0 %v942
  %2436 = vmatpush.msra.mxu0 %v934
  %2437 = vmatpush.msra.mxu0 %v926
  %2438 = vmatpush.msra.mxu0 %v918
  %2439 = vmatpush.msra.mxu0 %v910
  %2440 = vmatpush.msra.mxu0 %v902
  %2441 = vmatmul.f32.gmra.mxu0 %v2189
  %v2442 = vpop.f32.mrf.mxu0
  %v2443 = vadd.f32 %v2423, %v2442
  %2444 = vdwg.mxu0
  %2445 = vmatpush.msra.mxu0 %v895
  %2446 = vmatpush.msra.mxu0 %v887
  %2447 = vmatpush.msra.mxu0 %v879
  %2448 = vmatpush.msra.mxu0 %v871
  %2449 = vmatpush.msra.mxu0 %v863
  %2450 = vmatpush.msra.mxu0 %v855
  %2451 = vmatpush.msra.mxu0 %v847
  %2452 = vmatpush.msra.mxu0 %v839
  %2453 = vmatpush.msra.mxu0 %v831
  %2454 = vmatpush.msra.mxu0 %v823
  %2455 = vmatpush.msra.mxu0 %v815
  %2456 = vmatpush.msra.mxu0 %v807
  %2457 = vmatpush.msra.mxu0 %v799
  %2458 = vmatpush.msra.mxu0 %v791
  %2459 = vmatpush.msra.mxu0 %v783
  %2460 = vmatpush.msra.mxu0 %v775
  %2461 = vmatmul.f32.gmra.mxu0 %v2167
  %v2462 = vpop.f32.mrf.mxu0
  %v2463 = vadd.f32 0.0, %v2462
  %2464 = vdwg.mxu0
  %2465 = vmatpush.msra.mxu0 %v1023
  %2466 = vmatpush.msra.mxu0 %v1015
  %2467 = vmatpush.msra.mxu0 %v1007
  %2468 = vmatpush.msra.mxu0 %v999
  %2469 = vmatpush.msra.mxu0 %v991
  %2470 = vmatpush.msra.mxu0 %v983
  %2471 = vmatpush.msra.mxu0 %v975
  %2472 = vmatpush.msra.mxu0 %v967
  %2473 = vmatpush.msra.mxu0 %v959
  %2474 = vmatpush.msra.mxu0 %v951
  %2475 = vmatpush.msra.mxu0 %v943
  %2476 = vmatpush.msra.mxu0 %v935
  %2477 = vmatpush.msra.mxu0 %v927
  %2478 = vmatpush.msra.mxu0 %v919
  %2479 = vmatpush.msra.mxu0 %v911
  %2480 = vmatpush.msra.mxu0 %v903
  %2481 = vmatmul.f32.gmra.mxu0 %v2189
  %v2482 = vpop.f32.mrf.mxu0
  %v2483 = vadd.f32 %v2463, %v2482
  %2484 = vdwg.mxu0
  %2485 = vmatpush.msra.mxu0 %v896
  %2486 = vmatpush.msra.mxu0 %v888
  %2487 = vmatpush.msra.mxu0 %v880
  %2488 = vmatpush.msra.mxu0 %v872
  %2489 = vmatpush.msra.mxu0 %v864
  %2490 = vmatpush.msra.mxu0 %v856
  %2491 = vmatpush.msra.mxu0 %v848
  %2492 = vmatpush.msra.mxu0 %v840
  %2493 = vmatpush.msra.mxu0 %v832
  %2494 = vmatpush.msra.mxu0 %v824
  %2495 = vmatpush.msra.mxu0 %v816
  %2496 = vmatpush.msra.mxu0 %v808
  %2497 = vmatpush.msra.mxu0 %v800
  %2498 = vmatpush.msra.mxu0 %v792
  %2499 = vmatpush.msra.mxu0 %v784
  %2500 = vmatpush.msra.mxu0 %v776
  %2501 = vmatmul.f32.gmra.mxu0 %v2167
  %v2502 = vpop.f32.mrf.mxu0
  %v2503 = vadd.f32 0.0, %v2502
  %2504 = vdwg.mxu0
  %2505 = vmatpush.msra.mxu0 %v1024
  %2506 = vmatpush.msra.mxu0 %v1016
  %2507 = vmatpush.msra.mxu0 %v1008
  %2508 = vmatpush.msra.mxu0 %v1000
  %2509 = vmatpush.msra.mxu0 %v992
  %2510 = vmatpush.msra.mxu0 %v984
  %2511 = vmatpush.msra.mxu0 %v976
  %2512 = vmatpush.msra.mxu0 %v968
  %2513 = vmatpush.msra.mxu0 %v960
  %2514 = vmatpush.msra.mxu0 %v952
  %2515 = vmatpush.msra.mxu0 %v944
  %2516 = vmatpush.msra.mxu0 %v936
  %2517 = vmatpush.msra.mxu0 %v928
  %2518 = vmatpush.msra.mxu0 %v920
  %2519 = vmatpush.msra.mxu0 %v912
  %2520 = vmatpush.msra.mxu0 %v904
  %2521 = vmatmul.f32.gmra.mxu0 %v2189
  %v2522 = vpop.f32.mrf.mxu0
  %v2523 = vadd.f32 %v2503, %v2522
  %2524 = vdwg.mxu0
  %v2525 = vadd.f32 %v511, %v681
  %v2526 = vadd.f32 %v552, %v701
  %v2527 = vadd.f32 %v593, %v721
  %v2528 = vadd.f32 %v634, %v741
  %v2529 = vadd.f32 %v2525, %v2243
  %v2530 = vadd.f32 %v2526, %v2283
  %v2531 = vadd.f32 %v2527, %v2323
  %v2532 = vadd.f32 %v2528, %v2363
  %v2533 = vmul.f32 %v2529, 0.5
  %v2534 = vtanh.pop %v2533
  %v2535 = vadd.f32 %v2534, 1.0
  %v2536 = vmul.f32 %v2535, 0.5
  %v2537 = vmul.f32 %v2530, 0.5
  %v2538 = vtanh.pop %v2537
  %v2539 = vadd.f32 %v2538, 1.0
  %v2540 = vmul.f32 %v2539, 0.5
  %v2541 = vtanh.pop %v2531
  %v2542 = vmul.f32 %v2532, 0.5
  %v2543 = vtanh.pop %v2542
  %v2544 = vadd.f32 %v2543, 1.0
  %v2545 = vmul.f32 %v2544, 0.5
  %v2546 = vmul.f32 %v2540, %v2165
  %v2547 = vmul.f32 %v2536, %v2541
  %v2548 = vadd.f32 %v2546, %v2547
  %v2549 = vtanh.pop %v2548
  %v2550 = vmul.f32 %v2545, %v2549
  %v2551 = vadd.f32 %v2403, %v1394
  %v2552 = vadd.f32 %v2443, %v1395
  %v2553 = vadd.f32 %v2483, %v1396
  %v2554 = vadd.f32 %v2523, %v1397
  %v2555 = vmul.f32 %v2551, 0.5
  %v2556 = vtanh.pop %v2555
  %v2557 = vadd.f32 %v2556, 1.0
  %v2558 = vmul.f32 %v2557, 0.5
  %v2559 = vmul.f32 %v2552, 0.5
  %v2560 = vtanh.pop %v2559
  %v2561 = vadd.f32 %v2560, 1.0
  %v2562 = vmul.f32 %v2561, 0.5
  %v2563 = vtanh.pop %v2553
  %v2564 = vmul.f32 %v2554, 0.5
  %v2565 = vtanh.pop %v2564
  %v2566 = vadd.f32 %v2565, 1.0
  %v2567 = vmul.f32 %v2566, 0.5
  %v2568 = vmul.f32 %v2562, %v2187
  %v2569 = vmul.f32 %v2558, %v2563
  %v2570 = vadd.f32 %v2568, %v2569
  %v2571 = vtanh.pop %v2570
  %v2572 = vmul.f32 %v2567, %v2571
  %2573 = vset.pattern.permute.xlu0 3
  %2574 = vperm.xlu0 %2573, %v46
  %v2575 = vpop.permute.xlu0 %2574
  %v2577 = vmul.f32 %v2572, %v2575
  %2578 = vst [vmem:[%s12 + $0x18] sm:$0xff] %v2577
  %v2579 = vmul.f32 %v2577, %v768
  %2580 = vadd.xlane.f32.xlu0 %v2579
  %v2581 = vpop.xlane.xlu0 %2580
  %v2582 = vsub.f32 0.0, %v2581
  %v2583 = vmul.f32 %v2582, 1.442695
  %v2584 = vpow.pop %v2583
  %v2585 = vmul.f32 %v2584, %v2577
  %v2586 = vadd.f32 %v2203, %v2585
  %v2587 = vadd.f32 %v2204, %v2584
  %2588 = vmatpush.msra.mxu0 %v889
  %2589 = vmatpush.msra.mxu0 %v881
  %2590 = vmatpush.msra.mxu0 %v873
  %2591 = vmatpush.msra.mxu0 %v865
  %2592 = vmatpush.msra.mxu0 %v857
  %2593 = vmatpush.msra.mxu0 %v849
  %2594 = vmatpush.msra.mxu0 %v841
  %2595 = vmatpush.msra.mxu0 %v833
  %2596 = vmatpush.msra.mxu0 %v825
  %2597 = vmatpush.msra.mxu0 %v817
  %2598 = vmatpush.msra.mxu0 %v809
  %2599 = vmatpush.msra.mxu0 %v801
  %2600 = vmatpush.msra.mxu0 %v793
  %2601 = vmatpush.msra.mxu0 %v785
  %2602 = vmatpush.msra.mxu0 %v777
  %2603 = vmatpush.msra.mxu0 %v769
  %2604 = vmatmul.f32.gmra.mxu0 %v2550
  %v2605 = vpop.f32.mrf.mxu0
  %v2606 = vadd.f32 0.0, %v2605
  %2607 = vdwg.mxu0
  %2608 = vmatpush.msra.mxu0 %v1017
  %2609 = vmatpush.msra.mxu0 %v1009
  %2610 = vmatpush.msra.mxu0 %v1001
  %2611 = vmatpush.msra.mxu0 %v993
  %2612 = vmatpush.msra.mxu0 %v985
  %2613 = vmatpush.msra.mxu0 %v977
  %2614 = vmatpush.msra.mxu0 %v969
  %2615 = vmatpush.msra.mxu0 %v961
  %2616 = vmatpush.msra.mxu0 %v953
  %2617 = vmatpush.msra.mxu0 %v945
  %2618 = vmatpush.msra.mxu0 %v937
  %2619 = vmatpush.msra.mxu0 %v929
  %2620 = vmatpush.msra.mxu0 %v921
  %2621 = vmatpush.msra.mxu0 %v913
  %2622 = vmatpush.msra.mxu0 %v905
  %2623 = vmatpush.msra.mxu0 %v897
  %2624 = vmatmul.f32.gmra.mxu0 %v2572
  %v2625 = vpop.f32.mrf.mxu0
  %v2626 = vadd.f32 %v2606, %v2625
  %2627 = vdwg.mxu0
  %2628 = vmatpush.msra.mxu0 %v890
  %2629 = vmatpush.msra.mxu0 %v882
  %2630 = vmatpush.msra.mxu0 %v874
  %2631 = vmatpush.msra.mxu0 %v866
  %2632 = vmatpush.msra.mxu0 %v858
  %2633 = vmatpush.msra.mxu0 %v850
  %2634 = vmatpush.msra.mxu0 %v842
  %2635 = vmatpush.msra.mxu0 %v834
  %2636 = vmatpush.msra.mxu0 %v826
  %2637 = vmatpush.msra.mxu0 %v818
  %2638 = vmatpush.msra.mxu0 %v810
  %2639 = vmatpush.msra.mxu0 %v802
  %2640 = vmatpush.msra.mxu0 %v794
  %2641 = vmatpush.msra.mxu0 %v786
  %2642 = vmatpush.msra.mxu0 %v778
  %2643 = vmatpush.msra.mxu0 %v770
  %2644 = vmatmul.f32.gmra.mxu0 %v2550
  %v2645 = vpop.f32.mrf.mxu0
  %v2646 = vadd.f32 0.0, %v2645
  %2647 = vdwg.mxu0
  %2648 = vmatpush.msra.mxu0 %v1018
  %2649 = vmatpush.msra.mxu0 %v1010
  %2650 = vmatpush.msra.mxu0 %v1002
  %2651 = vmatpush.msra.mxu0 %v994
  %2652 = vmatpush.msra.mxu0 %v986
  %2653 = vmatpush.msra.mxu0 %v978
  %2654 = vmatpush.msra.mxu0 %v970
  %2655 = vmatpush.msra.mxu0 %v962
  %2656 = vmatpush.msra.mxu0 %v954
  %2657 = vmatpush.msra.mxu0 %v946
  %2658 = vmatpush.msra.mxu0 %v938
  %2659 = vmatpush.msra.mxu0 %v930
  %2660 = vmatpush.msra.mxu0 %v922
  %2661 = vmatpush.msra.mxu0 %v914
  %2662 = vmatpush.msra.mxu0 %v906
  %2663 = vmatpush.msra.mxu0 %v898
  %2664 = vmatmul.f32.gmra.mxu0 %v2572
  %v2665 = vpop.f32.mrf.mxu0
  %v2666 = vadd.f32 %v2646, %v2665
  %2667 = vdwg.mxu0
  %2668 = vmatpush.msra.mxu0 %v891
  %2669 = vmatpush.msra.mxu0 %v883
  %2670 = vmatpush.msra.mxu0 %v875
  %2671 = vmatpush.msra.mxu0 %v867
  %2672 = vmatpush.msra.mxu0 %v859
  %2673 = vmatpush.msra.mxu0 %v851
  %2674 = vmatpush.msra.mxu0 %v843
  %2675 = vmatpush.msra.mxu0 %v835
  %2676 = vmatpush.msra.mxu0 %v827
  %2677 = vmatpush.msra.mxu0 %v819
  %2678 = vmatpush.msra.mxu0 %v811
  %2679 = vmatpush.msra.mxu0 %v803
  %2680 = vmatpush.msra.mxu0 %v795
  %2681 = vmatpush.msra.mxu0 %v787
  %2682 = vmatpush.msra.mxu0 %v779
  %2683 = vmatpush.msra.mxu0 %v771
  %2684 = vmatmul.f32.gmra.mxu0 %v2550
  %v2685 = vpop.f32.mrf.mxu0
  %v2686 = vadd.f32 0.0, %v2685
  %2687 = vdwg.mxu0
  %2688 = vmatpush.msra.mxu0 %v1019
  %2689 = vmatpush.msra.mxu0 %v1011
  %2690 = vmatpush.msra.mxu0 %v1003
  %2691 = vmatpush.msra.mxu0 %v995
  %2692 = vmatpush.msra.mxu0 %v987
  %2693 = vmatpush.msra.mxu0 %v979
  %2694 = vmatpush.msra.mxu0 %v971
  %2695 = vmatpush.msra.mxu0 %v963
  %2696 = vmatpush.msra.mxu0 %v955
  %2697 = vmatpush.msra.mxu0 %v947
  %2698 = vmatpush.msra.mxu0 %v939
  %2699 = vmatpush.msra.mxu0 %v931
  %2700 = vmatpush.msra.mxu0 %v923
  %2701 = vmatpush.msra.mxu0 %v915
  %2702 = vmatpush.msra.mxu0 %v907
  %2703 = vmatpush.msra.mxu0 %v899
  %2704 = vmatmul.f32.gmra.mxu0 %v2572
  %v2705 = vpop.f32.mrf.mxu0
  %v2706 = vadd.f32 %v2686, %v2705
  %2707 = vdwg.mxu0
  %2708 = vmatpush.msra.mxu0 %v892
  %2709 = vmatpush.msra.mxu0 %v884
  %2710 = vmatpush.msra.mxu0 %v876
  %2711 = vmatpush.msra.mxu0 %v868
  %2712 = vmatpush.msra.mxu0 %v860
  %2713 = vmatpush.msra.mxu0 %v852
  %2714 = vmatpush.msra.mxu0 %v844
  %2715 = vmatpush.msra.mxu0 %v836
  %2716 = vmatpush.msra.mxu0 %v828
  %2717 = vmatpush.msra.mxu0 %v820
  %2718 = vmatpush.msra.mxu0 %v812
  %2719 = vmatpush.msra.mxu0 %v804
  %2720 = vmatpush.msra.mxu0 %v796
  %2721 = vmatpush.msra.mxu0 %v788
  %2722 = vmatpush.msra.mxu0 %v780
  %2723 = vmatpush.msra.mxu0 %v772
  %2724 = vmatmul.f32.gmra.mxu0 %v2550
  %v2725 = vpop.f32.mrf.mxu0
  %v2726 = vadd.f32 0.0, %v2725
  %2727 = vdwg.mxu0
  %2728 = vmatpush.msra.mxu0 %v1020
  %2729 = vmatpush.msra.mxu0 %v1012
  %2730 = vmatpush.msra.mxu0 %v1004
  %2731 = vmatpush.msra.mxu0 %v996
  %2732 = vmatpush.msra.mxu0 %v988
  %2733 = vmatpush.msra.mxu0 %v980
  %2734 = vmatpush.msra.mxu0 %v972
  %2735 = vmatpush.msra.mxu0 %v964
  %2736 = vmatpush.msra.mxu0 %v956
  %2737 = vmatpush.msra.mxu0 %v948
  %2738 = vmatpush.msra.mxu0 %v940
  %2739 = vmatpush.msra.mxu0 %v932
  %2740 = vmatpush.msra.mxu0 %v924
  %2741 = vmatpush.msra.mxu0 %v916
  %2742 = vmatpush.msra.mxu0 %v908
  %2743 = vmatpush.msra.mxu0 %v900
  %2744 = vmatmul.f32.gmra.mxu0 %v2572
  %v2745 = vpop.f32.mrf.mxu0
  %v2746 = vadd.f32 %v2726, %v2745
  %2747 = vdwg.mxu0
  %2748 = vmatpush.msra.mxu0 %v893
  %2749 = vmatpush.msra.mxu0 %v885
  %2750 = vmatpush.msra.mxu0 %v877
  %2751 = vmatpush.msra.mxu0 %v869
  %2752 = vmatpush.msra.mxu0 %v861
  %2753 = vmatpush.msra.mxu0 %v853
  %2754 = vmatpush.msra.mxu0 %v845
  %2755 = vmatpush.msra.mxu0 %v837
  %2756 = vmatpush.msra.mxu0 %v829
  %2757 = vmatpush.msra.mxu0 %v821
  %2758 = vmatpush.msra.mxu0 %v813
  %2759 = vmatpush.msra.mxu0 %v805
  %2760 = vmatpush.msra.mxu0 %v797
  %2761 = vmatpush.msra.mxu0 %v789
  %2762 = vmatpush.msra.mxu0 %v781
  %2763 = vmatpush.msra.mxu0 %v773
  %2764 = vmatmul.f32.gmra.mxu0 %v2550
  %v2765 = vpop.f32.mrf.mxu0
  %v2766 = vadd.f32 0.0, %v2765
  %2767 = vdwg.mxu0
  %2768 = vmatpush.msra.mxu0 %v1021
  %2769 = vmatpush.msra.mxu0 %v1013
  %2770 = vmatpush.msra.mxu0 %v1005
  %2771 = vmatpush.msra.mxu0 %v997
  %2772 = vmatpush.msra.mxu0 %v989
  %2773 = vmatpush.msra.mxu0 %v981
  %2774 = vmatpush.msra.mxu0 %v973
  %2775 = vmatpush.msra.mxu0 %v965
  %2776 = vmatpush.msra.mxu0 %v957
  %2777 = vmatpush.msra.mxu0 %v949
  %2778 = vmatpush.msra.mxu0 %v941
  %2779 = vmatpush.msra.mxu0 %v933
  %2780 = vmatpush.msra.mxu0 %v925
  %2781 = vmatpush.msra.mxu0 %v917
  %2782 = vmatpush.msra.mxu0 %v909
  %2783 = vmatpush.msra.mxu0 %v901
  %2784 = vmatmul.f32.gmra.mxu0 %v2572
  %v2785 = vpop.f32.mrf.mxu0
  %v2786 = vadd.f32 %v2766, %v2785
  %2787 = vdwg.mxu0
  %2788 = vmatpush.msra.mxu0 %v894
  %2789 = vmatpush.msra.mxu0 %v886
  %2790 = vmatpush.msra.mxu0 %v878
  %2791 = vmatpush.msra.mxu0 %v870
  %2792 = vmatpush.msra.mxu0 %v862
  %2793 = vmatpush.msra.mxu0 %v854
  %2794 = vmatpush.msra.mxu0 %v846
  %2795 = vmatpush.msra.mxu0 %v838
  %2796 = vmatpush.msra.mxu0 %v830
  %2797 = vmatpush.msra.mxu0 %v822
  %2798 = vmatpush.msra.mxu0 %v814
  %2799 = vmatpush.msra.mxu0 %v806
  %2800 = vmatpush.msra.mxu0 %v798
  %2801 = vmatpush.msra.mxu0 %v790
  %2802 = vmatpush.msra.mxu0 %v782
  %2803 = vmatpush.msra.mxu0 %v774
  %2804 = vmatmul.f32.gmra.mxu0 %v2550
  %v2805 = vpop.f32.mrf.mxu0
  %v2806 = vadd.f32 0.0, %v2805
  %2807 = vdwg.mxu0
  %2808 = vmatpush.msra.mxu0 %v1022
  %2809 = vmatpush.msra.mxu0 %v1014
  %2810 = vmatpush.msra.mxu0 %v1006
  %2811 = vmatpush.msra.mxu0 %v998
  %2812 = vmatpush.msra.mxu0 %v990
  %2813 = vmatpush.msra.mxu0 %v982
  %2814 = vmatpush.msra.mxu0 %v974
  %2815 = vmatpush.msra.mxu0 %v966
  %2816 = vmatpush.msra.mxu0 %v958
  %2817 = vmatpush.msra.mxu0 %v950
  %2818 = vmatpush.msra.mxu0 %v942
  %2819 = vmatpush.msra.mxu0 %v934
  %2820 = vmatpush.msra.mxu0 %v926
  %2821 = vmatpush.msra.mxu0 %v918
  %2822 = vmatpush.msra.mxu0 %v910
  %2823 = vmatpush.msra.mxu0 %v902
  %2824 = vmatmul.f32.gmra.mxu0 %v2572
  %v2825 = vpop.f32.mrf.mxu0
  %v2826 = vadd.f32 %v2806, %v2825
  %2827 = vdwg.mxu0
  %2828 = vmatpush.msra.mxu0 %v895
  %2829 = vmatpush.msra.mxu0 %v887
  %2830 = vmatpush.msra.mxu0 %v879
  %2831 = vmatpush.msra.mxu0 %v871
  %2832 = vmatpush.msra.mxu0 %v863
  %2833 = vmatpush.msra.mxu0 %v855
  %2834 = vmatpush.msra.mxu0 %v847
  %2835 = vmatpush.msra.mxu0 %v839
  %2836 = vmatpush.msra.mxu0 %v831
  %2837 = vmatpush.msra.mxu0 %v823
  %2838 = vmatpush.msra.mxu0 %v815
  %2839 = vmatpush.msra.mxu0 %v807
  %2840 = vmatpush.msra.mxu0 %v799
  %2841 = vmatpush.msra.mxu0 %v791
  %2842 = vmatpush.msra.mxu0 %v783
  %2843 = vmatpush.msra.mxu0 %v775
  %2844 = vmatmul.f32.gmra.mxu0 %v2550
  %v2845 = vpop.f32.mrf.mxu0
  %v2846 = vadd.f32 0.0, %v2845
  %2847 = vdwg.mxu0
  %2848 = vmatpush.msra.mxu0 %v1023
  %2849 = vmatpush.msra.mxu0 %v1015
  %2850 = vmatpush.msra.mxu0 %v1007
  %2851 = vmatpush.msra.mxu0 %v999
  %2852 = vmatpush.msra.mxu0 %v991
  %2853 = vmatpush.msra.mxu0 %v983
  %2854 = vmatpush.msra.mxu0 %v975
  %2855 = vmatpush.msra.mxu0 %v967
  %2856 = vmatpush.msra.mxu0 %v959
  %2857 = vmatpush.msra.mxu0 %v951
  %2858 = vmatpush.msra.mxu0 %v943
  %2859 = vmatpush.msra.mxu0 %v935
  %2860 = vmatpush.msra.mxu0 %v927
  %2861 = vmatpush.msra.mxu0 %v919
  %2862 = vmatpush.msra.mxu0 %v911
  %2863 = vmatpush.msra.mxu0 %v903
  %2864 = vmatmul.f32.gmra.mxu0 %v2572
  %v2865 = vpop.f32.mrf.mxu0
  %v2866 = vadd.f32 %v2846, %v2865
  %2867 = vdwg.mxu0
  %2868 = vmatpush.msra.mxu0 %v896
  %2869 = vmatpush.msra.mxu0 %v888
  %2870 = vmatpush.msra.mxu0 %v880
  %2871 = vmatpush.msra.mxu0 %v872
  %2872 = vmatpush.msra.mxu0 %v864
  %2873 = vmatpush.msra.mxu0 %v856
  %2874 = vmatpush.msra.mxu0 %v848
  %2875 = vmatpush.msra.mxu0 %v840
  %2876 = vmatpush.msra.mxu0 %v832
  %2877 = vmatpush.msra.mxu0 %v824
  %2878 = vmatpush.msra.mxu0 %v816
  %2879 = vmatpush.msra.mxu0 %v808
  %2880 = vmatpush.msra.mxu0 %v800
  %2881 = vmatpush.msra.mxu0 %v792
  %2882 = vmatpush.msra.mxu0 %v784
  %2883 = vmatpush.msra.mxu0 %v776
  %2884 = vmatmul.f32.gmra.mxu0 %v2550
  %v2885 = vpop.f32.mrf.mxu0
  %v2886 = vadd.f32 0.0, %v2885
  %2887 = vdwg.mxu0
  %2888 = vmatpush.msra.mxu0 %v1024
  %2889 = vmatpush.msra.mxu0 %v1016
  %2890 = vmatpush.msra.mxu0 %v1008
  %2891 = vmatpush.msra.mxu0 %v1000
  %2892 = vmatpush.msra.mxu0 %v992
  %2893 = vmatpush.msra.mxu0 %v984
  %2894 = vmatpush.msra.mxu0 %v976
  %2895 = vmatpush.msra.mxu0 %v968
  %2896 = vmatpush.msra.mxu0 %v960
  %2897 = vmatpush.msra.mxu0 %v952
  %2898 = vmatpush.msra.mxu0 %v944
  %2899 = vmatpush.msra.mxu0 %v936
  %2900 = vmatpush.msra.mxu0 %v928
  %2901 = vmatpush.msra.mxu0 %v920
  %2902 = vmatpush.msra.mxu0 %v912
  %2903 = vmatpush.msra.mxu0 %v904
  %2904 = vmatmul.f32.gmra.mxu0 %v2572
  %v2905 = vpop.f32.mrf.mxu0
  %v2906 = vadd.f32 %v2886, %v2905
  %2907 = vdwg.mxu0
  %v2908 = vadd.f32 %v514, %v681
  %v2909 = vadd.f32 %v555, %v701
  %v2910 = vadd.f32 %v596, %v721
  %v2911 = vadd.f32 %v637, %v741
  %v2912 = vadd.f32 %v2908, %v2626
  %v2913 = vadd.f32 %v2909, %v2666
  %v2914 = vadd.f32 %v2910, %v2706
  %v2915 = vadd.f32 %v2911, %v2746
  %v2916 = vmul.f32 %v2912, 0.5
  %v2917 = vtanh.pop %v2916
  %v2918 = vadd.f32 %v2917, 1.0
  %v2919 = vmul.f32 %v2918, 0.5
  %v2920 = vmul.f32 %v2913, 0.5
  %v2921 = vtanh.pop %v2920
  %v2922 = vadd.f32 %v2921, 1.0
  %v2923 = vmul.f32 %v2922, 0.5
  %v2924 = vtanh.pop %v2914
  %v2925 = vmul.f32 %v2915, 0.5
  %v2926 = vtanh.pop %v2925
  %v2927 = vadd.f32 %v2926, 1.0
  %v2928 = vmul.f32 %v2927, 0.5
  %v2929 = vmul.f32 %v2923, %v2548
  %v2930 = vmul.f32 %v2919, %v2924
  %v2931 = vadd.f32 %v2929, %v2930
  %v2932 = vtanh.pop %v2931
  %v2933 = vmul.f32 %v2928, %v2932
  %v2934 = vadd.f32 %v2786, %v1394
  %v2935 = vadd.f32 %v2826, %v1395
  %v2936 = vadd.f32 %v2866, %v1396
  %v2937 = vadd.f32 %v2906, %v1397
  %v2938 = vmul.f32 %v2934, 0.5
  %v2939 = vtanh.pop %v2938
  %v2940 = vadd.f32 %v2939, 1.0
  %v2941 = vmul.f32 %v2940, 0.5
  %v2942 = vmul.f32 %v2935, 0.5
  %v2943 = vtanh.pop %v2942
  %v2944 = vadd.f32 %v2943, 1.0
  %v2945 = vmul.f32 %v2944, 0.5
  %v2946 = vtanh.pop %v2936
  %v2947 = vmul.f32 %v2937, 0.5
  %v2948 = vtanh.pop %v2947
  %v2949 = vadd.f32 %v2948, 1.0
  %v2950 = vmul.f32 %v2949, 0.5
  %v2951 = vmul.f32 %v2945, %v2570
  %v2952 = vmul.f32 %v2941, %v2946
  %v2953 = vadd.f32 %v2951, %v2952
  %v2954 = vtanh.pop %v2953
  %v2955 = vmul.f32 %v2950, %v2954
  %2956 = vset.pattern.permute.xlu0 3
  %2957 = vperm.xlu0 %2956, %v47
  %v2958 = vpop.permute.xlu0 %2957
  %v2960 = vmul.f32 %v2955, %v2958
  %2961 = vst [vmem:[%s12 + $0x20] sm:$0xff] %v2960
  %v2962 = vmul.f32 %v2960, %v768
  %2963 = vadd.xlane.f32.xlu0 %v2962
  %v2964 = vpop.xlane.xlu0 %2963
  %v2965 = vsub.f32 0.0, %v2964
  %v2966 = vmul.f32 %v2965, 1.442695
  %v2967 = vpow.pop %v2966
  %v2968 = vmul.f32 %v2967, %v2960
  %v2969 = vadd.f32 %v2586, %v2968
  %v2970 = vadd.f32 %v2587, %v2967
  %2971 = vmatpush.msra.mxu0 %v889
  %2972 = vmatpush.msra.mxu0 %v881
  %2973 = vmatpush.msra.mxu0 %v873
  %2974 = vmatpush.msra.mxu0 %v865
  %2975 = vmatpush.msra.mxu0 %v857
  %2976 = vmatpush.msra.mxu0 %v849
  %2977 = vmatpush.msra.mxu0 %v841
  %2978 = vmatpush.msra.mxu0 %v833
  %2979 = vmatpush.msra.mxu0 %v825
  %2980 = vmatpush.msra.mxu0 %v817
  %2981 = vmatpush.msra.mxu0 %v809
  %2982 = vmatpush.msra.mxu0 %v801
  %2983 = vmatpush.msra.mxu0 %v793
  %2984 = vmatpush.msra.mxu0 %v785
  %2985 = vmatpush.msra.mxu0 %v777
  %2986 = vmatpush.msra.mxu0 %v769
  %2987 = vmatmul.f32.gmra.mxu0 %v2933
  %v2988 = vpop.f32.mrf.mxu0
  %v2989 = vadd.f32 0.0, %v2988
  %2990 = vdwg.mxu0
  %2991 = vmatpush.msra.mxu0 %v1017
  %2992 = vmatpush.msra.mxu0 %v1009
  %2993 = vmatpush.msra.mxu0 %v1001
  %2994 = vmatpush.msra.mxu0 %v993
  %2995 = vmatpush.msra.mxu0 %v985
  %2996 = vmatpush.msra.mxu0 %v977
  %2997 = vmatpush.msra.mxu0 %v969
  %2998 = vmatpush.msra.mxu0 %v961
  %2999 = vmatpush.msra.mxu0 %v953
  %3000 = vmatpush.msra.mxu0 %v945
  %3001 = vmatpush.msra.mxu0 %v937
  %3002 = vmatpush.msra.mxu0 %v929
  %3003 = vmatpush.msra.mxu0 %v921
  %3004 = vmatpush.msra.mxu0 %v913
  %3005 = vmatpush.msra.mxu0 %v905
  %3006 = vmatpush.msra.mxu0 %v897
  %3007 = vmatmul.f32.gmra.mxu0 %v2955
  %v3008 = vpop.f32.mrf.mxu0
  %v3009 = vadd.f32 %v2989, %v3008
  %3010 = vdwg.mxu0
  %3011 = vmatpush.msra.mxu0 %v890
  %3012 = vmatpush.msra.mxu0 %v882
  %3013 = vmatpush.msra.mxu0 %v874
  %3014 = vmatpush.msra.mxu0 %v866
  %3015 = vmatpush.msra.mxu0 %v858
  %3016 = vmatpush.msra.mxu0 %v850
  %3017 = vmatpush.msra.mxu0 %v842
  %3018 = vmatpush.msra.mxu0 %v834
  %3019 = vmatpush.msra.mxu0 %v826
  %3020 = vmatpush.msra.mxu0 %v818
  %3021 = vmatpush.msra.mxu0 %v810
  %3022 = vmatpush.msra.mxu0 %v802
  %3023 = vmatpush.msra.mxu0 %v794
  %3024 = vmatpush.msra.mxu0 %v786
  %3025 = vmatpush.msra.mxu0 %v778
  %3026 = vmatpush.msra.mxu0 %v770
  %3027 = vmatmul.f32.gmra.mxu0 %v2933
  %v3028 = vpop.f32.mrf.mxu0
  %v3029 = vadd.f32 0.0, %v3028
  %3030 = vdwg.mxu0
  %3031 = vmatpush.msra.mxu0 %v1018
  %3032 = vmatpush.msra.mxu0 %v1010
  %3033 = vmatpush.msra.mxu0 %v1002
  %3034 = vmatpush.msra.mxu0 %v994
  %3035 = vmatpush.msra.mxu0 %v986
  %3036 = vmatpush.msra.mxu0 %v978
  %3037 = vmatpush.msra.mxu0 %v970
  %3038 = vmatpush.msra.mxu0 %v962
  %3039 = vmatpush.msra.mxu0 %v954
  %3040 = vmatpush.msra.mxu0 %v946
  %3041 = vmatpush.msra.mxu0 %v938
  %3042 = vmatpush.msra.mxu0 %v930
  %3043 = vmatpush.msra.mxu0 %v922
  %3044 = vmatpush.msra.mxu0 %v914
  %3045 = vmatpush.msra.mxu0 %v906
  %3046 = vmatpush.msra.mxu0 %v898
  %3047 = vmatmul.f32.gmra.mxu0 %v2955
  %v3048 = vpop.f32.mrf.mxu0
  %v3049 = vadd.f32 %v3029, %v3048
  %3050 = vdwg.mxu0
  %3051 = vmatpush.msra.mxu0 %v891
  %3052 = vmatpush.msra.mxu0 %v883
  %3053 = vmatpush.msra.mxu0 %v875
  %3054 = vmatpush.msra.mxu0 %v867
  %3055 = vmatpush.msra.mxu0 %v859
  %3056 = vmatpush.msra.mxu0 %v851
  %3057 = vmatpush.msra.mxu0 %v843
  %3058 = vmatpush.msra.mxu0 %v835
  %3059 = vmatpush.msra.mxu0 %v827
  %3060 = vmatpush.msra.mxu0 %v819
  %3061 = vmatpush.msra.mxu0 %v811
  %3062 = vmatpush.msra.mxu0 %v803
  %3063 = vmatpush.msra.mxu0 %v795
  %3064 = vmatpush.msra.mxu0 %v787
  %3065 = vmatpush.msra.mxu0 %v779
  %3066 = vmatpush.msra.mxu0 %v771
  %3067 = vmatmul.f32.gmra.mxu0 %v2933
  %v3068 = vpop.f32.mrf.mxu0
  %v3069 = vadd.f32 0.0, %v3068
  %3070 = vdwg.mxu0
  %3071 = vmatpush.msra.mxu0 %v1019
  %3072 = vmatpush.msra.mxu0 %v1011
  %3073 = vmatpush.msra.mxu0 %v1003
  %3074 = vmatpush.msra.mxu0 %v995
  %3075 = vmatpush.msra.mxu0 %v987
  %3076 = vmatpush.msra.mxu0 %v979
  %3077 = vmatpush.msra.mxu0 %v971
  %3078 = vmatpush.msra.mxu0 %v963
  %3079 = vmatpush.msra.mxu0 %v955
  %3080 = vmatpush.msra.mxu0 %v947
  %3081 = vmatpush.msra.mxu0 %v939
  %3082 = vmatpush.msra.mxu0 %v931
  %3083 = vmatpush.msra.mxu0 %v923
  %3084 = vmatpush.msra.mxu0 %v915
  %3085 = vmatpush.msra.mxu0 %v907
  %3086 = vmatpush.msra.mxu0 %v899
  %3087 = vmatmul.f32.gmra.mxu0 %v2955
  %v3088 = vpop.f32.mrf.mxu0
  %v3089 = vadd.f32 %v3069, %v3088
  %3090 = vdwg.mxu0
  %3091 = vmatpush.msra.mxu0 %v892
  %3092 = vmatpush.msra.mxu0 %v884
  %3093 = vmatpush.msra.mxu0 %v876
  %3094 = vmatpush.msra.mxu0 %v868
  %3095 = vmatpush.msra.mxu0 %v860
  %3096 = vmatpush.msra.mxu0 %v852
  %3097 = vmatpush.msra.mxu0 %v844
  %3098 = vmatpush.msra.mxu0 %v836
  %3099 = vmatpush.msra.mxu0 %v828
  %3100 = vmatpush.msra.mxu0 %v820
  %3101 = vmatpush.msra.mxu0 %v812
  %3102 = vmatpush.msra.mxu0 %v804
  %3103 = vmatpush.msra.mxu0 %v796
  %3104 = vmatpush.msra.mxu0 %v788
  %3105 = vmatpush.msra.mxu0 %v780
  %3106 = vmatpush.msra.mxu0 %v772
  %3107 = vmatmul.f32.gmra.mxu0 %v2933
  %v3108 = vpop.f32.mrf.mxu0
  %v3109 = vadd.f32 0.0, %v3108
  %3110 = vdwg.mxu0
  %3111 = vmatpush.msra.mxu0 %v1020
  %3112 = vmatpush.msra.mxu0 %v1012
  %3113 = vmatpush.msra.mxu0 %v1004
  %3114 = vmatpush.msra.mxu0 %v996
  %3115 = vmatpush.msra.mxu0 %v988
  %3116 = vmatpush.msra.mxu0 %v980
  %3117 = vmatpush.msra.mxu0 %v972
  %3118 = vmatpush.msra.mxu0 %v964
  %3119 = vmatpush.msra.mxu0 %v956
  %3120 = vmatpush.msra.mxu0 %v948
  %3121 = vmatpush.msra.mxu0 %v940
  %3122 = vmatpush.msra.mxu0 %v932
  %3123 = vmatpush.msra.mxu0 %v924
  %3124 = vmatpush.msra.mxu0 %v916
  %3125 = vmatpush.msra.mxu0 %v908
  %3126 = vmatpush.msra.mxu0 %v900
  %3127 = vmatmul.f32.gmra.mxu0 %v2955
  %v3128 = vpop.f32.mrf.mxu0
  %v3129 = vadd.f32 %v3109, %v3128
  %3130 = vdwg.mxu0
  %3131 = vmatpush.msra.mxu0 %v893
  %3132 = vmatpush.msra.mxu0 %v885
  %3133 = vmatpush.msra.mxu0 %v877
  %3134 = vmatpush.msra.mxu0 %v869
  %3135 = vmatpush.msra.mxu0 %v861
  %3136 = vmatpush.msra.mxu0 %v853
  %3137 = vmatpush.msra.mxu0 %v845
  %3138 = vmatpush.msra.mxu0 %v837
  %3139 = vmatpush.msra.mxu0 %v829
  %3140 = vmatpush.msra.mxu0 %v821
  %3141 = vmatpush.msra.mxu0 %v813
  %3142 = vmatpush.msra.mxu0 %v805
  %3143 = vmatpush.msra.mxu0 %v797
  %3144 = vmatpush.msra.mxu0 %v789
  %3145 = vmatpush.msra.mxu0 %v781
  %3146 = vmatpush.msra.mxu0 %v773
  %3147 = vmatmul.f32.gmra.mxu0 %v2933
  %v3148 = vpop.f32.mrf.mxu0
  %v3149 = vadd.f32 0.0, %v3148
  %3150 = vdwg.mxu0
  %3151 = vmatpush.msra.mxu0 %v1021
  %3152 = vmatpush.msra.mxu0 %v1013
  %3153 = vmatpush.msra.mxu0 %v1005
  %3154 = vmatpush.msra.mxu0 %v997
  %3155 = vmatpush.msra.mxu0 %v989
  %3156 = vmatpush.msra.mxu0 %v981
  %3157 = vmatpush.msra.mxu0 %v973
  %3158 = vmatpush.msra.mxu0 %v965
  %3159 = vmatpush.msra.mxu0 %v957
  %3160 = vmatpush.msra.mxu0 %v949
  %3161 = vmatpush.msra.mxu0 %v941
  %3162 = vmatpush.msra.mxu0 %v933
  %3163 = vmatpush.msra.mxu0 %v925
  %3164 = vmatpush.msra.mxu0 %v917
  %3165 = vmatpush.msra.mxu0 %v909
  %3166 = vmatpush.msra.mxu0 %v901
  %3167 = vmatmul.f32.gmra.mxu0 %v2955
  %v3168 = vpop.f32.mrf.mxu0
  %v3169 = vadd.f32 %v3149, %v3168
  %3170 = vdwg.mxu0
  %3171 = vmatpush.msra.mxu0 %v894
  %3172 = vmatpush.msra.mxu0 %v886
  %3173 = vmatpush.msra.mxu0 %v878
  %3174 = vmatpush.msra.mxu0 %v870
  %3175 = vmatpush.msra.mxu0 %v862
  %3176 = vmatpush.msra.mxu0 %v854
  %3177 = vmatpush.msra.mxu0 %v846
  %3178 = vmatpush.msra.mxu0 %v838
  %3179 = vmatpush.msra.mxu0 %v830
  %3180 = vmatpush.msra.mxu0 %v822
  %3181 = vmatpush.msra.mxu0 %v814
  %3182 = vmatpush.msra.mxu0 %v806
  %3183 = vmatpush.msra.mxu0 %v798
  %3184 = vmatpush.msra.mxu0 %v790
  %3185 = vmatpush.msra.mxu0 %v782
  %3186 = vmatpush.msra.mxu0 %v774
  %3187 = vmatmul.f32.gmra.mxu0 %v2933
  %v3188 = vpop.f32.mrf.mxu0
  %v3189 = vadd.f32 0.0, %v3188
  %3190 = vdwg.mxu0
  %3191 = vmatpush.msra.mxu0 %v1022
  %3192 = vmatpush.msra.mxu0 %v1014
  %3193 = vmatpush.msra.mxu0 %v1006
  %3194 = vmatpush.msra.mxu0 %v998
  %3195 = vmatpush.msra.mxu0 %v990
  %3196 = vmatpush.msra.mxu0 %v982
  %3197 = vmatpush.msra.mxu0 %v974
  %3198 = vmatpush.msra.mxu0 %v966
  %3199 = vmatpush.msra.mxu0 %v958
  %3200 = vmatpush.msra.mxu0 %v950
  %3201 = vmatpush.msra.mxu0 %v942
  %3202 = vmatpush.msra.mxu0 %v934
  %3203 = vmatpush.msra.mxu0 %v926
  %3204 = vmatpush.msra.mxu0 %v918
  %3205 = vmatpush.msra.mxu0 %v910
  %3206 = vmatpush.msra.mxu0 %v902
  %3207 = vmatmul.f32.gmra.mxu0 %v2955
  %v3208 = vpop.f32.mrf.mxu0
  %v3209 = vadd.f32 %v3189, %v3208
  %3210 = vdwg.mxu0
  %3211 = vmatpush.msra.mxu0 %v895
  %3212 = vmatpush.msra.mxu0 %v887
  %3213 = vmatpush.msra.mxu0 %v879
  %3214 = vmatpush.msra.mxu0 %v871
  %3215 = vmatpush.msra.mxu0 %v863
  %3216 = vmatpush.msra.mxu0 %v855
  %3217 = vmatpush.msra.mxu0 %v847
  %3218 = vmatpush.msra.mxu0 %v839
  %3219 = vmatpush.msra.mxu0 %v831
  %3220 = vmatpush.msra.mxu0 %v823
  %3221 = vmatpush.msra.mxu0 %v815
  %3222 = vmatpush.msra.mxu0 %v807
  %3223 = vmatpush.msra.mxu0 %v799
  %3224 = vmatpush.msra.mxu0 %v791
  %3225 = vmatpush.msra.mxu0 %v783
  %3226 = vmatpush.msra.mxu0 %v775
  %3227 = vmatmul.f32.gmra.mxu0 %v2933
  %v3228 = vpop.f32.mrf.mxu0
  %v3229 = vadd.f32 0.0, %v3228
  %3230 = vdwg.mxu0
  %3231 = vmatpush.msra.mxu0 %v1023
  %3232 = vmatpush.msra.mxu0 %v1015
  %3233 = vmatpush.msra.mxu0 %v1007
  %3234 = vmatpush.msra.mxu0 %v999
  %3235 = vmatpush.msra.mxu0 %v991
  %3236 = vmatpush.msra.mxu0 %v983
  %3237 = vmatpush.msra.mxu0 %v975
  %3238 = vmatpush.msra.mxu0 %v967
  %3239 = vmatpush.msra.mxu0 %v959
  %3240 = vmatpush.msra.mxu0 %v951
  %3241 = vmatpush.msra.mxu0 %v943
  %3242 = vmatpush.msra.mxu0 %v935
  %3243 = vmatpush.msra.mxu0 %v927
  %3244 = vmatpush.msra.mxu0 %v919
  %3245 = vmatpush.msra.mxu0 %v911
  %3246 = vmatpush.msra.mxu0 %v903
  %3247 = vmatmul.f32.gmra.mxu0 %v2955
  %v3248 = vpop.f32.mrf.mxu0
  %v3249 = vadd.f32 %v3229, %v3248
  %3250 = vdwg.mxu0
  %3251 = vmatpush.msra.mxu0 %v896
  %3252 = vmatpush.msra.mxu0 %v888
  %3253 = vmatpush.msra.mxu0 %v880
  %3254 = vmatpush.msra.mxu0 %v872
  %3255 = vmatpush.msra.mxu0 %v864
  %3256 = vmatpush.msra.mxu0 %v856
  %3257 = vmatpush.msra.mxu0 %v848
  %3258 = vmatpush.msra.mxu0 %v840
  %3259 = vmatpush.msra.mxu0 %v832
  %3260 = vmatpush.msra.mxu0 %v824
  %3261 = vmatpush.msra.mxu0 %v816
  %3262 = vmatpush.msra.mxu0 %v808
  %3263 = vmatpush.msra.mxu0 %v800
  %3264 = vmatpush.msra.mxu0 %v792
  %3265 = vmatpush.msra.mxu0 %v784
  %3266 = vmatpush.msra.mxu0 %v776
  %3267 = vmatmul.f32.gmra.mxu0 %v2933
  %v3268 = vpop.f32.mrf.mxu0
  %v3269 = vadd.f32 0.0, %v3268
  %3270 = vdwg.mxu0
  %3271 = vmatpush.msra.mxu0 %v1024
  %3272 = vmatpush.msra.mxu0 %v1016
  %3273 = vmatpush.msra.mxu0 %v1008
  %3274 = vmatpush.msra.mxu0 %v1000
  %3275 = vmatpush.msra.mxu0 %v992
  %3276 = vmatpush.msra.mxu0 %v984
  %3277 = vmatpush.msra.mxu0 %v976
  %3278 = vmatpush.msra.mxu0 %v968
  %3279 = vmatpush.msra.mxu0 %v960
  %3280 = vmatpush.msra.mxu0 %v952
  %3281 = vmatpush.msra.mxu0 %v944
  %3282 = vmatpush.msra.mxu0 %v936
  %3283 = vmatpush.msra.mxu0 %v928
  %3284 = vmatpush.msra.mxu0 %v920
  %3285 = vmatpush.msra.mxu0 %v912
  %3286 = vmatpush.msra.mxu0 %v904
  %3287 = vmatmul.f32.gmra.mxu0 %v2955
  %v3288 = vpop.f32.mrf.mxu0
  %v3289 = vadd.f32 %v3269, %v3288
  %3290 = vdwg.mxu0
  %v3291 = vadd.f32 %v517, %v681
  %v3292 = vadd.f32 %v558, %v701
  %v3293 = vadd.f32 %v599, %v721
  %v3294 = vadd.f32 %v640, %v741
  %v3295 = vadd.f32 %v3291, %v3009
  %v3296 = vadd.f32 %v3292, %v3049
  %v3297 = vadd.f32 %v3293, %v3089
  %v3298 = vadd.f32 %v3294, %v3129
  %v3299 = vmul.f32 %v3295, 0.5
  %v3300 = vtanh.pop %v3299
  %v3301 = vadd.f32 %v3300, 1.0
  %v3302 = vmul.f32 %v3301, 0.5
  %v3303 = vmul.f32 %v3296, 0.5
  %v3304 = vtanh.pop %v3303
  %v3305 = vadd.f32 %v3304, 1.0
  %v3306 = vmul.f32 %v3305, 0.5
  %v3307 = vtanh.pop %v3297
  %v3308 = vmul.f32 %v3298, 0.5
  %v3309 = vtanh.pop %v3308
  %v3310 = vadd.f32 %v3309, 1.0
  %v3311 = vmul.f32 %v3310, 0.5
  %v3312 = vmul.f32 %v3306, %v2931
  %v3313 = vmul.f32 %v3302, %v3307
  %v3314 = vadd.f32 %v3312, %v3313
  %v3315 = vtanh.pop %v3314
  %v3316 = vmul.f32 %v3311, %v3315
  %v3317 = vadd.f32 %v3169, %v1394
  %v3318 = vadd.f32 %v3209, %v1395
  %v3319 = vadd.f32 %v3249, %v1396
  %v3320 = vadd.f32 %v3289, %v1397
  %v3321 = vmul.f32 %v3317, 0.5
  %v3322 = vtanh.pop %v3321
  %v3323 = vadd.f32 %v3322, 1.0
  %v3324 = vmul.f32 %v3323, 0.5
  %v3325 = vmul.f32 %v3318, 0.5
  %v3326 = vtanh.pop %v3325
  %v3327 = vadd.f32 %v3326, 1.0
  %v3328 = vmul.f32 %v3327, 0.5
  %v3329 = vtanh.pop %v3319
  %v3330 = vmul.f32 %v3320, 0.5
  %v3331 = vtanh.pop %v3330
  %v3332 = vadd.f32 %v3331, 1.0
  %v3333 = vmul.f32 %v3332, 0.5
  %v3334 = vmul.f32 %v3328, %v2953
  %v3335 = vmul.f32 %v3324, %v3329
  %v3336 = vadd.f32 %v3334, %v3335
  %v3337 = vtanh.pop %v3336
  %v3338 = vmul.f32 %v3333, %v3337
  %3339 = vset.pattern.permute.xlu0 3
  %3340 = vperm.xlu0 %3339, %v48
  %v3341 = vpop.permute.xlu0 %3340
  %v3343 = vmul.f32 %v3338, %v3341
  %3344 = vst [vmem:[%s12 + $0x28] sm:$0xff] %v3343
  %v3345 = vmul.f32 %v3343, %v768
  %3346 = vadd.xlane.f32.xlu0 %v3345
  %v3347 = vpop.xlane.xlu0 %3346
  %v3348 = vsub.f32 0.0, %v3347
  %v3349 = vmul.f32 %v3348, 1.442695
  %v3350 = vpow.pop %v3349
  %v3351 = vmul.f32 %v3350, %v3343
  %v3352 = vadd.f32 %v2969, %v3351
  %v3353 = vadd.f32 %v2970, %v3350
  %3354 = vmatpush.msra.mxu0 %v889
  %3355 = vmatpush.msra.mxu0 %v881
  %3356 = vmatpush.msra.mxu0 %v873
  %3357 = vmatpush.msra.mxu0 %v865
  %3358 = vmatpush.msra.mxu0 %v857
  %3359 = vmatpush.msra.mxu0 %v849
  %3360 = vmatpush.msra.mxu0 %v841
  %3361 = vmatpush.msra.mxu0 %v833
  %3362 = vmatpush.msra.mxu0 %v825
  %3363 = vmatpush.msra.mxu0 %v817
  %3364 = vmatpush.msra.mxu0 %v809
  %3365 = vmatpush.msra.mxu0 %v801
  %3366 = vmatpush.msra.mxu0 %v793
  %3367 = vmatpush.msra.mxu0 %v785
  %3368 = vmatpush.msra.mxu0 %v777
  %3369 = vmatpush.msra.mxu0 %v769
  %3370 = vmatmul.f32.gmra.mxu0 %v3316
  %v3371 = vpop.f32.mrf.mxu0
  %v3372 = vadd.f32 0.0, %v3371
  %3373 = vdwg.mxu0
  %3374 = vmatpush.msra.mxu0 %v1017
  %3375 = vmatpush.msra.mxu0 %v1009
  %3376 = vmatpush.msra.mxu0 %v1001
  %3377 = vmatpush.msra.mxu0 %v993
  %3378 = vmatpush.msra.mxu0 %v985
  %3379 = vmatpush.msra.mxu0 %v977
  %3380 = vmatpush.msra.mxu0 %v969
  %3381 = vmatpush.msra.mxu0 %v961
  %3382 = vmatpush.msra.mxu0 %v953
  %3383 = vmatpush.msra.mxu0 %v945
  %3384 = vmatpush.msra.mxu0 %v937
  %3385 = vmatpush.msra.mxu0 %v929
  %3386 = vmatpush.msra.mxu0 %v921
  %3387 = vmatpush.msra.mxu0 %v913
  %3388 = vmatpush.msra.mxu0 %v905
  %3389 = vmatpush.msra.mxu0 %v897
  %3390 = vmatmul.f32.gmra.mxu0 %v3338
  %v3391 = vpop.f32.mrf.mxu0
  %v3392 = vadd.f32 %v3372, %v3391
  %3393 = vdwg.mxu0
  %3394 = vmatpush.msra.mxu0 %v890
  %3395 = vmatpush.msra.mxu0 %v882
  %3396 = vmatpush.msra.mxu0 %v874
  %3397 = vmatpush.msra.mxu0 %v866
  %3398 = vmatpush.msra.mxu0 %v858
  %3399 = vmatpush.msra.mxu0 %v850
  %3400 = vmatpush.msra.mxu0 %v842
  %3401 = vmatpush.msra.mxu0 %v834
  %3402 = vmatpush.msra.mxu0 %v826
  %3403 = vmatpush.msra.mxu0 %v818
  %3404 = vmatpush.msra.mxu0 %v810
  %3405 = vmatpush.msra.mxu0 %v802
  %3406 = vmatpush.msra.mxu0 %v794
  %3407 = vmatpush.msra.mxu0 %v786
  %3408 = vmatpush.msra.mxu0 %v778
  %3409 = vmatpush.msra.mxu0 %v770
  %3410 = vmatmul.f32.gmra.mxu0 %v3316
  %v3411 = vpop.f32.mrf.mxu0
  %v3412 = vadd.f32 0.0, %v3411
  %3413 = vdwg.mxu0
  %3414 = vmatpush.msra.mxu0 %v1018
  %3415 = vmatpush.msra.mxu0 %v1010
  %3416 = vmatpush.msra.mxu0 %v1002
  %3417 = vmatpush.msra.mxu0 %v994
  %3418 = vmatpush.msra.mxu0 %v986
  %3419 = vmatpush.msra.mxu0 %v978
  %3420 = vmatpush.msra.mxu0 %v970
  %3421 = vmatpush.msra.mxu0 %v962
  %3422 = vmatpush.msra.mxu0 %v954
  %3423 = vmatpush.msra.mxu0 %v946
  %3424 = vmatpush.msra.mxu0 %v938
  %3425 = vmatpush.msra.mxu0 %v930
  %3426 = vmatpush.msra.mxu0 %v922
  %3427 = vmatpush.msra.mxu0 %v914
  %3428 = vmatpush.msra.mxu0 %v906
  %3429 = vmatpush.msra.mxu0 %v898
  %3430 = vmatmul.f32.gmra.mxu0 %v3338
  %v3431 = vpop.f32.mrf.mxu0
  %v3432 = vadd.f32 %v3412, %v3431
  %3433 = vdwg.mxu0
  %3434 = vmatpush.msra.mxu0 %v891
  %3435 = vmatpush.msra.mxu0 %v883
  %3436 = vmatpush.msra.mxu0 %v875
  %3437 = vmatpush.msra.mxu0 %v867
  %3438 = vmatpush.msra.mxu0 %v859
  %3439 = vmatpush.msra.mxu0 %v851
  %3440 = vmatpush.msra.mxu0 %v843
  %3441 = vmatpush.msra.mxu0 %v835
  %3442 = vmatpush.msra.mxu0 %v827
  %3443 = vmatpush.msra.mxu0 %v819
  %3444 = vmatpush.msra.mxu0 %v811
  %3445 = vmatpush.msra.mxu0 %v803
  %3446 = vmatpush.msra.mxu0 %v795
  %3447 = vmatpush.msra.mxu0 %v787
  %3448 = vmatpush.msra.mxu0 %v779
  %3449 = vmatpush.msra.mxu0 %v771
  %3450 = vmatmul.f32.gmra.mxu0 %v3316
  %v3451 = vpop.f32.mrf.mxu0
  %v3452 = vadd.f32 0.0, %v3451
  %3453 = vdwg.mxu0
  %3454 = vmatpush.msra.mxu0 %v1019
  %3455 = vmatpush.msra.mxu0 %v1011
  %3456 = vmatpush.msra.mxu0 %v1003
  %3457 = vmatpush.msra.mxu0 %v995
  %3458 = vmatpush.msra.mxu0 %v987
  %3459 = vmatpush.msra.mxu0 %v979
  %3460 = vmatpush.msra.mxu0 %v971
  %3461 = vmatpush.msra.mxu0 %v963
  %3462 = vmatpush.msra.mxu0 %v955
  %3463 = vmatpush.msra.mxu0 %v947
  %3464 = vmatpush.msra.mxu0 %v939
  %3465 = vmatpush.msra.mxu0 %v931
  %3466 = vmatpush.msra.mxu0 %v923
  %3467 = vmatpush.msra.mxu0 %v915
  %3468 = vmatpush.msra.mxu0 %v907
  %3469 = vmatpush.msra.mxu0 %v899
  %3470 = vmatmul.f32.gmra.mxu0 %v3338
  %v3471 = vpop.f32.mrf.mxu0
  %v3472 = vadd.f32 %v3452, %v3471
  %3473 = vdwg.mxu0
  %3474 = vmatpush.msra.mxu0 %v892
  %3475 = vmatpush.msra.mxu0 %v884
  %3476 = vmatpush.msra.mxu0 %v876
  %3477 = vmatpush.msra.mxu0 %v868
  %3478 = vmatpush.msra.mxu0 %v860
  %3479 = vmatpush.msra.mxu0 %v852
  %3480 = vmatpush.msra.mxu0 %v844
  %3481 = vmatpush.msra.mxu0 %v836
  %3482 = vmatpush.msra.mxu0 %v828
  %3483 = vmatpush.msra.mxu0 %v820
  %3484 = vmatpush.msra.mxu0 %v812
  %3485 = vmatpush.msra.mxu0 %v804
  %3486 = vmatpush.msra.mxu0 %v796
  %3487 = vmatpush.msra.mxu0 %v788
  %3488 = vmatpush.msra.mxu0 %v780
  %3489 = vmatpush.msra.mxu0 %v772
  %3490 = vmatmul.f32.gmra.mxu0 %v3316
  %v3491 = vpop.f32.mrf.mxu0
  %v3492 = vadd.f32 0.0, %v3491
  %3493 = vdwg.mxu0
  %3494 = vmatpush.msra.mxu0 %v1020
  %3495 = vmatpush.msra.mxu0 %v1012
  %3496 = vmatpush.msra.mxu0 %v1004
  %3497 = vmatpush.msra.mxu0 %v996
  %3498 = vmatpush.msra.mxu0 %v988
  %3499 = vmatpush.msra.mxu0 %v980
  %3500 = vmatpush.msra.mxu0 %v972
  %3501 = vmatpush.msra.mxu0 %v964
  %3502 = vmatpush.msra.mxu0 %v956
  %3503 = vmatpush.msra.mxu0 %v948
  %3504 = vmatpush.msra.mxu0 %v940
  %3505 = vmatpush.msra.mxu0 %v932
  %3506 = vmatpush.msra.mxu0 %v924
  %3507 = vmatpush.msra.mxu0 %v916
  %3508 = vmatpush.msra.mxu0 %v908
  %3509 = vmatpush.msra.mxu0 %v900
  %3510 = vmatmul.f32.gmra.mxu0 %v3338
  %v3511 = vpop.f32.mrf.mxu0
  %v3512 = vadd.f32 %v3492, %v3511
  %3513 = vdwg.mxu0
  %3514 = vmatpush.msra.mxu0 %v893
  %3515 = vmatpush.msra.mxu0 %v885
  %3516 = vmatpush.msra.mxu0 %v877
  %3517 = vmatpush.msra.mxu0 %v869
  %3518 = vmatpush.msra.mxu0 %v861
  %3519 = vmatpush.msra.mxu0 %v853
  %3520 = vmatpush.msra.mxu0 %v845
  %3521 = vmatpush.msra.mxu0 %v837
  %3522 = vmatpush.msra.mxu0 %v829
  %3523 = vmatpush.msra.mxu0 %v821
  %3524 = vmatpush.msra.mxu0 %v813
  %3525 = vmatpush.msra.mxu0 %v805
  %3526 = vmatpush.msra.mxu0 %v797
  %3527 = vmatpush.msra.mxu0 %v789
  %3528 = vmatpush.msra.mxu0 %v781
  %3529 = vmatpush.msra.mxu0 %v773
  %3530 = vmatmul.f32.gmra.mxu0 %v3316
  %v3531 = vpop.f32.mrf.mxu0
  %v3532 = vadd.f32 0.0, %v3531
  %3533 = vdwg.mxu0
  %3534 = vmatpush.msra.mxu0 %v1021
  %3535 = vmatpush.msra.mxu0 %v1013
  %3536 = vmatpush.msra.mxu0 %v1005
  %3537 = vmatpush.msra.mxu0 %v997
  %3538 = vmatpush.msra.mxu0 %v989
  %3539 = vmatpush.msra.mxu0 %v981
  %3540 = vmatpush.msra.mxu0 %v973
  %3541 = vmatpush.msra.mxu0 %v965
  %3542 = vmatpush.msra.mxu0 %v957
  %3543 = vmatpush.msra.mxu0 %v949
  %3544 = vmatpush.msra.mxu0 %v941
  %3545 = vmatpush.msra.mxu0 %v933
  %3546 = vmatpush.msra.mxu0 %v925
  %3547 = vmatpush.msra.mxu0 %v917
  %3548 = vmatpush.msra.mxu0 %v909
  %3549 = vmatpush.msra.mxu0 %v901
  %3550 = vmatmul.f32.gmra.mxu0 %v3338
  %v3551 = vpop.f32.mrf.mxu0
  %v3552 = vadd.f32 %v3532, %v3551
  %3553 = vdwg.mxu0
  %3554 = vmatpush.msra.mxu0 %v894
  %3555 = vmatpush.msra.mxu0 %v886
  %3556 = vmatpush.msra.mxu0 %v878
  %3557 = vmatpush.msra.mxu0 %v870
  %3558 = vmatpush.msra.mxu0 %v862
  %3559 = vmatpush.msra.mxu0 %v854
  %3560 = vmatpush.msra.mxu0 %v846
  %3561 = vmatpush.msra.mxu0 %v838
  %3562 = vmatpush.msra.mxu0 %v830
  %3563 = vmatpush.msra.mxu0 %v822
  %3564 = vmatpush.msra.mxu0 %v814
  %3565 = vmatpush.msra.mxu0 %v806
  %3566 = vmatpush.msra.mxu0 %v798
  %3567 = vmatpush.msra.mxu0 %v790
  %3568 = vmatpush.msra.mxu0 %v782
  %3569 = vmatpush.msra.mxu0 %v774
  %3570 = vmatmul.f32.gmra.mxu0 %v3316
  %v3571 = vpop.f32.mrf.mxu0
  %v3572 = vadd.f32 0.0, %v3571
  %3573 = vdwg.mxu0
  %3574 = vmatpush.msra.mxu0 %v1022
  %3575 = vmatpush.msra.mxu0 %v1014
  %3576 = vmatpush.msra.mxu0 %v1006
  %3577 = vmatpush.msra.mxu0 %v998
  %3578 = vmatpush.msra.mxu0 %v990
  %3579 = vmatpush.msra.mxu0 %v982
  %3580 = vmatpush.msra.mxu0 %v974
  %3581 = vmatpush.msra.mxu0 %v966
  %3582 = vmatpush.msra.mxu0 %v958
  %3583 = vmatpush.msra.mxu0 %v950
  %3584 = vmatpush.msra.mxu0 %v942
  %3585 = vmatpush.msra.mxu0 %v934
  %3586 = vmatpush.msra.mxu0 %v926
  %3587 = vmatpush.msra.mxu0 %v918
  %3588 = vmatpush.msra.mxu0 %v910
  %3589 = vmatpush.msra.mxu0 %v902
  %3590 = vmatmul.f32.gmra.mxu0 %v3338
  %v3591 = vpop.f32.mrf.mxu0
  %v3592 = vadd.f32 %v3572, %v3591
  %3593 = vdwg.mxu0
  %3594 = vmatpush.msra.mxu0 %v895
  %3595 = vmatpush.msra.mxu0 %v887
  %3596 = vmatpush.msra.mxu0 %v879
  %3597 = vmatpush.msra.mxu0 %v871
  %3598 = vmatpush.msra.mxu0 %v863
  %3599 = vmatpush.msra.mxu0 %v855
  %3600 = vmatpush.msra.mxu0 %v847
  %3601 = vmatpush.msra.mxu0 %v839
  %3602 = vmatpush.msra.mxu0 %v831
  %3603 = vmatpush.msra.mxu0 %v823
  %3604 = vmatpush.msra.mxu0 %v815
  %3605 = vmatpush.msra.mxu0 %v807
  %3606 = vmatpush.msra.mxu0 %v799
  %3607 = vmatpush.msra.mxu0 %v791
  %3608 = vmatpush.msra.mxu0 %v783
  %3609 = vmatpush.msra.mxu0 %v775
  %3610 = vmatmul.f32.gmra.mxu0 %v3316
  %v3611 = vpop.f32.mrf.mxu0
  %v3612 = vadd.f32 0.0, %v3611
  %3613 = vdwg.mxu0
  %3614 = vmatpush.msra.mxu0 %v1023
  %3615 = vmatpush.msra.mxu0 %v1015
  %3616 = vmatpush.msra.mxu0 %v1007
  %3617 = vmatpush.msra.mxu0 %v999
  %3618 = vmatpush.msra.mxu0 %v991
  %3619 = vmatpush.msra.mxu0 %v983
  %3620 = vmatpush.msra.mxu0 %v975
  %3621 = vmatpush.msra.mxu0 %v967
  %3622 = vmatpush.msra.mxu0 %v959
  %3623 = vmatpush.msra.mxu0 %v951
  %3624 = vmatpush.msra.mxu0 %v943
  %3625 = vmatpush.msra.mxu0 %v935
  %3626 = vmatpush.msra.mxu0 %v927
  %3627 = vmatpush.msra.mxu0 %v919
  %3628 = vmatpush.msra.mxu0 %v911
  %3629 = vmatpush.msra.mxu0 %v903
  %3630 = vmatmul.f32.gmra.mxu0 %v3338
  %v3631 = vpop.f32.mrf.mxu0
  %v3632 = vadd.f32 %v3612, %v3631
  %3633 = vdwg.mxu0
  %3634 = vmatpush.msra.mxu0 %v896
  %3635 = vmatpush.msra.mxu0 %v888
  %3636 = vmatpush.msra.mxu0 %v880
  %3637 = vmatpush.msra.mxu0 %v872
  %3638 = vmatpush.msra.mxu0 %v864
  %3639 = vmatpush.msra.mxu0 %v856
  %3640 = vmatpush.msra.mxu0 %v848
  %3641 = vmatpush.msra.mxu0 %v840
  %3642 = vmatpush.msra.mxu0 %v832
  %3643 = vmatpush.msra.mxu0 %v824
  %3644 = vmatpush.msra.mxu0 %v816
  %3645 = vmatpush.msra.mxu0 %v808
  %3646 = vmatpush.msra.mxu0 %v800
  %3647 = vmatpush.msra.mxu0 %v792
  %3648 = vmatpush.msra.mxu0 %v784
  %3649 = vmatpush.msra.mxu0 %v776
  %3650 = vmatmul.f32.gmra.mxu0 %v3316
  %v3651 = vpop.f32.mrf.mxu0
  %v3652 = vadd.f32 0.0, %v3651
  %3653 = vdwg.mxu0
  %3654 = vmatpush.msra.mxu0 %v1024
  %3655 = vmatpush.msra.mxu0 %v1016
  %3656 = vmatpush.msra.mxu0 %v1008
  %3657 = vmatpush.msra.mxu0 %v1000
  %3658 = vmatpush.msra.mxu0 %v992
  %3659 = vmatpush.msra.mxu0 %v984
  %3660 = vmatpush.msra.mxu0 %v976
  %3661 = vmatpush.msra.mxu0 %v968
  %3662 = vmatpush.msra.mxu0 %v960
  %3663 = vmatpush.msra.mxu0 %v952
  %3664 = vmatpush.msra.mxu0 %v944
  %3665 = vmatpush.msra.mxu0 %v936
  %3666 = vmatpush.msra.mxu0 %v928
  %3667 = vmatpush.msra.mxu0 %v920
  %3668 = vmatpush.msra.mxu0 %v912
  %3669 = vmatpush.msra.mxu0 %v904
  %3670 = vmatmul.f32.gmra.mxu0 %v3338
  %v3671 = vpop.f32.mrf.mxu0
  %v3672 = vadd.f32 %v3652, %v3671
  %3673 = vdwg.mxu0
  %v3674 = vadd.f32 %v520, %v681
  %v3675 = vadd.f32 %v561, %v701
  %v3676 = vadd.f32 %v602, %v721
  %v3677 = vadd.f32 %v643, %v741
  %v3678 = vadd.f32 %v3674, %v3392
  %v3679 = vadd.f32 %v3675, %v3432
  %v3680 = vadd.f32 %v3676, %v3472
  %v3681 = vadd.f32 %v3677, %v3512
  %v3682 = vmul.f32 %v3678, 0.5
  %v3683 = vtanh.pop %v3682
  %v3684 = vadd.f32 %v3683, 1.0
  %v3685 = vmul.f32 %v3684, 0.5
  %v3686 = vmul.f32 %v3679, 0.5
  %v3687 = vtanh.pop %v3686
  %v3688 = vadd.f32 %v3687, 1.0
  %v3689 = vmul.f32 %v3688, 0.5
  %v3690 = vtanh.pop %v3680
  %v3691 = vmul.f32 %v3681, 0.5
  %v3692 = vtanh.pop %v3691
  %v3693 = vadd.f32 %v3692, 1.0
  %v3694 = vmul.f32 %v3693, 0.5
  %v3695 = vmul.f32 %v3689, %v3314
  %v3696 = vmul.f32 %v3685, %v3690
  %v3697 = vadd.f32 %v3695, %v3696
  %v3698 = vtanh.pop %v3697
  %v3699 = vmul.f32 %v3694, %v3698
  %v3700 = vadd.f32 %v3552, %v1394
  %v3701 = vadd.f32 %v3592, %v1395
  %v3702 = vadd.f32 %v3632, %v1396
  %v3703 = vadd.f32 %v3672, %v1397
  %v3704 = vmul.f32 %v3700, 0.5
  %v3705 = vtanh.pop %v3704
  %v3706 = vadd.f32 %v3705, 1.0
  %v3707 = vmul.f32 %v3706, 0.5
  %v3708 = vmul.f32 %v3701, 0.5
  %v3709 = vtanh.pop %v3708
  %v3710 = vadd.f32 %v3709, 1.0
  %v3711 = vmul.f32 %v3710, 0.5
  %v3712 = vtanh.pop %v3702
  %v3713 = vmul.f32 %v3703, 0.5
  %v3714 = vtanh.pop %v3713
  %v3715 = vadd.f32 %v3714, 1.0
  %v3716 = vmul.f32 %v3715, 0.5
  %v3717 = vmul.f32 %v3711, %v3336
  %v3718 = vmul.f32 %v3707, %v3712
  %v3719 = vadd.f32 %v3717, %v3718
  %v3720 = vtanh.pop %v3719
  %v3721 = vmul.f32 %v3716, %v3720
  %3722 = vset.pattern.permute.xlu0 3
  %3723 = vperm.xlu0 %3722, %v49
  %v3724 = vpop.permute.xlu0 %3723
  %v3726 = vmul.f32 %v3721, %v3724
  %3727 = vst [vmem:[%s12 + $0x30] sm:$0xff] %v3726
  %v3728 = vmul.f32 %v3726, %v768
  %3729 = vadd.xlane.f32.xlu0 %v3728
  %v3730 = vpop.xlane.xlu0 %3729
  %v3731 = vsub.f32 0.0, %v3730
  %v3732 = vmul.f32 %v3731, 1.442695
  %v3733 = vpow.pop %v3732
  %v3734 = vmul.f32 %v3733, %v3726
  %v3735 = vadd.f32 %v3352, %v3734
  %v3736 = vadd.f32 %v3353, %v3733
  %3737 = vmatpush.msra.mxu0 %v893
  %3738 = vmatpush.msra.mxu0 %v885
  %3739 = vmatpush.msra.mxu0 %v877
  %3740 = vmatpush.msra.mxu0 %v869
  %3741 = vmatpush.msra.mxu0 %v861
  %3742 = vmatpush.msra.mxu0 %v853
  %3743 = vmatpush.msra.mxu0 %v845
  %3744 = vmatpush.msra.mxu0 %v837
  %3745 = vmatpush.msra.mxu0 %v829
  %3746 = vmatpush.msra.mxu0 %v821
  %3747 = vmatpush.msra.mxu0 %v813
  %3748 = vmatpush.msra.mxu0 %v805
  %3749 = vmatpush.msra.mxu0 %v797
  %3750 = vmatpush.msra.mxu0 %v789
  %3751 = vmatpush.msra.mxu0 %v781
  %3752 = vmatpush.msra.mxu0 %v773
  %3753 = vmatmul.f32.gmra.mxu0 %v3699
  %v3754 = vpop.f32.mrf.mxu0
  %v3755 = vadd.f32 0.0, %v3754
  %3756 = vdwg.mxu0
  %3757 = vmatpush.msra.mxu0 %v1021
  %3758 = vmatpush.msra.mxu0 %v1013
  %3759 = vmatpush.msra.mxu0 %v1005
  %3760 = vmatpush.msra.mxu0 %v997
  %3761 = vmatpush.msra.mxu0 %v989
  %3762 = vmatpush.msra.mxu0 %v981
  %3763 = vmatpush.msra.mxu0 %v973
  %3764 = vmatpush.msra.mxu0 %v965
  %3765 = vmatpush.msra.mxu0 %v957
  %3766 = vmatpush.msra.mxu0 %v949
  %3767 = vmatpush.msra.mxu0 %v941
  %3768 = vmatpush.msra.mxu0 %v933
  %3769 = vmatpush.msra.mxu0 %v925
  %3770 = vmatpush.msra.mxu0 %v917
  %3771 = vmatpush.msra.mxu0 %v909
  %3772 = vmatpush.msra.mxu0 %v901
  %3773 = vmatmul.f32.gmra.mxu0 %v3721
  %v3774 = vpop.f32.mrf.mxu0
  %v3775 = vadd.f32 %v3755, %v3774
  %3776 = vdwg.mxu0
  %3777 = vmatpush.msra.mxu0 %v894
  %3778 = vmatpush.msra.mxu0 %v886
  %3779 = vmatpush.msra.mxu0 %v878
  %3780 = vmatpush.msra.mxu0 %v870
  %3781 = vmatpush.msra.mxu0 %v862
  %3782 = vmatpush.msra.mxu0 %v854
  %3783 = vmatpush.msra.mxu0 %v846
  %3784 = vmatpush.msra.mxu0 %v838
  %3785 = vmatpush.msra.mxu0 %v830
  %3786 = vmatpush.msra.mxu0 %v822
  %3787 = vmatpush.msra.mxu0 %v814
  %3788 = vmatpush.msra.mxu0 %v806
  %3789 = vmatpush.msra.mxu0 %v798
  %3790 = vmatpush.msra.mxu0 %v790
  %3791 = vmatpush.msra.mxu0 %v782
  %3792 = vmatpush.msra.mxu0 %v774
  %3793 = vmatmul.f32.gmra.mxu0 %v3699
  %v3794 = vpop.f32.mrf.mxu0
  %v3795 = vadd.f32 0.0, %v3794
  %3796 = vdwg.mxu0
  %3797 = vmatpush.msra.mxu0 %v1022
  %3798 = vmatpush.msra.mxu0 %v1014
  %3799 = vmatpush.msra.mxu0 %v1006
  %3800 = vmatpush.msra.mxu0 %v998
  %3801 = vmatpush.msra.mxu0 %v990
  %3802 = vmatpush.msra.mxu0 %v982
  %3803 = vmatpush.msra.mxu0 %v974
  %3804 = vmatpush.msra.mxu0 %v966
  %3805 = vmatpush.msra.mxu0 %v958
  %3806 = vmatpush.msra.mxu0 %v950
  %3807 = vmatpush.msra.mxu0 %v942
  %3808 = vmatpush.msra.mxu0 %v934
  %3809 = vmatpush.msra.mxu0 %v926
  %3810 = vmatpush.msra.mxu0 %v918
  %3811 = vmatpush.msra.mxu0 %v910
  %3812 = vmatpush.msra.mxu0 %v902
  %3813 = vmatmul.f32.gmra.mxu0 %v3721
  %v3814 = vpop.f32.mrf.mxu0
  %v3815 = vadd.f32 %v3795, %v3814
  %3816 = vdwg.mxu0
  %3817 = vmatpush.msra.mxu0 %v895
  %3818 = vmatpush.msra.mxu0 %v887
  %3819 = vmatpush.msra.mxu0 %v879
  %3820 = vmatpush.msra.mxu0 %v871
  %3821 = vmatpush.msra.mxu0 %v863
  %3822 = vmatpush.msra.mxu0 %v855
  %3823 = vmatpush.msra.mxu0 %v847
  %3824 = vmatpush.msra.mxu0 %v839
  %3825 = vmatpush.msra.mxu0 %v831
  %3826 = vmatpush.msra.mxu0 %v823
  %3827 = vmatpush.msra.mxu0 %v815
  %3828 = vmatpush.msra.mxu0 %v807
  %3829 = vmatpush.msra.mxu0 %v799
  %3830 = vmatpush.msra.mxu0 %v791
  %3831 = vmatpush.msra.mxu0 %v783
  %3832 = vmatpush.msra.mxu0 %v775
  %3833 = vmatmul.f32.gmra.mxu0 %v3699
  %v3834 = vpop.f32.mrf.mxu0
  %v3835 = vadd.f32 0.0, %v3834
  %3836 = vdwg.mxu0
  %3837 = vmatpush.msra.mxu0 %v1023
  %3838 = vmatpush.msra.mxu0 %v1015
  %3839 = vmatpush.msra.mxu0 %v1007
  %3840 = vmatpush.msra.mxu0 %v999
  %3841 = vmatpush.msra.mxu0 %v991
  %3842 = vmatpush.msra.mxu0 %v983
  %3843 = vmatpush.msra.mxu0 %v975
  %3844 = vmatpush.msra.mxu0 %v967
  %3845 = vmatpush.msra.mxu0 %v959
  %3846 = vmatpush.msra.mxu0 %v951
  %3847 = vmatpush.msra.mxu0 %v943
  %3848 = vmatpush.msra.mxu0 %v935
  %3849 = vmatpush.msra.mxu0 %v927
  %3850 = vmatpush.msra.mxu0 %v919
  %3851 = vmatpush.msra.mxu0 %v911
  %3852 = vmatpush.msra.mxu0 %v903
  %3853 = vmatmul.f32.gmra.mxu0 %v3721
  %v3854 = vpop.f32.mrf.mxu0
  %v3855 = vadd.f32 %v3835, %v3854
  %3856 = vdwg.mxu0
  %3857 = vmatpush.msra.mxu0 %v896
  %3858 = vmatpush.msra.mxu0 %v888
  %3859 = vmatpush.msra.mxu0 %v880
  %3860 = vmatpush.msra.mxu0 %v872
  %3861 = vmatpush.msra.mxu0 %v864
  %3862 = vmatpush.msra.mxu0 %v856
  %3863 = vmatpush.msra.mxu0 %v848
  %3864 = vmatpush.msra.mxu0 %v840
  %3865 = vmatpush.msra.mxu0 %v832
  %3866 = vmatpush.msra.mxu0 %v824
  %3867 = vmatpush.msra.mxu0 %v816
  %3868 = vmatpush.msra.mxu0 %v808
  %3869 = vmatpush.msra.mxu0 %v800
  %3870 = vmatpush.msra.mxu0 %v792
  %3871 = vmatpush.msra.mxu0 %v784
  %3872 = vmatpush.msra.mxu0 %v776
  %3873 = vmatmul.f32.gmra.mxu0 %v3699
  %v3874 = vpop.f32.mrf.mxu0
  %v3875 = vadd.f32 0.0, %v3874
  %3876 = vdwg.mxu0
  %3877 = vmatpush.msra.mxu0 %v1024
  %3878 = vmatpush.msra.mxu0 %v1016
  %3879 = vmatpush.msra.mxu0 %v1008
  %3880 = vmatpush.msra.mxu0 %v1000
  %3881 = vmatpush.msra.mxu0 %v992
  %3882 = vmatpush.msra.mxu0 %v984
  %3883 = vmatpush.msra.mxu0 %v976
  %3884 = vmatpush.msra.mxu0 %v968
  %3885 = vmatpush.msra.mxu0 %v960
  %3886 = vmatpush.msra.mxu0 %v952
  %3887 = vmatpush.msra.mxu0 %v944
  %3888 = vmatpush.msra.mxu0 %v936
  %3889 = vmatpush.msra.mxu0 %v928
  %3890 = vmatpush.msra.mxu0 %v920
  %3891 = vmatpush.msra.mxu0 %v912
  %3892 = vmatpush.msra.mxu0 %v904
  %3893 = vmatmul.f32.gmra.mxu0 %v3721
  %v3894 = vpop.f32.mrf.mxu0
  %v3895 = vadd.f32 %v3875, %v3894
  %3896 = vdwg.mxu0
  %v3897 = vadd.f32 %v3775, %v1394
  %v3898 = vadd.f32 %v3815, %v1395
  %v3899 = vadd.f32 %v3855, %v1396
  %v3900 = vadd.f32 %v3895, %v1397
  %v3901 = vmul.f32 %v3897, 0.5
  %v3902 = vtanh.pop %v3901
  %v3903 = vadd.f32 %v3902, 1.0
  %v3904 = vmul.f32 %v3903, 0.5
  %v3905 = vmul.f32 %v3898, 0.5
  %v3906 = vtanh.pop %v3905
  %v3907 = vadd.f32 %v3906, 1.0
  %v3908 = vmul.f32 %v3907, 0.5
  %v3909 = vtanh.pop %v3899
  %v3910 = vmul.f32 %v3900, 0.5
  %v3911 = vtanh.pop %v3910
  %v3912 = vadd.f32 %v3911, 1.0
  %v3913 = vmul.f32 %v3912, 0.5
  %v3914 = vmul.f32 %v3908, %v3719
  %v3915 = vmul.f32 %v3904, %v3909
  %v3916 = vadd.f32 %v3914, %v3915
  %v3917 = vtanh.pop %v3916
  %v3918 = vmul.f32 %v3913, %v3917
  %3919 = vset.pattern.permute.xlu0 3
  %3920 = vperm.xlu0 %3919, %v50
  %v3921 = vpop.permute.xlu0 %3920
  %v3923 = vmul.f32 %v3918, %v3921
  %3924 = vst [vmem:[%s12 + $0x38] sm:$0xff] %v3923
  %v3925 = vmul.f32 %v3923, %v768
  %3926 = vadd.xlane.f32.xlu0 %v3925
  %v3927 = vpop.xlane.xlu0 %3926
  %v3928 = vsub.f32 0.0, %v3927
  %v3929 = vmul.f32 %v3928, 1.442695
  %v3930 = vpow.pop %v3929
  %v3931 = vmul.f32 %v3930, %v3923
  %v3932 = vadd.f32 %v3735, %v3931
  %v3933 = vadd.f32 %v3736, %v3930
  %v3934 = vrcp.pop %v3933
  %v3935 = vmul.f32 %v3932, %v3934
  %3936 = vst [vmem:[%s13] sm:$0xff] %v3935
  // Predicated region
  $region50: #{spatio_temporal_forward.1} parent=0 // pred_check
    _
  $region51: #{spatio_temporal_forward.1} parent=0 // pred_check_branch
    %3938 = sbr.rel (0) target = $region53
  $region52: #{spatio_temporal_forward.1} parent=0 // pred_region
    _
  $region53: #{spatio_temporal_forward.1} parent=0 // pred_fallthru
    _
  // Predicated region
  $region54: #{spatio_temporal_forward.1} parent=0 // pred_check
    _
  $region55: #{spatio_temporal_forward.1} parent=0 // pred_check_branch
    %3940 = sbr.rel (0) target = $region57
  $region56: #{spatio_temporal_forward.1} parent=0 // pred_region
    _
  $region57: #{spatio_temporal_forward.1} parent=0 // pred_fallthru
    _
  // Predicated region
  $region58: #{spatio_temporal_forward.1} parent=0 // pred_check
    _
  $region59: #{spatio_temporal_forward.1} parent=0 // pred_check_branch
    %3942 = sbr.rel (0) target = $region61
  $region60: #{spatio_temporal_forward.1} parent=0 // pred_region
    _
  $region61: #{spatio_temporal_forward.1} parent=0 // pred_fallthru
    _
  // Predicated region
  $region62: #{spatio_temporal_forward.1} parent=0 // pred_check
    _
  $region63: #{spatio_temporal_forward.1} parent=0 // pred_check_branch
    %3944 = sbr.rel (0) target = $region65
  $region64: #{spatio_temporal_forward.1} parent=0 // pred_region
    _
  $region65: #{spatio_temporal_forward.1} parent=0 // pred_fallthru
    _

</llo_original>
